<compile_context>
chip_gen: v5e
topology: v5e:2x2
jax: 0.10.0
libtpu: 0.0.40
codegen_flags: <defaults>
</compile_context>

<pallas_src>
import jax
import jax.numpy as jnp
from jax import lax
from jax.experimental import pallas as pl
from jax.experimental.pallas import tpu as pltpu

HIDDEN = 32       # hidden size H (encoder/decoder/embedding)
VOCAB = 64        # output vocabulary size
SEQ_LEN = 8       # encoder input sequence length T
MAX_LENGTH = 8    # greedy decoding steps
N_LAYERS = 1      # decoder.n_layers (tutorial default is 2; 1 layer keeps semantics identical)
SOS_token = 1


def _gru_step_from_gi(gi, h, whh, bhh, H):
    """One GRU cell step with the input-side projection `gi` precomputed.

    gi: (1, 3H) = x @ wih + bih, gate columns [reset | update | new] (PyTorch order).
    whh: (H, 3H), bhh: (1, 3H).  Only the recurrent matmul sits on the serial chain.
    """
    gh = jnp.dot(h, whh, preferred_element_type=jnp.float32) + bhh
    r = jax.nn.sigmoid(gi[:, 0:H] + gh[:, 0:H])
    z = jax.nn.sigmoid(gi[:, H:2 * H] + gh[:, H:2 * H])
    n = jnp.tanh(gi[:, 2 * H:3 * H] + r * gh[:, 2 * H:3 * H])
    return (1.0 - z) * n + z * h


# -------------------- fused encoder + greedy-decode kernel --------------------
def fused_greedy_kernel(seq_ref,            # SMEM (T,)  int32 input token ids
                        emb_ref,            # VMEM (V, H)      shared embedding table
                        enc_f_ref,          # VMEM (2H+2, 3H)  [wih; whh; bih; bhh] fwd enc GRU
                        enc_b_ref,          # VMEM (2H+2, 3H)  bwd enc GRU
                        dec_ref,            # VMEM (2H+2, 3H)  decoder GRU
                        wc_ref,             # VMEM (2H+1, H)   [wc_rnn; wc_ctx; bc]
                        wout_ref,           # VMEM (H+1, V)    [wout; bout]
                        tok_ref,            # out  (1, ML) int32
                        score_ref):         # out  (1, ML) float32
    T = seq_ref.shape[0]
    V, H = emb_ref.shape
    ML = tok_ref.shape[1]

    emb_tbl = emb_ref[...]
    enc_f = enc_f_ref[...]
    enc_b = enc_b_ref[...]
    dec_p = dec_ref[...]
    wc_p = wc_ref[...]
    wout_p = wout_ref[...]

    # unpack packed parameter blocks (static slices, done once)
    wih_f, whh_f = enc_f[0:H, :], enc_f[H:2 * H, :]
    bih_f, bhh_f = enc_f[2 * H:2 * H + 1, :], enc_f[2 * H + 1:2 * H + 2, :]
    wih_b, whh_b = enc_b[0:H, :], enc_b[H:2 * H, :]
    bih_b, bhh_b = enc_b[2 * H:2 * H + 1, :], enc_b[2 * H + 1:2 * H + 2, :]
    wih_d, whh_d = dec_p[0:H, :], dec_p[H:2 * H, :]
    bih_d, bhh_d = dec_p[2 * H:2 * H + 1, :], dec_p[2 * H + 1:2 * H + 2, :]
    wc, bc = wc_p[0:2 * H, :], wc_p[2 * H:2 * H + 1, :]
    wout, bout = wout_p[0:H, :], wout_p[H:H + 1, :]

    # ---- in-kernel embedding gather: dynamic row loads with SMEM indices -------
    emb_rows = jnp.concatenate(
        [emb_ref[pl.ds(seq_ref[t], 1), :] for t in range(T)], axis=0)      # (T, H)

    # ---- bidirectional encoder --------------------------------------------------
    # Input-side gate projections hoisted out of the recurrence (two batched matmuls).
    gi_f = jnp.dot(emb_rows, wih_f, preferred_element_type=jnp.float32) + bih_f  # (T, 3H)
    gi_b = jnp.dot(emb_rows, wih_b, preferred_element_type=jnp.float32) + bih_b  # (T, 3H)

    h_f = jnp.zeros((1, H), jnp.float32)
    h_b = jnp.zeros((1, H), jnp.float32)
    out_f = [None] * T
    out_b = [None] * T
    for t in range(T):                      # static unroll; fwd/bwd chains interleaved
        tb = (T - 1) - t
        h_f = _gru_step_from_gi(gi_f[t:t + 1, :], h_f, whh_f, bhh_f, H)
        h_b = _gru_step_from_gi(gi_b[tb:tb + 1, :], h_b, whh_b, bhh_b, H)
        out_f[t] = h_f
        out_b[tb] = h_b
    # tutorial: outputs[:, :, :H] + outputs[:, :, H:]  (sum of the two directions)
    enc = jnp.concatenate(out_f, axis=0) + jnp.concatenate(out_b, axis=0)   # (T, H)

    # enc_T = enc^T computed ONCE (hoisted rhs-transposed matmul with identity LHS)
    # so the per-step attention energies are a plain MXU matmul, no per-step transpose.
    eye_h = (lax.broadcasted_iota(jnp.int32, (H, H), 0)
             == lax.broadcasted_iota(jnp.int32, (H, H), 1)).astype(jnp.float32)
    enc_T = lax.dot_general(eye_h, enc, (((1,), (1,)), ((), ())),
                            preferred_element_type=jnp.float32)             # (H, T)

    # decoder_hidden = encoder_hidden[:n_layers] with n_layers=1 -> final fwd hidden
    h = h_f

    # ---- greedy decode loop ------------------------------------------------------
    # Fed-back embedding folded into the input-side gate projection:
    #   per step gi = onehot @ (emb_tbl @ wih_d + bih_d);  SOS step = static row slice.
    emb_gates = jnp.dot(emb_tbl, wih_d, preferred_element_type=jnp.float32) + bih_d  # (V, 3H)

    vocab_iota = lax.broadcasted_iota(jnp.int32, (1, V), 1)
    step_iota = lax.broadcasted_iota(jnp.int32, (1, ML), 1)

    gi = emb_gates[SOS_token:SOS_token + 1, :]                              # (1, 3H)
    toks = jnp.zeros((1, ML), jnp.int32)
    scores = jnp.zeros((1, ML), jnp.float32)
    for step in range(ML):                  # static unroll
        h = _gru_step_from_gi(gi, h, whh_d, bhh_d, H)
        # Luong "dot" attention over encoder outputs
        e = jnp.dot(h, enc_T, preferred_element_type=jnp.float32)           # (1, T)
        e = e - jnp.max(e, axis=-1, keepdims=True)
        ew = jnp.exp(e)
        attn = ew / jnp.sum(ew, axis=-1, keepdims=True)                     # exact softmax
        context = jnp.dot(attn, enc, preferred_element_type=jnp.float32)    # (1, H)
        # fused "concat Linear": [h | context] @ [wc_rnn; wc_ctx] + bc
        hc = jnp.concatenate([h, context], axis=1)                          # (1, 2H)
        concat_out = jnp.tanh(
            jnp.dot(hc, wc, preferred_element_type=jnp.float32) + bc)       # (1, H)
        logits = jnp.dot(concat_out, wout,
                         preferred_element_type=jnp.float32) + bout         # (1, V)
        # greedy (score, token) = max of softmax(logits):
        #   max prob = 1 / sum(exp(logits - max)); argmax identical (first max index)
        max_l = jnp.max(logits, axis=-1, keepdims=True)
        sum_exp = jnp.sum(jnp.exp(logits - max_l), axis=-1, keepdims=True)
        score = 1.0 / sum_exp                                               # (1, 1) exact
        tok = jnp.min(jnp.where(logits >= max_l, vocab_iota, V),
                      axis=-1, keepdims=True)                               # (1, 1) i32
        # fed-back token -> next gi via one-hot matmul against the precomputed gates
        onehot = (vocab_iota == tok).astype(jnp.float32)                    # (1, V)
        gi = jnp.dot(onehot, emb_gates, preferred_element_type=jnp.float32) # (1, 3H)
        # lane-packed accumulation of per-step results (written once at the end)
        toks = jnp.where(step_iota == step, tok, toks)
        scores = jnp.where(step_iota == step, score, scores)

    tok_ref[...] = toks
    score_ref[...] = scores


# --------------------------- GreedySearchDecoder ------------------------------
def greedy_search_decoder(params, input_seq, input_length, max_length):
    # TODO(synk): pack_padded_sequence / input_length masking is a no-op for a
    # full-length batch of 1; variable-length inputs are not masked here.
    del input_length
    seq = input_seq.reshape(-1).astype(jnp.int32)                 # (T,)
    vmem = pl.BlockSpec(memory_space=pltpu.MemorySpace.VMEM)
    toks, scores = pl.pallas_call(
        fused_greedy_kernel,
        out_shape=(jax.ShapeDtypeStruct((1, max_length), jnp.int32),
                   jax.ShapeDtypeStruct((1, max_length), jnp.float32)),
        in_specs=[pl.BlockSpec(memory_space=pltpu.MemorySpace.SMEM)] + [vmem] * 6,
        out_specs=(vmem, vmem),
    )(seq, params["embedding"], params["enc_fwd"], params["enc_bwd"],
      params["dec_gru"], params["wc"], params["wout"])
    return toks[0], scores[0]


# ------------------------------- parameters ----------------------------------
def init_params(key, vocab=VOCAB, hidden=HIDDEN):
    scale = 1.0 / float(hidden) ** 0.5

    def u(k, shape):
        return jax.random.uniform(k, shape, jnp.float32, -scale, scale)

    ks = jax.random.split(key, 18)

    def gru_pack(k0, k1, k2, k3):
        # packed (2H+2, 3H): [wih; whh; bih; bhh], gate columns [reset | update | new]
        return jnp.concatenate([u(ks[k0], (hidden, 3 * hidden)),
                                u(ks[k1], (hidden, 3 * hidden)),
                                u(ks[k2], (1, 3 * hidden)),
                                u(ks[k3], (1, 3 * hidden))], axis=0)

    return dict(
        embedding=u(ks[0], (vocab, hidden)),            # shared encoder/decoder embedding
        enc_fwd=gru_pack(1, 2, 3, 4),                   # bidirectional encoder GRU, fwd dir
        enc_bwd=gru_pack(5, 6, 7, 8),                   # bidirectional encoder GRU, bwd dir
        dec_gru=gru_pack(9, 10, 11, 12),                # decoder GRU
        # concat Linear packed (2H+1, H): [wc_rnn; wc_ctx; bc] (pre-transposed)
        wc=jnp.concatenate([u(ks[13], (hidden, hidden)),
                            u(ks[14], (hidden, hidden)),
                            u(ks[15], (1, hidden))], axis=0),
        # output Linear packed (H+1, V): [wout; bout] (pre-transposed)
        wout=jnp.concatenate([u(ks[16], (hidden, vocab)),
                              u(ks[17], (1, vocab))], axis=0),
    )


if __name__ == "__main__":
    key = jax.random.PRNGKey(0)
    params = init_params(key)
    input_seq = jax.random.randint(jax.random.fold_in(key, 42),
                                   (SEQ_LEN, 1), 2, VOCAB, dtype=jnp.int32)
    input_length = jnp.array([SEQ_LEN], jnp.int32)
    fn = jax.jit(greedy_search_decoder, static_argnums=(3,))
    all_tokens, all_scores = fn(params, input_seq, input_length, MAX_LENGTH)
    jax.block_until_ready((all_tokens, all_scores))
    assert all_tokens.shape == (MAX_LENGTH,) and all_tokens.dtype == jnp.int32
    assert all_scores.shape == (MAX_LENGTH,) and all_scores.dtype == jnp.float32
    print("KERNEL_OK")
</pallas_src>

<mosaic_0001>
module attributes {stable_mosaic.version = 11 : i64} {
  func.func @fused_greedy_kernel(%arg0: memref<8xi32, #tpu.memory_space<smem>>, %arg1: memref<64x32xf32, #tpu.memory_space<vmem>>, %arg2: memref<66x96xf32, #tpu.memory_space<vmem>>, %arg3: memref<66x96xf32, #tpu.memory_space<vmem>>, %arg4: memref<66x96xf32, #tpu.memory_space<vmem>>, %arg5: memref<65x32xf32, #tpu.memory_space<vmem>>, %arg6: memref<33x64xf32, #tpu.memory_space<vmem>>, %arg7: memref<1x8xi32, #tpu.memory_space<vmem>>, %arg8: memref<1x8xf32, #tpu.memory_space<vmem>>) attributes {dimension_semantics = [], scalar_prefetch = 0 : i64, scratch_operands = 0 : i64, tpu.core_type = #tpu.core_type<tc>} {
    %c0 = arith.constant 0 : index
    %c0_0 = arith.constant 0 : index
    %0 = vector.load %arg1[%c0, %c0_0] : memref<64x32xf32, #tpu.memory_space<vmem>>, vector<64x32xf32>
    %c0_1 = arith.constant 0 : index
    %c0_2 = arith.constant 0 : index
    %1 = vector.load %arg2[%c0_1, %c0_2] : memref<66x96xf32, #tpu.memory_space<vmem>>, vector<66x96xf32>
    %c0_3 = arith.constant 0 : index
    %c0_4 = arith.constant 0 : index
    %2 = vector.load %arg3[%c0_3, %c0_4] : memref<66x96xf32, #tpu.memory_space<vmem>>, vector<66x96xf32>
    %c0_5 = arith.constant 0 : index
    %c0_6 = arith.constant 0 : index
    %3 = vector.load %arg4[%c0_5, %c0_6] : memref<66x96xf32, #tpu.memory_space<vmem>>, vector<66x96xf32>
    %c0_7 = arith.constant 0 : index
    %c0_8 = arith.constant 0 : index
    %4 = vector.load %arg5[%c0_7, %c0_8] : memref<65x32xf32, #tpu.memory_space<vmem>>, vector<65x32xf32>
    %c0_9 = arith.constant 0 : index
    %c0_10 = arith.constant 0 : index
    %5 = vector.load %arg6[%c0_9, %c0_10] : memref<33x64xf32, #tpu.memory_space<vmem>>, vector<33x64xf32>
    %6 = vector.extract_strided_slice %1 {offsets = [0, 0], sizes = [32, 96], strides = [1, 1]} : vector<66x96xf32> to vector<32x96xf32>
    %7 = vector.extract_strided_slice %1 {offsets = [32, 0], sizes = [32, 96], strides = [1, 1]} : vector<66x96xf32> to vector<32x96xf32>
    %8 = vector.extract_strided_slice %1 {offsets = [64, 0], sizes = [1, 96], strides = [1, 1]} : vector<66x96xf32> to vector<1x96xf32>
    %9 = vector.extract_strided_slice %1 {offsets = [65, 0], sizes = [1, 96], strides = [1, 1]} : vector<66x96xf32> to vector<1x96xf32>
    %10 = vector.extract_strided_slice %2 {offsets = [0, 0], sizes = [32, 96], strides = [1, 1]} : vector<66x96xf32> to vector<32x96xf32>
    %11 = vector.extract_strided_slice %2 {offsets = [32, 0], sizes = [32, 96], strides = [1, 1]} : vector<66x96xf32> to vector<32x96xf32>
    %12 = vector.extract_strided_slice %2 {offsets = [64, 0], sizes = [1, 96], strides = [1, 1]} : vector<66x96xf32> to vector<1x96xf32>
    %13 = vector.extract_strided_slice %2 {offsets = [65, 0], sizes = [1, 96], strides = [1, 1]} : vector<66x96xf32> to vector<1x96xf32>
    %14 = vector.extract_strided_slice %3 {offsets = [0, 0], sizes = [32, 96], strides = [1, 1]} : vector<66x96xf32> to vector<32x96xf32>
    %15 = vector.extract_strided_slice %3 {offsets = [32, 0], sizes = [32, 96], strides = [1, 1]} : vector<66x96xf32> to vector<32x96xf32>
    %16 = vector.extract_strided_slice %3 {offsets = [64, 0], sizes = [1, 96], strides = [1, 1]} : vector<66x96xf32> to vector<1x96xf32>
    %17 = vector.extract_strided_slice %3 {offsets = [65, 0], sizes = [1, 96], strides = [1, 1]} : vector<66x96xf32> to vector<1x96xf32>
    %18 = vector.extract_strided_slice %4 {offsets = [0, 0], sizes = [64, 32], strides = [1, 1]} : vector<65x32xf32> to vector<64x32xf32>
    %19 = vector.extract_strided_slice %4 {offsets = [64, 0], sizes = [1, 32], strides = [1, 1]} : vector<65x32xf32> to vector<1x32xf32>
    %20 = vector.extract_strided_slice %5 {offsets = [0, 0], sizes = [32, 64], strides = [1, 1]} : vector<33x64xf32> to vector<32x64xf32>
    %21 = vector.extract_strided_slice %5 {offsets = [32, 0], sizes = [1, 64], strides = [1, 1]} : vector<33x64xf32> to vector<1x64xf32>
    %c0_11 = arith.constant 0 : index
    %22 = memref.load %arg0[%c0_11] : memref<8xi32, #tpu.memory_space<smem>>
    %23 = arith.index_cast %22 : i32 to index
    %c0_12 = arith.constant 0 : index
    %24 = vector.load %arg1[%23, %c0_12] : memref<64x32xf32, #tpu.memory_space<vmem>>, vector<1x32xf32>
    %c1 = arith.constant 1 : index
    %25 = memref.load %arg0[%c1] : memref<8xi32, #tpu.memory_space<smem>>
    %26 = arith.index_cast %25 : i32 to index
    %c0_13 = arith.constant 0 : index
    %27 = vector.load %arg1[%26, %c0_13] : memref<64x32xf32, #tpu.memory_space<vmem>>, vector<1x32xf32>
    %c2 = arith.constant 2 : index
    %28 = memref.load %arg0[%c2] : memref<8xi32, #tpu.memory_space<smem>>
    %29 = arith.index_cast %28 : i32 to index
    %c0_14 = arith.constant 0 : index
    %30 = vector.load %arg1[%29, %c0_14] : memref<64x32xf32, #tpu.memory_space<vmem>>, vector<1x32xf32>
    %c3 = arith.constant 3 : index
    %31 = memref.load %arg0[%c3] : memref<8xi32, #tpu.memory_space<smem>>
    %32 = arith.index_cast %31 : i32 to index
    %c0_15 = arith.constant 0 : index
    %33 = vector.load %arg1[%32, %c0_15] : memref<64x32xf32, #tpu.memory_space<vmem>>, vector<1x32xf32>
    %c4 = arith.constant 4 : index
    %34 = memref.load %arg0[%c4] : memref<8xi32, #tpu.memory_space<smem>>
    %35 = arith.index_cast %34 : i32 to index
    %c0_16 = arith.constant 0 : index
    %36 = vector.load %arg1[%35, %c0_16] : memref<64x32xf32, #tpu.memory_space<vmem>>, vector<1x32xf32>
    %c5 = arith.constant 5 : index
    %37 = memref.load %arg0[%c5] : memref<8xi32, #tpu.memory_space<smem>>
    %38 = arith.index_cast %37 : i32 to index
    %c0_17 = arith.constant 0 : index
    %39 = vector.load %arg1[%38, %c0_17] : memref<64x32xf32, #tpu.memory_space<vmem>>, vector<1x32xf32>
    %c6 = arith.constant 6 : index
    %40 = memref.load %arg0[%c6] : memref<8xi32, #tpu.memory_space<smem>>
    %41 = arith.index_cast %40 : i32 to index
    %c0_18 = arith.constant 0 : index
    %42 = vector.load %arg1[%41, %c0_18] : memref<64x32xf32, #tpu.memory_space<vmem>>, vector<1x32xf32>
    %c7 = arith.constant 7 : index
    %43 = memref.load %arg0[%c7] : memref<8xi32, #tpu.memory_space<smem>>
    %44 = arith.index_cast %43 : i32 to index
    %c0_19 = arith.constant 0 : index
    %45 = vector.load %arg1[%44, %c0_19] : memref<64x32xf32, #tpu.memory_space<vmem>>, vector<1x32xf32>
    %46 = tpu.concatenate %24, %27, %30, %33, %36, %39, %42, %45 in 0 : vector<1x32xf32>, vector<1x32xf32>, vector<1x32xf32>, vector<1x32xf32>, vector<1x32xf32>, vector<1x32xf32>, vector<1x32xf32>, vector<1x32xf32> -> vector<8x32xf32>
    %cst = arith.constant dense<0.000000e+00> : vector<8x96xf32>
    %47 = tpu.matmul %46, %6, %cst {dimension_numbers = #tpu.dot_dimension_numbers<[1], [0], [0], [1], [0, 0, 1, 1], [], []>} : vector<8x32xf32>, vector<32x96xf32>, vector<8x96xf32> -> vector<8x96xf32>
    %48 = vector.broadcast %8 : vector<1x96xf32> to vector<8x96xf32>
    %49 = arith.addf %47, %48 : vector<8x96xf32>
    %cst_20 = arith.constant dense<0.000000e+00> : vector<8x96xf32>
    %50 = tpu.matmul %46, %10, %cst_20 {dimension_numbers = #tpu.dot_dimension_numbers<[1], [0], [0], [1], [0, 0, 1, 1], [], []>} : vector<8x32xf32>, vector<32x96xf32>, vector<8x96xf32> -> vector<8x96xf32>
    %51 = vector.broadcast %12 : vector<1x96xf32> to vector<8x96xf32>
    %52 = arith.addf %50, %51 : vector<8x96xf32>
    %cst_21 = arith.constant 0.000000e+00 : f32
    %53 = vector.broadcast %cst_21 : f32 to vector<1x32xf32>
    %cst_22 = arith.constant 0.000000e+00 : f32
    %54 = vector.broadcast %cst_22 : f32 to vector<1x32xf32>
    %55 = vector.extract_strided_slice %49 {offsets = [0, 0], sizes = [1, 96], strides = [1, 1]} : vector<8x96xf32> to vector<1x96xf32>
    %cst_23 = arith.constant dense<0.000000e+00> : vector<1x96xf32>
    %56 = tpu.matmul %53, %7, %cst_23 {dimension_numbers = #tpu.dot_dimension_numbers<[1], [0], [0], [1], [0, 0, 1, 1], [], []>} : vector<1x32xf32>, vector<32x96xf32>, vector<1x96xf32> -> vector<1x96xf32>
    %57 = arith.addf %56, %9 : vector<1x96xf32>
    %58 = vector.extract_strided_slice %55 {offsets = [0, 0], sizes = [1, 32], strides = [1, 1]} : vector<1x96xf32> to vector<1x32xf32>
    %59 = vector.extract_strided_slice %57 {offsets = [0, 0], sizes = [1, 32], strides = [1, 1]} : vector<1x96xf32> to vector<1x32xf32>
    %60 = arith.addf %58, %59 : vector<1x32xf32>
    %61 = arith.negf %60 : vector<1x32xf32>
    %62 = math.exp %61 : vector<1x32xf32>
    %cst_24 = arith.constant 1.000000e+00 : f32
    %63 = vector.broadcast %cst_24 : f32 to vector<1x32xf32>
    %64 = arith.addf %63, %62 : vector<1x32xf32>
    %65 = arith.divf %63, %64 : vector<1x32xf32>
    %66 = vector.extract_strided_slice %55 {offsets = [0, 32], sizes = [1, 32], strides = [1, 1]} : vector<1x96xf32> to vector<1x32xf32>
    %67 = vector.extract_strided_slice %57 {offsets = [0, 32], sizes = [1, 32], strides = [1, 1]} : vector<1x96xf32> to vector<1x32xf32>
    %68 = arith.addf %66, %67 : vector<1x32xf32>
    %69 = arith.negf %68 : vector<1x32xf32>
    %70 = math.exp %69 : vector<1x32xf32>
    %cst_25 = arith.constant 1.000000e+00 : f32
    %71 = vector.broadcast %cst_25 : f32 to vector<1x32xf32>
    %72 = arith.addf %71, %70 : vector<1x32xf32>
    %73 = arith.divf %71, %72 : vector<1x32xf32>
    %74 = vector.extract_strided_slice %55 {offsets = [0, 64], sizes = [1, 32], strides = [1, 1]} : vector<1x96xf32> to vector<1x32xf32>
    %75 = vector.extract_strided_slice %57 {offsets = [0, 64], sizes = [1, 32], strides = [1, 1]} : vector<1x96xf32> to vector<1x32xf32>
    %76 = arith.mulf %65, %75 : vector<1x32xf32>
    %77 = arith.addf %74, %76 : vector<1x32xf32>
    %78 = math.tanh %77 : vector<1x32xf32>
    %cst_26 = arith.constant 1.000000e+00 : f32
    %79 = vector.broadcast %cst_26 : f32 to vector<1x32xf32>
    %80 = arith.subf %79, %73 : vector<1x32xf32>
    %81 = arith.mulf %80, %78 : vector<1x32xf32>
    %82 = arith.mulf %73, %53 : vector<1x32xf32>
    %83 = arith.addf %81, %82 : vector<1x32xf32>
    %84 = vector.extract_strided_slice %52 {offsets = [7, 0], sizes = [1, 96], strides = [1, 1]} : vector<8x96xf32> to vector<1x96xf32>
    %cst_27 = arith.constant dense<0.000000e+00> : vector<1x96xf32>
    %85 = tpu.matmul %54, %11, %cst_27 {dimension_numbers = #tpu.dot_dimension_numbers<[1], [0], [0], [1], [0, 0, 1, 1], [], []>} : vector<1x32xf32>, vector<32x96xf32>, vector<1x96xf32> -> vector<1x96xf32>
    %86 = arith.addf %85, %13 : vector<1x96xf32>
    %87 = vector.extract_strided_slice %84 {offsets = [0, 0], sizes = [1, 32], strides = [1, 1]} : vector<1x96xf32> to vector<1x32xf32>
    %88 = vector.extract_strided_slice %86 {offsets = [0, 0], sizes = [1, 32], strides = [1, 1]} : vector<1x96xf32> to vector<1x32xf32>
    %89 = arith.addf %87, %88 : vector<1x32xf32>
    %90 = arith.negf %89 : vector<1x32xf32>
    %91 = math.exp %90 : vector<1x32xf32>
    %cst_28 = arith.constant 1.000000e+00 : f32
    %92 = vector.broadcast %cst_28 : f32 to vector<1x32xf32>
    %93 = arith.addf %92, %91 : vector<1x32xf32>
    %94 = arith.divf %92, %93 : vector<1x32xf32>
    %95 = vector.extract_strided_slice %84 {offsets = [0, 32], sizes = [1, 32], strides = [1, 1]} : vector<1x96xf32> to vector<1x32xf32>
    %96 = vector.extract_strided_slice %86 {offsets = [0, 32], sizes = [1, 32], strides = [1, 1]} : vector<1x96xf32> to vector<1x32xf32>
    %97 = arith.addf %95, %96 : vector<1x32xf32>
    %98 = arith.negf %97 : vector<1x32xf32>
    %99 = math.exp %98 : vector<1x32xf32>
    %cst_29 = arith.constant 1.000000e+00 : f32
    %100 = vector.broadcast %cst_29 : f32 to vector<1x32xf32>
    %101 = arith.addf %100, %99 : vector<1x32xf32>
    %102 = arith.divf %100, %101 : vector<1x32xf32>
    %103 = vector.extract_strided_slice %84 {offsets = [0, 64], sizes = [1, 32], strides = [1, 1]} : vector<1x96xf32> to vector<1x32xf32>
    %104 = vector.extract_strided_slice %86 {offsets = [0, 64], sizes = [1, 32], strides = [1, 1]} : vector<1x96xf32> to vector<1x32xf32>
    %105 = arith.mulf %94, %104 : vector<1x32xf32>
    %106 = arith.addf %103, %105 : vector<1x32xf32>
    %107 = math.tanh %106 : vector<1x32xf32>
    %cst_30 = arith.constant 1.000000e+00 : f32
    %108 = vector.broadcast %cst_30 : f32 to vector<1x32xf32>
    %109 = arith.subf %108, %102 : vector<1x32xf32>
    %110 = arith.mulf %109, %107 : vector<1x32xf32>
    %111 = arith.mulf %102, %54 : vector<1x32xf32>
    %112 = arith.addf %110, %111 : vector<1x32xf32>
    %113 = vector.extract_strided_slice %49 {offsets = [1, 0], sizes = [1, 96], strides = [1, 1]} : vector<8x96xf32> to vector<1x96xf32>
    %cst_31 = arith.constant dense<0.000000e+00> : vector<1x96xf32>
    %114 = tpu.matmul %83, %7, %cst_31 {dimension_numbers = #tpu.dot_dimension_numbers<[1], [0], [0], [1], [0, 0, 1, 1], [], []>} : vector<1x32xf32>, vector<32x96xf32>, vector<1x96xf32> -> vector<1x96xf32>
    %115 = arith.addf %114, %9 : vector<1x96xf32>
    %116 = vector.extract_strided_slice %113 {offsets = [0, 0], sizes = [1, 32], strides = [1, 1]} : vector<1x96xf32> to vector<1x32xf32>
    %117 = vector.extract_strided_slice %115 {offsets = [0, 0], sizes = [1, 32], strides = [1, 1]} : vector<1x96xf32> to vector<1x32xf32>
    %118 = arith.addf %116, %117 : vector<1x32xf32>
    %119 = arith.negf %118 : vector<1x32xf32>
    %120 = math.exp %119 : vector<1x32xf32>
    %cst_32 = arith.constant 1.000000e+00 : f32
    %121 = vector.broadcast %cst_32 : f32 to vector<1x32xf32>
    %122 = arith.addf %121, %120 : vector<1x32xf32>
    %123 = arith.divf %121, %122 : vector<1x32xf32>
    %124 = vector.extract_strided_slice %113 {offsets = [0, 32], sizes = [1, 32], strides = [1, 1]} : vector<1x96xf32> to vector<1x32xf32>
    %125 = vector.extract_strided_slice %115 {offsets = [0, 32], sizes = [1, 32], strides = [1, 1]} : vector<1x96xf32> to vector<1x32xf32>
    %126 = arith.addf %124, %125 : vector<1x32xf32>
    %127 = arith.negf %126 : vector<1x32xf32>
    %128 = math.exp %127 : vector<1x32xf32>
    %cst_33 = arith.constant 1.000000e+00 : f32
    %129 = vector.broadcast %cst_33 : f32 to vector<1x32xf32>
    %130 = arith.addf %129, %128 : vector<1x32xf32>
    %131 = arith.divf %129, %130 : vector<1x32xf32>
    %132 = vector.extract_strided_slice %113 {offsets = [0, 64], sizes = [1, 32], strides = [1, 1]} : vector<1x96xf32> to vector<1x32xf32>
    %133 = vector.extract_strided_slice %115 {offsets = [0, 64], sizes = [1, 32], strides = [1, 1]} : vector<1x96xf32> to vector<1x32xf32>
    %134 = arith.mulf %123, %133 : vector<1x32xf32>
    %135 = arith.addf %132, %134 : vector<1x32xf32>
    %136 = math.tanh %135 : vector<1x32xf32>
    %cst_34 = arith.constant 1.000000e+00 : f32
    %137 = vector.broadcast %cst_34 : f32 to vector<1x32xf32>
    %138 = arith.subf %137, %131 : vector<1x32xf32>
    %139 = arith.mulf %138, %136 : vector<1x32xf32>
    %140 = arith.mulf %131, %83 : vector<1x32xf32>
    %141 = arith.addf %139, %140 : vector<1x32xf32>
    %142 = vector.extract_strided_slice %52 {offsets = [6, 0], sizes = [1, 96], strides = [1, 1]} : vector<8x96xf32> to vector<1x96xf32>
    %cst_35 = arith.constant dense<0.000000e+00> : vector<1x96xf32>
    %143 = tpu.matmul %112, %11, %cst_35 {dimension_numbers = #tpu.dot_dimension_numbers<[1], [0], [0], [1], [0, 0, 1, 1], [], []>} : vector<1x32xf32>, vector<32x96xf32>, vector<1x96xf32> -> vector<1x96xf32>
    %144 = arith.addf %143, %13 : vector<1x96xf32>
    %145 = vector.extract_strided_slice %142 {offsets = [0, 0], sizes = [1, 32], strides = [1, 1]} : vector<1x96xf32> to vector<1x32xf32>
    %146 = vector.extract_strided_slice %144 {offsets = [0, 0], sizes = [1, 32], strides = [1, 1]} : vector<1x96xf32> to vector<1x32xf32>
    %147 = arith.addf %145, %146 : vector<1x32xf32>
    %148 = arith.negf %147 : vector<1x32xf32>
    %149 = math.exp %148 : vector<1x32xf32>
    %cst_36 = arith.constant 1.000000e+00 : f32
    %150 = vector.broadcast %cst_36 : f32 to vector<1x32xf32>
    %151 = arith.addf %150, %149 : vector<1x32xf32>
    %152 = arith.divf %150, %151 : vector<1x32xf32>
    %153 = vector.extract_strided_slice %142 {offsets = [0, 32], sizes = [1, 32], strides = [1, 1]} : vector<1x96xf32> to vector<1x32xf32>
    %154 = vector.extract_strided_slice %144 {offsets = [0, 32], sizes = [1, 32], strides = [1, 1]} : vector<1x96xf32> to vector<1x32xf32>
    %155 = arith.addf %153, %154 : vector<1x32xf32>
    %156 = arith.negf %155 : vector<1x32xf32>
    %157 = math.exp %156 : vector<1x32xf32>
    %cst_37 = arith.constant 1.000000e+00 : f32
    %158 = vector.broadcast %cst_37 : f32 to vector<1x32xf32>
    %159 = arith.addf %158, %157 : vector<1x32xf32>
    %160 = arith.divf %158, %159 : vector<1x32xf32>
    %161 = vector.extract_strided_slice %142 {offsets = [0, 64], sizes = [1, 32], strides = [1, 1]} : vector<1x96xf32> to vector<1x32xf32>
    %162 = vector.extract_strided_slice %144 {offsets = [0, 64], sizes = [1, 32], strides = [1, 1]} : vector<1x96xf32> to vector<1x32xf32>
    %163 = arith.mulf %152, %162 : vector<1x32xf32>
    %164 = arith.addf %161, %163 : vector<1x32xf32>
    %165 = math.tanh %164 : vector<1x32xf32>
    %cst_38 = arith.constant 1.000000e+00 : f32
    %166 = vector.broadcast %cst_38 : f32 to vector<1x32xf32>
    %167 = arith.subf %166, %160 : vector<1x32xf32>
    %168 = arith.mulf %167, %165 : vector<1x32xf32>
    %169 = arith.mulf %160, %112 : vector<1x32xf32>
    %170 = arith.addf %168, %169 : vector<1x32xf32>
    %171 = vector.extract_strided_slice %49 {offsets = [2, 0], sizes = [1, 96], strides = [1, 1]} : vector<8x96xf32> to vector<1x96xf32>
    %cst_39 = arith.constant dense<0.000000e+00> : vector<1x96xf32>
    %172 = tpu.matmul %141, %7, %cst_39 {dimension_numbers = #tpu.dot_dimension_numbers<[1], [0], [0], [1], [0, 0, 1, 1], [], []>} : vector<1x32xf32>, vector<32x96xf32>, vector<1x96xf32> -> vector<1x96xf32>
    %173 = arith.addf %172, %9 : vector<1x96xf32>
    %174 = vector.extract_strided_slice %171 {offsets = [0, 0], sizes = [1, 32], strides = [1, 1]} : vector<1x96xf32> to vector<1x32xf32>
    %175 = vector.extract_strided_slice %173 {offsets = [0, 0], sizes = [1, 32], strides = [1, 1]} : vector<1x96xf32> to vector<1x32xf32>
    %176 = arith.addf %174, %175 : vector<1x32xf32>
    %177 = arith.negf %176 : vector<1x32xf32>
    %178 = math.exp %177 : vector<1x32xf32>
    %cst_40 = arith.constant 1.000000e+00 : f32
    %179 = vector.broadcast %cst_40 : f32 to vector<1x32xf32>
    %180 = arith.addf %179, %178 : vector<1x32xf32>
    %181 = arith.divf %179, %180 : vector<1x32xf32>
    %182 = vector.extract_strided_slice %171 {offsets = [0, 32], sizes = [1, 32], strides = [1, 1]} : vector<1x96xf32> to vector<1x32xf32>
    %183 = vector.extract_strided_slice %173 {offsets = [0, 32], sizes = [1, 32], strides = [1, 1]} : vector<1x96xf32> to vector<1x32xf32>
    %184 = arith.addf %182, %183 : vector<1x32xf32>
    %185 = arith.negf %184 : vector<1x32xf32>
    %186 = math.exp %185 : vector<1x32xf32>
    %cst_41 = arith.constant 1.000000e+00 : f32
    %187 = vector.broadcast %cst_41 : f32 to vector<1x32xf32>
    %188 = arith.addf %187, %186 : vector<1x32xf32>
    %189 = arith.divf %187, %188 : vector<1x32xf32>
    %190 = vector.extract_strided_slice %171 {offsets = [0, 64], sizes = [1, 32], strides = [1, 1]} : vector<1x96xf32> to vector<1x32xf32>
    %191 = vector.extract_strided_slice %173 {offsets = [0, 64], sizes = [1, 32], strides = [1, 1]} : vector<1x96xf32> to vector<1x32xf32>
    %192 = arith.mulf %181, %191 : vector<1x32xf32>
    %193 = arith.addf %190, %192 : vector<1x32xf32>
    %194 = math.tanh %193 : vector<1x32xf32>
    %cst_42 = arith.constant 1.000000e+00 : f32
    %195 = vector.broadcast %cst_42 : f32 to vector<1x32xf32>
    %196 = arith.subf %195, %189 : vector<1x32xf32>
    %197 = arith.mulf %196, %194 : vector<1x32xf32>
    %198 = arith.mulf %189, %141 : vector<1x32xf32>
    %199 = arith.addf %197, %198 : vector<1x32xf32>
    %200 = vector.extract_strided_slice %52 {offsets = [5, 0], sizes = [1, 96], strides = [1, 1]} : vector<8x96xf32> to vector<1x96xf32>
    %cst_43 = arith.constant dense<0.000000e+00> : vector<1x96xf32>
    %201 = tpu.matmul %170, %11, %cst_43 {dimension_numbers = #tpu.dot_dimension_numbers<[1], [0], [0], [1], [0, 0, 1, 1], [], []>} : vector<1x32xf32>, vector<32x96xf32>, vector<1x96xf32> -> vector<1x96xf32>
    %202 = arith.addf %201, %13 : vector<1x96xf32>
    %203 = vector.extract_strided_slice %200 {offsets = [0, 0], sizes = [1, 32], strides = [1, 1]} : vector<1x96xf32> to vector<1x32xf32>
    %204 = vector.extract_strided_slice %202 {offsets = [0, 0], sizes = [1, 32], strides = [1, 1]} : vector<1x96xf32> to vector<1x32xf32>
    %205 = arith.addf %203, %204 : vector<1x32xf32>
    %206 = arith.negf %205 : vector<1x32xf32>
    %207 = math.exp %206 : vector<1x32xf32>
    %cst_44 = arith.constant 1.000000e+00 : f32
    %208 = vector.broadcast %cst_44 : f32 to vector<1x32xf32>
    %209 = arith.addf %208, %207 : vector<1x32xf32>
    %210 = arith.divf %208, %209 : vector<1x32xf32>
    %211 = vector.extract_strided_slice %200 {offsets = [0, 32], sizes = [1, 32], strides = [1, 1]} : vector<1x96xf32> to vector<1x32xf32>
    %212 = vector.extract_strided_slice %202 {offsets = [0, 32], sizes = [1, 32], strides = [1, 1]} : vector<1x96xf32> to vector<1x32xf32>
    %213 = arith.addf %211, %212 : vector<1x32xf32>
    %214 = arith.negf %213 : vector<1x32xf32>
    %215 = math.exp %214 : vector<1x32xf32>
    %cst_45 = arith.constant 1.000000e+00 : f32
    %216 = vector.broadcast %cst_45 : f32 to vector<1x32xf32>
    %217 = arith.addf %216, %215 : vector<1x32xf32>
    %218 = arith.divf %216, %217 : vector<1x32xf32>
    %219 = vector.extract_strided_slice %200 {offsets = [0, 64], sizes = [1, 32], strides = [1, 1]} : vector<1x96xf32> to vector<1x32xf32>
    %220 = vector.extract_strided_slice %202 {offsets = [0, 64], sizes = [1, 32], strides = [1, 1]} : vector<1x96xf32> to vector<1x32xf32>
    %221 = arith.mulf %210, %220 : vector<1x32xf32>
    %222 = arith.addf %219, %221 : vector<1x32xf32>
    %223 = math.tanh %222 : vector<1x32xf32>
    %cst_46 = arith.constant 1.000000e+00 : f32
    %224 = vector.broadcast %cst_46 : f32 to vector<1x32xf32>
    %225 = arith.subf %224, %218 : vector<1x32xf32>
    %226 = arith.mulf %225, %223 : vector<1x32xf32>
    %227 = arith.mulf %218, %170 : vector<1x32xf32>
    %228 = arith.addf %226, %227 : vector<1x32xf32>
    %229 = vector.extract_strided_slice %49 {offsets = [3, 0], sizes = [1, 96], strides = [1, 1]} : vector<8x96xf32> to vector<1x96xf32>
    %cst_47 = arith.constant dense<0.000000e+00> : vector<1x96xf32>
    %230 = tpu.matmul %199, %7, %cst_47 {dimension_numbers = #tpu.dot_dimension_numbers<[1], [0], [0], [1], [0, 0, 1, 1], [], []>} : vector<1x32xf32>, vector<32x96xf32>, vector<1x96xf32> -> vector<1x96xf32>
    %231 = arith.addf %230, %9 : vector<1x96xf32>
    %232 = vector.extract_strided_slice %229 {offsets = [0, 0], sizes = [1, 32], strides = [1, 1]} : vector<1x96xf32> to vector<1x32xf32>
    %233 = vector.extract_strided_slice %231 {offsets = [0, 0], sizes = [1, 32], strides = [1, 1]} : vector<1x96xf32> to vector<1x32xf32>
    %234 = arith.addf %232, %233 : vector<1x32xf32>
    %235 = arith.negf %234 : vector<1x32xf32>
    %236 = math.exp %235 : vector<1x32xf32>
    %cst_48 = arith.constant 1.000000e+00 : f32
    %237 = vector.broadcast %cst_48 : f32 to vector<1x32xf32>
    %238 = arith.addf %237, %236 : vector<1x32xf32>
    %239 = arith.divf %237, %238 : vector<1x32xf32>
    %240 = vector.extract_strided_slice %229 {offsets = [0, 32], sizes = [1, 32], strides = [1, 1]} : vector<1x96xf32> to vector<1x32xf32>
    %241 = vector.extract_strided_slice %231 {offsets = [0, 32], sizes = [1, 32], strides = [1, 1]} : vector<1x96xf32> to vector<1x32xf32>
    %242 = arith.addf %240, %241 : vector<1x32xf32>
    %243 = arith.negf %242 : vector<1x32xf32>
    %244 = math.exp %243 : vector<1x32xf32>
    %cst_49 = arith.constant 1.000000e+00 : f32
    %245 = vector.broadcast %cst_49 : f32 to vector<1x32xf32>
    %246 = arith.addf %245, %244 : vector<1x32xf32>
    %247 = arith.divf %245, %246 : vector<1x32xf32>
    %248 = vector.extract_strided_slice %229 {offsets = [0, 64], sizes = [1, 32], strides = [1, 1]} : vector<1x96xf32> to vector<1x32xf32>
    %249 = vector.extract_strided_slice %231 {offsets = [0, 64], sizes = [1, 32], strides = [1, 1]} : vector<1x96xf32> to vector<1x32xf32>
    %250 = arith.mulf %239, %249 : vector<1x32xf32>
    %251 = arith.addf %248, %250 : vector<1x32xf32>
    %252 = math.tanh %251 : vector<1x32xf32>
    %cst_50 = arith.constant 1.000000e+00 : f32
    %253 = vector.broadcast %cst_50 : f32 to vector<1x32xf32>
    %254 = arith.subf %253, %247 : vector<1x32xf32>
    %255 = arith.mulf %254, %252 : vector<1x32xf32>
    %256 = arith.mulf %247, %199 : vector<1x32xf32>
    %257 = arith.addf %255, %256 : vector<1x32xf32>
    %258 = vector.extract_strided_slice %52 {offsets = [4, 0], sizes = [1, 96], strides = [1, 1]} : vector<8x96xf32> to vector<1x96xf32>
    %cst_51 = arith.constant dense<0.000000e+00> : vector<1x96xf32>
    %259 = tpu.matmul %228, %11, %cst_51 {dimension_numbers = #tpu.dot_dimension_numbers<[1], [0], [0], [1], [0, 0, 1, 1], [], []>} : vector<1x32xf32>, vector<32x96xf32>, vector<1x96xf32> -> vector<1x96xf32>
    %260 = arith.addf %259, %13 : vector<1x96xf32>
    %261 = vector.extract_strided_slice %258 {offsets = [0, 0], sizes = [1, 32], strides = [1, 1]} : vector<1x96xf32> to vector<1x32xf32>
    %262 = vector.extract_strided_slice %260 {offsets = [0, 0], sizes = [1, 32], strides = [1, 1]} : vector<1x96xf32> to vector<1x32xf32>
    %263 = arith.addf %261, %262 : vector<1x32xf32>
    %264 = arith.negf %263 : vector<1x32xf32>
    %265 = math.exp %264 : vector<1x32xf32>
    %cst_52 = arith.constant 1.000000e+00 : f32
    %266 = vector.broadcast %cst_52 : f32 to vector<1x32xf32>
    %267 = arith.addf %266, %265 : vector<1x32xf32>
    %268 = arith.divf %266, %267 : vector<1x32xf32>
    %269 = vector.extract_strided_slice %258 {offsets = [0, 32], sizes = [1, 32], strides = [1, 1]} : vector<1x96xf32> to vector<1x32xf32>
    %270 = vector.extract_strided_slice %260 {offsets = [0, 32], sizes = [1, 32], strides = [1, 1]} : vector<1x96xf32> to vector<1x32xf32>
    %271 = arith.addf %269, %270 : vector<1x32xf32>
    %272 = arith.negf %271 : vector<1x32xf32>
    %273 = math.exp %272 : vector<1x32xf32>
    %cst_53 = arith.constant 1.000000e+00 : f32
    %274 = vector.broadcast %cst_53 : f32 to vector<1x32xf32>
    %275 = arith.addf %274, %273 : vector<1x32xf32>
    %276 = arith.divf %274, %275 : vector<1x32xf32>
    %277 = vector.extract_strided_slice %258 {offsets = [0, 64], sizes = [1, 32], strides = [1, 1]} : vector<1x96xf32> to vector<1x32xf32>
    %278 = vector.extract_strided_slice %260 {offsets = [0, 64], sizes = [1, 32], strides = [1, 1]} : vector<1x96xf32> to vector<1x32xf32>
    %279 = arith.mulf %268, %278 : vector<1x32xf32>
    %280 = arith.addf %277, %279 : vector<1x32xf32>
    %281 = math.tanh %280 : vector<1x32xf32>
    %cst_54 = arith.constant 1.000000e+00 : f32
    %282 = vector.broadcast %cst_54 : f32 to vector<1x32xf32>
    %283 = arith.subf %282, %276 : vector<1x32xf32>
    %284 = arith.mulf %283, %281 : vector<1x32xf32>
    %285 = arith.mulf %276, %228 : vector<1x32xf32>
    %286 = arith.addf %284, %285 : vector<1x32xf32>
    %287 = vector.extract_strided_slice %49 {offsets = [4, 0], sizes = [1, 96], strides = [1, 1]} : vector<8x96xf32> to vector<1x96xf32>
    %cst_55 = arith.constant dense<0.000000e+00> : vector<1x96xf32>
    %288 = tpu.matmul %257, %7, %cst_55 {dimension_numbers = #tpu.dot_dimension_numbers<[1], [0], [0], [1], [0, 0, 1, 1], [], []>} : vector<1x32xf32>, vector<32x96xf32>, vector<1x96xf32> -> vector<1x96xf32>
    %289 = arith.addf %288, %9 : vector<1x96xf32>
    %290 = vector.extract_strided_slice %287 {offsets = [0, 0], sizes = [1, 32], strides = [1, 1]} : vector<1x96xf32> to vector<1x32xf32>
    %291 = vector.extract_strided_slice %289 {offsets = [0, 0], sizes = [1, 32], strides = [1, 1]} : vector<1x96xf32> to vector<1x32xf32>
    %292 = arith.addf %290, %291 : vector<1x32xf32>
    %293 = arith.negf %292 : vector<1x32xf32>
    %294 = math.exp %293 : vector<1x32xf32>
    %cst_56 = arith.constant 1.000000e+00 : f32
    %295 = vector.broadcast %cst_56 : f32 to vector<1x32xf32>
    %296 = arith.addf %295, %294 : vector<1x32xf32>
    %297 = arith.divf %295, %296 : vector<1x32xf32>
    %298 = vector.extract_strided_slice %287 {offsets = [0, 32], sizes = [1, 32], strides = [1, 1]} : vector<1x96xf32> to vector<1x32xf32>
    %299 = vector.extract_strided_slice %289 {offsets = [0, 32], sizes = [1, 32], strides = [1, 1]} : vector<1x96xf32> to vector<1x32xf32>
    %300 = arith.addf %298, %299 : vector<1x32xf32>
    %301 = arith.negf %300 : vector<1x32xf32>
    %302 = math.exp %301 : vector<1x32xf32>
    %cst_57 = arith.constant 1.000000e+00 : f32
    %303 = vector.broadcast %cst_57 : f32 to vector<1x32xf32>
    %304 = arith.addf %303, %302 : vector<1x32xf32>
    %305 = arith.divf %303, %304 : vector<1x32xf32>
    %306 = vector.extract_strided_slice %287 {offsets = [0, 64], sizes = [1, 32], strides = [1, 1]} : vector<1x96xf32> to vector<1x32xf32>
    %307 = vector.extract_strided_slice %289 {offsets = [0, 64], sizes = [1, 32], strides = [1, 1]} : vector<1x96xf32> to vector<1x32xf32>
    %308 = arith.mulf %297, %307 : vector<1x32xf32>
    %309 = arith.addf %306, %308 : vector<1x32xf32>
    %310 = math.tanh %309 : vector<1x32xf32>
    %cst_58 = arith.constant 1.000000e+00 : f32
    %311 = vector.broadcast %cst_58 : f32 to vector<1x32xf32>
    %312 = arith.subf %311, %305 : vector<1x32xf32>
    %313 = arith.mulf %312, %310 : vector<1x32xf32>
    %314 = arith.mulf %305, %257 : vector<1x32xf32>
    %315 = arith.addf %313, %314 : vector<1x32xf32>
    %316 = vector.extract_strided_slice %52 {offsets = [3, 0], sizes = [1, 96], strides = [1, 1]} : vector<8x96xf32> to vector<1x96xf32>
    %cst_59 = arith.constant dense<0.000000e+00> : vector<1x96xf32>
    %317 = tpu.matmul %286, %11, %cst_59 {dimension_numbers = #tpu.dot_dimension_numbers<[1], [0], [0], [1], [0, 0, 1, 1], [], []>} : vector<1x32xf32>, vector<32x96xf32>, vector<1x96xf32> -> vector<1x96xf32>
    %318 = arith.addf %317, %13 : vector<1x96xf32>
    %319 = vector.extract_strided_slice %316 {offsets = [0, 0], sizes = [1, 32], strides = [1, 1]} : vector<1x96xf32> to vector<1x32xf32>
    %320 = vector.extract_strided_slice %318 {offsets = [0, 0], sizes = [1, 32], strides = [1, 1]} : vector<1x96xf32> to vector<1x32xf32>
    %321 = arith.addf %319, %320 : vector<1x32xf32>
    %322 = arith.negf %321 : vector<1x32xf32>
    %323 = math.exp %322 : vector<1x32xf32>
    %cst_60 = arith.constant 1.000000e+00 : f32
    %324 = vector.broadcast %cst_60 : f32 to vector<1x32xf32>
    %325 = arith.addf %324, %323 : vector<1x32xf32>
    %326 = arith.divf %324, %325 : vector<1x32xf32>
    %327 = vector.extract_strided_slice %316 {offsets = [0, 32], sizes = [1, 32], strides = [1, 1]} : vector<1x96xf32> to vector<1x32xf32>
    %328 = vector.extract_strided_slice %318 {offsets = [0, 32], sizes = [1, 32], strides = [1, 1]} : vector<1x96xf32> to vector<1x32xf32>
    %329 = arith.addf %327, %328 : vector<1x32xf32>
    %330 = arith.negf %329 : vector<1x32xf32>
    %331 = math.exp %330 : vector<1x32xf32>
    %cst_61 = arith.constant 1.000000e+00 : f32
    %332 = vector.broadcast %cst_61 : f32 to vector<1x32xf32>
    %333 = arith.addf %332, %331 : vector<1x32xf32>
    %334 = arith.divf %332, %333 : vector<1x32xf32>
    %335 = vector.extract_strided_slice %316 {offsets = [0, 64], sizes = [1, 32], strides = [1, 1]} : vector<1x96xf32> to vector<1x32xf32>
    %336 = vector.extract_strided_slice %318 {offsets = [0, 64], sizes = [1, 32], strides = [1, 1]} : vector<1x96xf32> to vector<1x32xf32>
    %337 = arith.mulf %326, %336 : vector<1x32xf32>
    %338 = arith.addf %335, %337 : vector<1x32xf32>
    %339 = math.tanh %338 : vector<1x32xf32>
    %cst_62 = arith.constant 1.000000e+00 : f32
    %340 = vector.broadcast %cst_62 : f32 to vector<1x32xf32>
    %341 = arith.subf %340, %334 : vector<1x32xf32>
    %342 = arith.mulf %341, %339 : vector<1x32xf32>
    %343 = arith.mulf %334, %286 : vector<1x32xf32>
    %344 = arith.addf %342, %343 : vector<1x32xf32>
    %345 = vector.extract_strided_slice %49 {offsets = [5, 0], sizes = [1, 96], strides = [1, 1]} : vector<8x96xf32> to vector<1x96xf32>
    %cst_63 = arith.constant dense<0.000000e+00> : vector<1x96xf32>
    %346 = tpu.matmul %315, %7, %cst_63 {dimension_numbers = #tpu.dot_dimension_numbers<[1], [0], [0], [1], [0, 0, 1, 1], [], []>} : vector<1x32xf32>, vector<32x96xf32>, vector<1x96xf32> -> vector<1x96xf32>
    %347 = arith.addf %346, %9 : vector<1x96xf32>
    %348 = vector.extract_strided_slice %345 {offsets = [0, 0], sizes = [1, 32], strides = [1, 1]} : vector<1x96xf32> to vector<1x32xf32>
    %349 = vector.extract_strided_slice %347 {offsets = [0, 0], sizes = [1, 32], strides = [1, 1]} : vector<1x96xf32> to vector<1x32xf32>
    %350 = arith.addf %348, %349 : vector<1x32xf32>
    %351 = arith.negf %350 : vector<1x32xf32>
    %352 = math.exp %351 : vector<1x32xf32>
    %cst_64 = arith.constant 1.000000e+00 : f32
    %353 = vector.broadcast %cst_64 : f32 to vector<1x32xf32>
    %354 = arith.addf %353, %352 : vector<1x32xf32>
    %355 = arith.divf %353, %354 : vector<1x32xf32>
    %356 = vector.extract_strided_slice %345 {offsets = [0, 32], sizes = [1, 32], strides = [1, 1]} : vector<1x96xf32> to vector<1x32xf32>
    %357 = vector.extract_strided_slice %347 {offsets = [0, 32], sizes = [1, 32], strides = [1, 1]} : vector<1x96xf32> to vector<1x32xf32>
    %358 = arith.addf %356, %357 : vector<1x32xf32>
    %359 = arith.negf %358 : vector<1x32xf32>
    %360 = math.exp %359 : vector<1x32xf32>
    %cst_65 = arith.constant 1.000000e+00 : f32
    %361 = vector.broadcast %cst_65 : f32 to vector<1x32xf32>
    %362 = arith.addf %361, %360 : vector<1x32xf32>
    %363 = arith.divf %361, %362 : vector<1x32xf32>
    %364 = vector.extract_strided_slice %345 {offsets = [0, 64], sizes = [1, 32], strides = [1, 1]} : vector<1x96xf32> to vector<1x32xf32>
    %365 = vector.extract_strided_slice %347 {offsets = [0, 64], sizes = [1, 32], strides = [1, 1]} : vector<1x96xf32> to vector<1x32xf32>
    %366 = arith.mulf %355, %365 : vector<1x32xf32>
    %367 = arith.addf %364, %366 : vector<1x32xf32>
    %368 = math.tanh %367 : vector<1x32xf32>
    %cst_66 = arith.constant 1.000000e+00 : f32
    %369 = vector.broadcast %cst_66 : f32 to vector<1x32xf32>
    %370 = arith.subf %369, %363 : vector<1x32xf32>
    %371 = arith.mulf %370, %368 : vector<1x32xf32>
    %372 = arith.mulf %363, %315 : vector<1x32xf32>
    %373 = arith.addf %371, %372 : vector<1x32xf32>
    %374 = vector.extract_strided_slice %52 {offsets = [2, 0], sizes = [1, 96], strides = [1, 1]} : vector<8x96xf32> to vector<1x96xf32>
    %cst_67 = arith.constant dense<0.000000e+00> : vector<1x96xf32>
    %375 = tpu.matmul %344, %11, %cst_67 {dimension_numbers = #tpu.dot_dimension_numbers<[1], [0], [0], [1], [0, 0, 1, 1], [], []>} : vector<1x32xf32>, vector<32x96xf32>, vector<1x96xf32> -> vector<1x96xf32>
    %376 = arith.addf %375, %13 : vector<1x96xf32>
    %377 = vector.extract_strided_slice %374 {offsets = [0, 0], sizes = [1, 32], strides = [1, 1]} : vector<1x96xf32> to vector<1x32xf32>
    %378 = vector.extract_strided_slice %376 {offsets = [0, 0], sizes = [1, 32], strides = [1, 1]} : vector<1x96xf32> to vector<1x32xf32>
    %379 = arith.addf %377, %378 : vector<1x32xf32>
    %380 = arith.negf %379 : vector<1x32xf32>
    %381 = math.exp %380 : vector<1x32xf32>
    %cst_68 = arith.constant 1.000000e+00 : f32
    %382 = vector.broadcast %cst_68 : f32 to vector<1x32xf32>
    %383 = arith.addf %382, %381 : vector<1x32xf32>
    %384 = arith.divf %382, %383 : vector<1x32xf32>
    %385 = vector.extract_strided_slice %374 {offsets = [0, 32], sizes = [1, 32], strides = [1, 1]} : vector<1x96xf32> to vector<1x32xf32>
    %386 = vector.extract_strided_slice %376 {offsets = [0, 32], sizes = [1, 32], strides = [1, 1]} : vector<1x96xf32> to vector<1x32xf32>
    %387 = arith.addf %385, %386 : vector<1x32xf32>
    %388 = arith.negf %387 : vector<1x32xf32>
    %389 = math.exp %388 : vector<1x32xf32>
    %cst_69 = arith.constant 1.000000e+00 : f32
    %390 = vector.broadcast %cst_69 : f32 to vector<1x32xf32>
    %391 = arith.addf %390, %389 : vector<1x32xf32>
    %392 = arith.divf %390, %391 : vector<1x32xf32>
    %393 = vector.extract_strided_slice %374 {offsets = [0, 64], sizes = [1, 32], strides = [1, 1]} : vector<1x96xf32> to vector<1x32xf32>
    %394 = vector.extract_strided_slice %376 {offsets = [0, 64], sizes = [1, 32], strides = [1, 1]} : vector<1x96xf32> to vector<1x32xf32>
    %395 = arith.mulf %384, %394 : vector<1x32xf32>
    %396 = arith.addf %393, %395 : vector<1x32xf32>
    %397 = math.tanh %396 : vector<1x32xf32>
    %cst_70 = arith.constant 1.000000e+00 : f32
    %398 = vector.broadcast %cst_70 : f32 to vector<1x32xf32>
    %399 = arith.subf %398, %392 : vector<1x32xf32>
    %400 = arith.mulf %399, %397 : vector<1x32xf32>
    %401 = arith.mulf %392, %344 : vector<1x32xf32>
    %402 = arith.addf %400, %401 : vector<1x32xf32>
    %403 = vector.extract_strided_slice %49 {offsets = [6, 0], sizes = [1, 96], strides = [1, 1]} : vector<8x96xf32> to vector<1x96xf32>
    %cst_71 = arith.constant dense<0.000000e+00> : vector<1x96xf32>
    %404 = tpu.matmul %373, %7, %cst_71 {dimension_numbers = #tpu.dot_dimension_numbers<[1], [0], [0], [1], [0, 0, 1, 1], [], []>} : vector<1x32xf32>, vector<32x96xf32>, vector<1x96xf32> -> vector<1x96xf32>
    %405 = arith.addf %404, %9 : vector<1x96xf32>
    %406 = vector.extract_strided_slice %403 {offsets = [0, 0], sizes = [1, 32], strides = [1, 1]} : vector<1x96xf32> to vector<1x32xf32>
    %407 = vector.extract_strided_slice %405 {offsets = [0, 0], sizes = [1, 32], strides = [1, 1]} : vector<1x96xf32> to vector<1x32xf32>
    %408 = arith.addf %406, %407 : vector<1x32xf32>
    %409 = arith.negf %408 : vector<1x32xf32>
    %410 = math.exp %409 : vector<1x32xf32>
    %cst_72 = arith.constant 1.000000e+00 : f32
    %411 = vector.broadcast %cst_72 : f32 to vector<1x32xf32>
    %412 = arith.addf %411, %410 : vector<1x32xf32>
    %413 = arith.divf %411, %412 : vector<1x32xf32>
    %414 = vector.extract_strided_slice %403 {offsets = [0, 32], sizes = [1, 32], strides = [1, 1]} : vector<1x96xf32> to vector<1x32xf32>
    %415 = vector.extract_strided_slice %405 {offsets = [0, 32], sizes = [1, 32], strides = [1, 1]} : vector<1x96xf32> to vector<1x32xf32>
    %416 = arith.addf %414, %415 : vector<1x32xf32>
    %417 = arith.negf %416 : vector<1x32xf32>
    %418 = math.exp %417 : vector<1x32xf32>
    %cst_73 = arith.constant 1.000000e+00 : f32
    %419 = vector.broadcast %cst_73 : f32 to vector<1x32xf32>
    %420 = arith.addf %419, %418 : vector<1x32xf32>
    %421 = arith.divf %419, %420 : vector<1x32xf32>
    %422 = vector.extract_strided_slice %403 {offsets = [0, 64], sizes = [1, 32], strides = [1, 1]} : vector<1x96xf32> to vector<1x32xf32>
    %423 = vector.extract_strided_slice %405 {offsets = [0, 64], sizes = [1, 32], strides = [1, 1]} : vector<1x96xf32> to vector<1x32xf32>
    %424 = arith.mulf %413, %423 : vector<1x32xf32>
    %425 = arith.addf %422, %424 : vector<1x32xf32>
    %426 = math.tanh %425 : vector<1x32xf32>
    %cst_74 = arith.constant 1.000000e+00 : f32
    %427 = vector.broadcast %cst_74 : f32 to vector<1x32xf32>
    %428 = arith.subf %427, %421 : vector<1x32xf32>
    %429 = arith.mulf %428, %426 : vector<1x32xf32>
    %430 = arith.mulf %421, %373 : vector<1x32xf32>
    %431 = arith.addf %429, %430 : vector<1x32xf32>
    %432 = vector.extract_strided_slice %52 {offsets = [1, 0], sizes = [1, 96], strides = [1, 1]} : vector<8x96xf32> to vector<1x96xf32>
    %cst_75 = arith.constant dense<0.000000e+00> : vector<1x96xf32>
    %433 = tpu.matmul %402, %11, %cst_75 {dimension_numbers = #tpu.dot_dimension_numbers<[1], [0], [0], [1], [0, 0, 1, 1], [], []>} : vector<1x32xf32>, vector<32x96xf32>, vector<1x96xf32> -> vector<1x96xf32>
    %434 = arith.addf %433, %13 : vector<1x96xf32>
    %435 = vector.extract_strided_slice %432 {offsets = [0, 0], sizes = [1, 32], strides = [1, 1]} : vector<1x96xf32> to vector<1x32xf32>
    %436 = vector.extract_strided_slice %434 {offsets = [0, 0], sizes = [1, 32], strides = [1, 1]} : vector<1x96xf32> to vector<1x32xf32>
    %437 = arith.addf %435, %436 : vector<1x32xf32>
    %438 = arith.negf %437 : vector<1x32xf32>
    %439 = math.exp %438 : vector<1x32xf32>
    %cst_76 = arith.constant 1.000000e+00 : f32
    %440 = vector.broadcast %cst_76 : f32 to vector<1x32xf32>
    %441 = arith.addf %440, %439 : vector<1x32xf32>
    %442 = arith.divf %440, %441 : vector<1x32xf32>
    %443 = vector.extract_strided_slice %432 {offsets = [0, 32], sizes = [1, 32], strides = [1, 1]} : vector<1x96xf32> to vector<1x32xf32>
    %444 = vector.extract_strided_slice %434 {offsets = [0, 32], sizes = [1, 32], strides = [1, 1]} : vector<1x96xf32> to vector<1x32xf32>
    %445 = arith.addf %443, %444 : vector<1x32xf32>
    %446 = arith.negf %445 : vector<1x32xf32>
    %447 = math.exp %446 : vector<1x32xf32>
    %cst_77 = arith.constant 1.000000e+00 : f32
    %448 = vector.broadcast %cst_77 : f32 to vector<1x32xf32>
    %449 = arith.addf %448, %447 : vector<1x32xf32>
    %450 = arith.divf %448, %449 : vector<1x32xf32>
    %451 = vector.extract_strided_slice %432 {offsets = [0, 64], sizes = [1, 32], strides = [1, 1]} : vector<1x96xf32> to vector<1x32xf32>
    %452 = vector.extract_strided_slice %434 {offsets = [0, 64], sizes = [1, 32], strides = [1, 1]} : vector<1x96xf32> to vector<1x32xf32>
    %453 = arith.mulf %442, %452 : vector<1x32xf32>
    %454 = arith.addf %451, %453 : vector<1x32xf32>
    %455 = math.tanh %454 : vector<1x32xf32>
    %cst_78 = arith.constant 1.000000e+00 : f32
    %456 = vector.broadcast %cst_78 : f32 to vector<1x32xf32>
    %457 = arith.subf %456, %450 : vector<1x32xf32>
    %458 = arith.mulf %457, %455 : vector<1x32xf32>
    %459 = arith.mulf %450, %402 : vector<1x32xf32>
    %460 = arith.addf %458, %459 : vector<1x32xf32>
    %461 = vector.extract_strided_slice %49 {offsets = [7, 0], sizes = [1, 96], strides = [1, 1]} : vector<8x96xf32> to vector<1x96xf32>
    %cst_79 = arith.constant dense<0.000000e+00> : vector<1x96xf32>
    %462 = tpu.matmul %431, %7, %cst_79 {dimension_numbers = #tpu.dot_dimension_numbers<[1], [0], [0], [1], [0, 0, 1, 1], [], []>} : vector<1x32xf32>, vector<32x96xf32>, vector<1x96xf32> -> vector<1x96xf32>
    %463 = arith.addf %462, %9 : vector<1x96xf32>
    %464 = vector.extract_strided_slice %461 {offsets = [0, 0], sizes = [1, 32], strides = [1, 1]} : vector<1x96xf32> to vector<1x32xf32>
    %465 = vector.extract_strided_slice %463 {offsets = [0, 0], sizes = [1, 32], strides = [1, 1]} : vector<1x96xf32> to vector<1x32xf32>
    %466 = arith.addf %464, %465 : vector<1x32xf32>
    %467 = arith.negf %466 : vector<1x32xf32>
    %468 = math.exp %467 : vector<1x32xf32>
    %cst_80 = arith.constant 1.000000e+00 : f32
    %469 = vector.broadcast %cst_80 : f32 to vector<1x32xf32>
    %470 = arith.addf %469, %468 : vector<1x32xf32>
    %471 = arith.divf %469, %470 : vector<1x32xf32>
    %472 = vector.extract_strided_slice %461 {offsets = [0, 32], sizes = [1, 32], strides = [1, 1]} : vector<1x96xf32> to vector<1x32xf32>
    %473 = vector.extract_strided_slice %463 {offsets = [0, 32], sizes = [1, 32], strides = [1, 1]} : vector<1x96xf32> to vector<1x32xf32>
    %474 = arith.addf %472, %473 : vector<1x32xf32>
    %475 = arith.negf %474 : vector<1x32xf32>
    %476 = math.exp %475 : vector<1x32xf32>
    %cst_81 = arith.constant 1.000000e+00 : f32
    %477 = vector.broadcast %cst_81 : f32 to vector<1x32xf32>
    %478 = arith.addf %477, %476 : vector<1x32xf32>
    %479 = arith.divf %477, %478 : vector<1x32xf32>
    %480 = vector.extract_strided_slice %461 {offsets = [0, 64], sizes = [1, 32], strides = [1, 1]} : vector<1x96xf32> to vector<1x32xf32>
    %481 = vector.extract_strided_slice %463 {offsets = [0, 64], sizes = [1, 32], strides = [1, 1]} : vector<1x96xf32> to vector<1x32xf32>
    %482 = arith.mulf %471, %481 : vector<1x32xf32>
    %483 = arith.addf %480, %482 : vector<1x32xf32>
    %484 = math.tanh %483 : vector<1x32xf32>
    %cst_82 = arith.constant 1.000000e+00 : f32
    %485 = vector.broadcast %cst_82 : f32 to vector<1x32xf32>
    %486 = arith.subf %485, %479 : vector<1x32xf32>
    %487 = arith.mulf %486, %484 : vector<1x32xf32>
    %488 = arith.mulf %479, %431 : vector<1x32xf32>
    %489 = arith.addf %487, %488 : vector<1x32xf32>
    %490 = vector.extract_strided_slice %52 {offsets = [0, 0], sizes = [1, 96], strides = [1, 1]} : vector<8x96xf32> to vector<1x96xf32>
    %cst_83 = arith.constant dense<0.000000e+00> : vector<1x96xf32>
    %491 = tpu.matmul %460, %11, %cst_83 {dimension_numbers = #tpu.dot_dimension_numbers<[1], [0], [0], [1], [0, 0, 1, 1], [], []>} : vector<1x32xf32>, vector<32x96xf32>, vector<1x96xf32> -> vector<1x96xf32>
    %492 = arith.addf %491, %13 : vector<1x96xf32>
    %493 = vector.extract_strided_slice %490 {offsets = [0, 0], sizes = [1, 32], strides = [1, 1]} : vector<1x96xf32> to vector<1x32xf32>
    %494 = vector.extract_strided_slice %492 {offsets = [0, 0], sizes = [1, 32], strides = [1, 1]} : vector<1x96xf32> to vector<1x32xf32>
    %495 = arith.addf %493, %494 : vector<1x32xf32>
    %496 = arith.negf %495 : vector<1x32xf32>
    %497 = math.exp %496 : vector<1x32xf32>
    %cst_84 = arith.constant 1.000000e+00 : f32
    %498 = vector.broadcast %cst_84 : f32 to vector<1x32xf32>
    %499 = arith.addf %498, %497 : vector<1x32xf32>
    %500 = arith.divf %498, %499 : vector<1x32xf32>
    %501 = vector.extract_strided_slice %490 {offsets = [0, 32], sizes = [1, 32], strides = [1, 1]} : vector<1x96xf32> to vector<1x32xf32>
    %502 = vector.extract_strided_slice %492 {offsets = [0, 32], sizes = [1, 32], strides = [1, 1]} : vector<1x96xf32> to vector<1x32xf32>
    %503 = arith.addf %501, %502 : vector<1x32xf32>
    %504 = arith.negf %503 : vector<1x32xf32>
    %505 = math.exp %504 : vector<1x32xf32>
    %cst_85 = arith.constant 1.000000e+00 : f32
    %506 = vector.broadcast %cst_85 : f32 to vector<1x32xf32>
    %507 = arith.addf %506, %505 : vector<1x32xf32>
    %508 = arith.divf %506, %507 : vector<1x32xf32>
    %509 = vector.extract_strided_slice %490 {offsets = [0, 64], sizes = [1, 32], strides = [1, 1]} : vector<1x96xf32> to vector<1x32xf32>
    %510 = vector.extract_strided_slice %492 {offsets = [0, 64], sizes = [1, 32], strides = [1, 1]} : vector<1x96xf32> to vector<1x32xf32>
    %511 = arith.mulf %500, %510 : vector<1x32xf32>
    %512 = arith.addf %509, %511 : vector<1x32xf32>
    %513 = math.tanh %512 : vector<1x32xf32>
    %cst_86 = arith.constant 1.000000e+00 : f32
    %514 = vector.broadcast %cst_86 : f32 to vector<1x32xf32>
    %515 = arith.subf %514, %508 : vector<1x32xf32>
    %516 = arith.mulf %515, %513 : vector<1x32xf32>
    %517 = arith.mulf %508, %460 : vector<1x32xf32>
    %518 = arith.addf %516, %517 : vector<1x32xf32>
    %519 = tpu.concatenate %83, %141, %199, %257, %315, %373, %431, %489 in 0 : vector<1x32xf32>, vector<1x32xf32>, vector<1x32xf32>, vector<1x32xf32>, vector<1x32xf32>, vector<1x32xf32>, vector<1x32xf32>, vector<1x32xf32> -> vector<8x32xf32>
    %520 = tpu.concatenate %518, %460, %402, %344, %286, %228, %170, %112 in 0 : vector<1x32xf32>, vector<1x32xf32>, vector<1x32xf32>, vector<1x32xf32>, vector<1x32xf32>, vector<1x32xf32>, vector<1x32xf32>, vector<1x32xf32> -> vector<8x32xf32>
    %521 = arith.addf %519, %520 : vector<8x32xf32>
    %522 = tpu.iota {dimensions = array<i32: 0>} : vector<32x32xi32>
    %523 = tpu.iota {dimensions = array<i32: 1>} : vector<32x32xi32>
    %524 = arith.cmpi eq, %522, %523 : vector<32x32xi32>
    %525 = arith.extui %524 : vector<32x32xi1> to vector<32x32xi32>
    %526 = arith.sitofp %525 : vector<32x32xi32> to vector<32x32xf32>
    %cst_87 = arith.constant dense<0.000000e+00> : vector<32x8xf32>
    %527 = tpu.matmul %526, %521, %cst_87 {dimension_numbers = #tpu.dot_dimension_numbers<[1], [1], [0], [0], [0, 0, 1, 0], [], []>} : vector<32x32xf32>, vector<8x32xf32>, vector<32x8xf32> -> vector<32x8xf32>
    %cst_88 = arith.constant dense<0.000000e+00> : vector<64x96xf32>
    %528 = tpu.matmul %0, %14, %cst_88 {dimension_numbers = #tpu.dot_dimension_numbers<[1], [0], [0], [1], [0, 0, 1, 1], [], []>} : vector<64x32xf32>, vector<32x96xf32>, vector<64x96xf32> -> vector<64x96xf32>
    %529 = vector.broadcast %16 : vector<1x96xf32> to vector<64x96xf32>
    %530 = arith.addf %528, %529 : vector<64x96xf32>
    %531 = tpu.iota {dimensions = array<i32: 1>} : vector<1x64xi32>
    %532 = tpu.iota {dimensions = array<i32: 1>} : vector<1x8xi32>
    %533 = vector.extract_strided_slice %530 {offsets = [1, 0], sizes = [1, 96], strides = [1, 1]} : vector<64x96xf32> to vector<1x96xf32>
    %c0_i32 = arith.constant 0 : i32
    %534 = vector.broadcast %c0_i32 : i32 to vector<1x8xi32>
    %cst_89 = arith.constant 0.000000e+00 : f32
    %535 = vector.broadcast %cst_89 : f32 to vector<1x8xf32>
    %cst_90 = arith.constant dense<0.000000e+00> : vector<1x96xf32>
    %536 = tpu.matmul %489, %15, %cst_90 {dimension_numbers = #tpu.dot_dimension_numbers<[1], [0], [0], [1], [0, 0, 1, 1], [], []>} : vector<1x32xf32>, vector<32x96xf32>, vector<1x96xf32> -> vector<1x96xf32>
    %537 = arith.addf %536, %17 : vector<1x96xf32>
    %538 = vector.extract_strided_slice %533 {offsets = [0, 0], sizes = [1, 32], strides = [1, 1]} : vector<1x96xf32> to vector<1x32xf32>
    %539 = vector.extract_strided_slice %537 {offsets = [0, 0], sizes = [1, 32], strides = [1, 1]} : vector<1x96xf32> to vector<1x32xf32>
    %540 = arith.addf %538, %539 : vector<1x32xf32>
    %541 = arith.negf %540 : vector<1x32xf32>
    %542 = math.exp %541 : vector<1x32xf32>
    %cst_91 = arith.constant 1.000000e+00 : f32
    %543 = vector.broadcast %cst_91 : f32 to vector<1x32xf32>
    %544 = arith.addf %543, %542 : vector<1x32xf32>
    %545 = arith.divf %543, %544 : vector<1x32xf32>
    %546 = vector.extract_strided_slice %533 {offsets = [0, 32], sizes = [1, 32], strides = [1, 1]} : vector<1x96xf32> to vector<1x32xf32>
    %547 = vector.extract_strided_slice %537 {offsets = [0, 32], sizes = [1, 32], strides = [1, 1]} : vector<1x96xf32> to vector<1x32xf32>
    %548 = arith.addf %546, %547 : vector<1x32xf32>
    %549 = arith.negf %548 : vector<1x32xf32>
    %550 = math.exp %549 : vector<1x32xf32>
    %cst_92 = arith.constant 1.000000e+00 : f32
    %551 = vector.broadcast %cst_92 : f32 to vector<1x32xf32>
    %552 = arith.addf %551, %550 : vector<1x32xf32>
    %553 = arith.divf %551, %552 : vector<1x32xf32>
    %554 = vector.extract_strided_slice %533 {offsets = [0, 64], sizes = [1, 32], strides = [1, 1]} : vector<1x96xf32> to vector<1x32xf32>
    %555 = vector.extract_strided_slice %537 {offsets = [0, 64], sizes = [1, 32], strides = [1, 1]} : vector<1x96xf32> to vector<1x32xf32>
    %556 = arith.mulf %545, %555 : vector<1x32xf32>
    %557 = arith.addf %554, %556 : vector<1x32xf32>
    %558 = math.tanh %557 : vector<1x32xf32>
    %cst_93 = arith.constant 1.000000e+00 : f32
    %559 = vector.broadcast %cst_93 : f32 to vector<1x32xf32>
    %560 = arith.subf %559, %553 : vector<1x32xf32>
    %561 = arith.mulf %560, %558 : vector<1x32xf32>
    %562 = arith.mulf %553, %489 : vector<1x32xf32>
    %563 = arith.addf %561, %562 : vector<1x32xf32>
    %cst_94 = arith.constant dense<0.000000e+00> : vector<1x8xf32>
    %564 = tpu.matmul %563, %527, %cst_94 {dimension_numbers = #tpu.dot_dimension_numbers<[1], [0], [0], [1], [0, 0, 1, 1], [], []>} : vector<1x32xf32>, vector<32x8xf32>, vector<1x8xf32> -> vector<1x8xf32>
    %cst_95 = arith.constant dense<0xFF800000> : vector<1xf32>
    %565 = vector.multi_reduction <maximumf>, %564, %cst_95 [1] : vector<1x8xf32> to vector<1xf32>
    %566 = vector.shape_cast %565 : vector<1xf32> to vector<1x1xf32>
    %567 = vector.broadcast %566 : vector<1x1xf32> to vector<1x8xf32>
    %568 = arith.subf %564, %567 : vector<1x8xf32>
    %569 = math.exp %568 : vector<1x8xf32>
    %cst_96 = arith.constant dense<0.000000e+00> : vector<1xf32>
    %570 = vector.multi_reduction <add>, %569, %cst_96 [1] : vector<1x8xf32> to vector<1xf32>
    %571 = vector.shape_cast %570 : vector<1xf32> to vector<1x1xf32>
    %572 = vector.broadcast %571 : vector<1x1xf32> to vector<1x8xf32>
    %573 = arith.divf %569, %572 : vector<1x8xf32>
    %cst_97 = arith.constant dense<0.000000e+00> : vector<1x32xf32>
    %574 = tpu.matmul %573, %521, %cst_97 {dimension_numbers = #tpu.dot_dimension_numbers<[1], [0], [0], [1], [0, 0, 1, 1], [], []>} : vector<1x8xf32>, vector<8x32xf32>, vector<1x32xf32> -> vector<1x32xf32>
    %575 = tpu.concatenate %563, %574 in 1 : vector<1x32xf32>, vector<1x32xf32> -> vector<1x64xf32>
    %cst_98 = arith.constant dense<0.000000e+00> : vector<1x32xf32>
    %576 = tpu.matmul %575, %18, %cst_98 {dimension_numbers = #tpu.dot_dimension_numbers<[1], [0], [0], [1], [0, 0, 1, 1], [], []>} : vector<1x64xf32>, vector<64x32xf32>, vector<1x32xf32> -> vector<1x32xf32>
    %577 = arith.addf %576, %19 : vector<1x32xf32>
    %578 = math.tanh %577 : vector<1x32xf32>
    %cst_99 = arith.constant dense<0.000000e+00> : vector<1x64xf32>
    %579 = tpu.matmul %578, %20, %cst_99 {dimension_numbers = #tpu.dot_dimension_numbers<[1], [0], [0], [1], [0, 0, 1, 1], [], []>} : vector<1x32xf32>, vector<32x64xf32>, vector<1x64xf32> -> vector<1x64xf32>
    %580 = arith.addf %579, %21 : vector<1x64xf32>
    %cst_100 = arith.constant dense<0xFF800000> : vector<1xf32>
    %581 = vector.multi_reduction <maximumf>, %580, %cst_100 [1] : vector<1x64xf32> to vector<1xf32>
    %582 = vector.shape_cast %581 : vector<1xf32> to vector<1x1xf32>
    %583 = vector.broadcast %582 : vector<1x1xf32> to vector<1x64xf32>
    %584 = arith.subf %580, %583 : vector<1x64xf32>
    %585 = math.exp %584 : vector<1x64xf32>
    %cst_101 = arith.constant dense<0.000000e+00> : vector<1xf32>
    %586 = vector.multi_reduction <add>, %585, %cst_101 [1] : vector<1x64xf32> to vector<1xf32>
    %587 = vector.shape_cast %586 : vector<1xf32> to vector<1x1xf32>
    %cst_102 = arith.constant 1.000000e+00 : f32
    %588 = vector.broadcast %cst_102 : f32 to vector<1x1xf32>
    %589 = arith.divf %588, %587 : vector<1x1xf32>
    %590 = vector.broadcast %582 : vector<1x1xf32> to vector<1x64xf32>
    %591 = arith.cmpf oge, %580, %590 : vector<1x64xf32>
    %c64_i32 = arith.constant 64 : i32
    %592 = vector.broadcast %c64_i32 : i32 to vector<1x64xi32>
    %593 = arith.select %591, %531, %592 : vector<1x64xi1>, vector<1x64xi32>
    %cst_103 = arith.constant dense<2147483647> : vector<1xi32>
    %594 = vector.multi_reduction <minsi>, %593, %cst_103 [1] : vector<1x64xi32> to vector<1xi32>
    %595 = vector.shape_cast %594 : vector<1xi32> to vector<1x1xi32>
    %596 = vector.broadcast %595 : vector<1x1xi32> to vector<1x64xi32>
    %597 = arith.cmpi eq, %531, %596 : vector<1x64xi32>
    %598 = arith.extui %597 : vector<1x64xi1> to vector<1x64xi32>
    %599 = arith.sitofp %598 : vector<1x64xi32> to vector<1x64xf32>
    %cst_104 = arith.constant dense<0.000000e+00> : vector<1x96xf32>
    %600 = tpu.matmul %599, %530, %cst_104 {dimension_numbers = #tpu.dot_dimension_numbers<[1], [0], [0], [1], [0, 0, 1, 1], [], []>} : vector<1x64xf32>, vector<64x96xf32>, vector<1x96xf32> -> vector<1x96xf32>
    %c0_i32_105 = arith.constant 0 : i32
    %601 = vector.broadcast %c0_i32_105 : i32 to vector<1x8xi32>
    %602 = arith.cmpi eq, %532, %601 : vector<1x8xi32>
    %603 = vector.shape_cast %595 : vector<1x1xi32> to vector<1x1xi32>
    %604 = vector.broadcast %603 : vector<1x1xi32> to vector<1x8xi32>
    %605 = arith.select %602, %604, %534 : vector<1x8xi1>, vector<1x8xi32>
    %c0_i32_106 = arith.constant 0 : i32
    %606 = vector.broadcast %c0_i32_106 : i32 to vector<1x8xi32>
    %607 = arith.cmpi eq, %532, %606 : vector<1x8xi32>
    %608 = vector.shape_cast %589 : vector<1x1xf32> to vector<1x1xf32>
    %609 = vector.broadcast %608 : vector<1x1xf32> to vector<1x8xf32>
    %610 = arith.select %607, %609, %535 : vector<1x8xi1>, vector<1x8xf32>
    %cst_107 = arith.constant dense<0.000000e+00> : vector<1x96xf32>
    %611 = tpu.matmul %563, %15, %cst_107 {dimension_numbers = #tpu.dot_dimension_numbers<[1], [0], [0], [1], [0, 0, 1, 1], [], []>} : vector<1x32xf32>, vector<32x96xf32>, vector<1x96xf32> -> vector<1x96xf32>
    %612 = arith.addf %611, %17 : vector<1x96xf32>
    %613 = vector.extract_strided_slice %600 {offsets = [0, 0], sizes = [1, 32], strides = [1, 1]} : vector<1x96xf32> to vector<1x32xf32>
    %614 = vector.extract_strided_slice %612 {offsets = [0, 0], sizes = [1, 32], strides = [1, 1]} : vector<1x96xf32> to vector<1x32xf32>
    %615 = arith.addf %613, %614 : vector<1x32xf32>
    %616 = arith.negf %615 : vector<1x32xf32>
    %617 = math.exp %616 : vector<1x32xf32>
    %cst_108 = arith.constant 1.000000e+00 : f32
    %618 = vector.broadcast %cst_108 : f32 to vector<1x32xf32>
    %619 = arith.addf %618, %617 : vector<1x32xf32>
    %620 = arith.divf %618, %619 : vector<1x32xf32>
    %621 = vector.extract_strided_slice %600 {offsets = [0, 32], sizes = [1, 32], strides = [1, 1]} : vector<1x96xf32> to vector<1x32xf32>
    %622 = vector.extract_strided_slice %612 {offsets = [0, 32], sizes = [1, 32], strides = [1, 1]} : vector<1x96xf32> to vector<1x32xf32>
    %623 = arith.addf %621, %622 : vector<1x32xf32>
    %624 = arith.negf %623 : vector<1x32xf32>
    %625 = math.exp %624 : vector<1x32xf32>
    %cst_109 = arith.constant 1.000000e+00 : f32
    %626 = vector.broadcast %cst_109 : f32 to vector<1x32xf32>
    %627 = arith.addf %626, %625 : vector<1x32xf32>
    %628 = arith.divf %626, %627 : vector<1x32xf32>
    %629 = vector.extract_strided_slice %600 {offsets = [0, 64], sizes = [1, 32], strides = [1, 1]} : vector<1x96xf32> to vector<1x32xf32>
    %630 = vector.extract_strided_slice %612 {offsets = [0, 64], sizes = [1, 32], strides = [1, 1]} : vector<1x96xf32> to vector<1x32xf32>
    %631 = arith.mulf %620, %630 : vector<1x32xf32>
    %632 = arith.addf %629, %631 : vector<1x32xf32>
    %633 = math.tanh %632 : vector<1x32xf32>
    %cst_110 = arith.constant 1.000000e+00 : f32
    %634 = vector.broadcast %cst_110 : f32 to vector<1x32xf32>
    %635 = arith.subf %634, %628 : vector<1x32xf32>
    %636 = arith.mulf %635, %633 : vector<1x32xf32>
    %637 = arith.mulf %628, %563 : vector<1x32xf32>
    %638 = arith.addf %636, %637 : vector<1x32xf32>
    %cst_111 = arith.constant dense<0.000000e+00> : vector<1x8xf32>
    %639 = tpu.matmul %638, %527, %cst_111 {dimension_numbers = #tpu.dot_dimension_numbers<[1], [0], [0], [1], [0, 0, 1, 1], [], []>} : vector<1x32xf32>, vector<32x8xf32>, vector<1x8xf32> -> vector<1x8xf32>
    %cst_112 = arith.constant dense<0xFF800000> : vector<1xf32>
    %640 = vector.multi_reduction <maximumf>, %639, %cst_112 [1] : vector<1x8xf32> to vector<1xf32>
    %641 = vector.shape_cast %640 : vector<1xf32> to vector<1x1xf32>
    %642 = vector.broadcast %641 : vector<1x1xf32> to vector<1x8xf32>
    %643 = arith.subf %639, %642 : vector<1x8xf32>
    %644 = math.exp %643 : vector<1x8xf32>
    %cst_113 = arith.constant dense<0.000000e+00> : vector<1xf32>
    %645 = vector.multi_reduction <add>, %644, %cst_113 [1] : vector<1x8xf32> to vector<1xf32>
    %646 = vector.shape_cast %645 : vector<1xf32> to vector<1x1xf32>
    %647 = vector.broadcast %646 : vector<1x1xf32> to vector<1x8xf32>
    %648 = arith.divf %644, %647 : vector<1x8xf32>
    %cst_114 = arith.constant dense<0.000000e+00> : vector<1x32xf32>
    %649 = tpu.matmul %648, %521, %cst_114 {dimension_numbers = #tpu.dot_dimension_numbers<[1], [0], [0], [1], [0, 0, 1, 1], [], []>} : vector<1x8xf32>, vector<8x32xf32>, vector<1x32xf32> -> vector<1x32xf32>
    %650 = tpu.concatenate %638, %649 in 1 : vector<1x32xf32>, vector<1x32xf32> -> vector<1x64xf32>
    %cst_115 = arith.constant dense<0.000000e+00> : vector<1x32xf32>
    %651 = tpu.matmul %650, %18, %cst_115 {dimension_numbers = #tpu.dot_dimension_numbers<[1], [0], [0], [1], [0, 0, 1, 1], [], []>} : vector<1x64xf32>, vector<64x32xf32>, vector<1x32xf32> -> vector<1x32xf32>
    %652 = arith.addf %651, %19 : vector<1x32xf32>
    %653 = math.tanh %652 : vector<1x32xf32>
    %cst_116 = arith.constant dense<0.000000e+00> : vector<1x64xf32>
    %654 = tpu.matmul %653, %20, %cst_116 {dimension_numbers = #tpu.dot_dimension_numbers<[1], [0], [0], [1], [0, 0, 1, 1], [], []>} : vector<1x32xf32>, vector<32x64xf32>, vector<1x64xf32> -> vector<1x64xf32>
    %655 = arith.addf %654, %21 : vector<1x64xf32>
    %cst_117 = arith.constant dense<0xFF800000> : vector<1xf32>
    %656 = vector.multi_reduction <maximumf>, %655, %cst_117 [1] : vector<1x64xf32> to vector<1xf32>
    %657 = vector.shape_cast %656 : vector<1xf32> to vector<1x1xf32>
    %658 = vector.broadcast %657 : vector<1x1xf32> to vector<1x64xf32>
    %659 = arith.subf %655, %658 : vector<1x64xf32>
    %660 = math.exp %659 : vector<1x64xf32>
    %cst_118 = arith.constant dense<0.000000e+00> : vector<1xf32>
    %661 = vector.multi_reduction <add>, %660, %cst_118 [1] : vector<1x64xf32> to vector<1xf32>
    %662 = vector.shape_cast %661 : vector<1xf32> to vector<1x1xf32>
    %cst_119 = arith.constant 1.000000e+00 : f32
    %663 = vector.broadcast %cst_119 : f32 to vector<1x1xf32>
    %664 = arith.divf %663, %662 : vector<1x1xf32>
    %665 = vector.broadcast %657 : vector<1x1xf32> to vector<1x64xf32>
    %666 = arith.cmpf oge, %655, %665 : vector<1x64xf32>
    %c64_i32_120 = arith.constant 64 : i32
    %667 = vector.broadcast %c64_i32_120 : i32 to vector<1x64xi32>
    %668 = arith.select %666, %531, %667 : vector<1x64xi1>, vector<1x64xi32>
    %cst_121 = arith.constant dense<2147483647> : vector<1xi32>
    %669 = vector.multi_reduction <minsi>, %668, %cst_121 [1] : vector<1x64xi32> to vector<1xi32>
    %670 = vector.shape_cast %669 : vector<1xi32> to vector<1x1xi32>
    %671 = vector.broadcast %670 : vector<1x1xi32> to vector<1x64xi32>
    %672 = arith.cmpi eq, %531, %671 : vector<1x64xi32>
    %673 = arith.extui %672 : vector<1x64xi1> to vector<1x64xi32>
    %674 = arith.sitofp %673 : vector<1x64xi32> to vector<1x64xf32>
    %cst_122 = arith.constant dense<0.000000e+00> : vector<1x96xf32>
    %675 = tpu.matmul %674, %530, %cst_122 {dimension_numbers = #tpu.dot_dimension_numbers<[1], [0], [0], [1], [0, 0, 1, 1], [], []>} : vector<1x64xf32>, vector<64x96xf32>, vector<1x96xf32> -> vector<1x96xf32>
    %c1_i32 = arith.constant 1 : i32
    %676 = vector.broadcast %c1_i32 : i32 to vector<1x8xi32>
    %677 = arith.cmpi eq, %532, %676 : vector<1x8xi32>
    %678 = vector.shape_cast %670 : vector<1x1xi32> to vector<1x1xi32>
    %679 = vector.broadcast %678 : vector<1x1xi32> to vector<1x8xi32>
    %680 = arith.select %677, %679, %605 : vector<1x8xi1>, vector<1x8xi32>
    %c1_i32_123 = arith.constant 1 : i32
    %681 = vector.broadcast %c1_i32_123 : i32 to vector<1x8xi32>
    %682 = arith.cmpi eq, %532, %681 : vector<1x8xi32>
    %683 = vector.shape_cast %664 : vector<1x1xf32> to vector<1x1xf32>
    %684 = vector.broadcast %683 : vector<1x1xf32> to vector<1x8xf32>
    %685 = arith.select %682, %684, %610 : vector<1x8xi1>, vector<1x8xf32>
    %cst_124 = arith.constant dense<0.000000e+00> : vector<1x96xf32>
    %686 = tpu.matmul %638, %15, %cst_124 {dimension_numbers = #tpu.dot_dimension_numbers<[1], [0], [0], [1], [0, 0, 1, 1], [], []>} : vector<1x32xf32>, vector<32x96xf32>, vector<1x96xf32> -> vector<1x96xf32>
    %687 = arith.addf %686, %17 : vector<1x96xf32>
    %688 = vector.extract_strided_slice %675 {offsets = [0, 0], sizes = [1, 32], strides = [1, 1]} : vector<1x96xf32> to vector<1x32xf32>
    %689 = vector.extract_strided_slice %687 {offsets = [0, 0], sizes = [1, 32], strides = [1, 1]} : vector<1x96xf32> to vector<1x32xf32>
    %690 = arith.addf %688, %689 : vector<1x32xf32>
    %691 = arith.negf %690 : vector<1x32xf32>
    %692 = math.exp %691 : vector<1x32xf32>
    %cst_125 = arith.constant 1.000000e+00 : f32
    %693 = vector.broadcast %cst_125 : f32 to vector<1x32xf32>
    %694 = arith.addf %693, %692 : vector<1x32xf32>
    %695 = arith.divf %693, %694 : vector<1x32xf32>
    %696 = vector.extract_strided_slice %675 {offsets = [0, 32], sizes = [1, 32], strides = [1, 1]} : vector<1x96xf32> to vector<1x32xf32>
    %697 = vector.extract_strided_slice %687 {offsets = [0, 32], sizes = [1, 32], strides = [1, 1]} : vector<1x96xf32> to vector<1x32xf32>
    %698 = arith.addf %696, %697 : vector<1x32xf32>
    %699 = arith.negf %698 : vector<1x32xf32>
    %700 = math.exp %699 : vector<1x32xf32>
    %cst_126 = arith.constant 1.000000e+00 : f32
    %701 = vector.broadcast %cst_126 : f32 to vector<1x32xf32>
    %702 = arith.addf %701, %700 : vector<1x32xf32>
    %703 = arith.divf %701, %702 : vector<1x32xf32>
    %704 = vector.extract_strided_slice %675 {offsets = [0, 64], sizes = [1, 32], strides = [1, 1]} : vector<1x96xf32> to vector<1x32xf32>
    %705 = vector.extract_strided_slice %687 {offsets = [0, 64], sizes = [1, 32], strides = [1, 1]} : vector<1x96xf32> to vector<1x32xf32>
    %706 = arith.mulf %695, %705 : vector<1x32xf32>
    %707 = arith.addf %704, %706 : vector<1x32xf32>
    %708 = math.tanh %707 : vector<1x32xf32>
    %cst_127 = arith.constant 1.000000e+00 : f32
    %709 = vector.broadcast %cst_127 : f32 to vector<1x32xf32>
    %710 = arith.subf %709, %703 : vector<1x32xf32>
    %711 = arith.mulf %710, %708 : vector<1x32xf32>
    %712 = arith.mulf %703, %638 : vector<1x32xf32>
    %713 = arith.addf %711, %712 : vector<1x32xf32>
    %cst_128 = arith.constant dense<0.000000e+00> : vector<1x8xf32>
    %714 = tpu.matmul %713, %527, %cst_128 {dimension_numbers = #tpu.dot_dimension_numbers<[1], [0], [0], [1], [0, 0, 1, 1], [], []>} : vector<1x32xf32>, vector<32x8xf32>, vector<1x8xf32> -> vector<1x8xf32>
    %cst_129 = arith.constant dense<0xFF800000> : vector<1xf32>
    %715 = vector.multi_reduction <maximumf>, %714, %cst_129 [1] : vector<1x8xf32> to vector<1xf32>
    %716 = vector.shape_cast %715 : vector<1xf32> to vector<1x1xf32>
    %717 = vector.broadcast %716 : vector<1x1xf32> to vector<1x8xf32>
    %718 = arith.subf %714, %717 : vector<1x8xf32>
    %719 = math.exp %718 : vector<1x8xf32>
    %cst_130 = arith.constant dense<0.000000e+00> : vector<1xf32>
    %720 = vector.multi_reduction <add>, %719, %cst_130 [1] : vector<1x8xf32> to vector<1xf32>
    %721 = vector.shape_cast %720 : vector<1xf32> to vector<1x1xf32>
    %722 = vector.broadcast %721 : vector<1x1xf32> to vector<1x8xf32>
    %723 = arith.divf %719, %722 : vector<1x8xf32>
    %cst_131 = arith.constant dense<0.000000e+00> : vector<1x32xf32>
    %724 = tpu.matmul %723, %521, %cst_131 {dimension_numbers = #tpu.dot_dimension_numbers<[1], [0], [0], [1], [0, 0, 1, 1], [], []>} : vector<1x8xf32>, vector<8x32xf32>, vector<1x32xf32> -> vector<1x32xf32>
    %725 = tpu.concatenate %713, %724 in 1 : vector<1x32xf32>, vector<1x32xf32> -> vector<1x64xf32>
    %cst_132 = arith.constant dense<0.000000e+00> : vector<1x32xf32>
    %726 = tpu.matmul %725, %18, %cst_132 {dimension_numbers = #tpu.dot_dimension_numbers<[1], [0], [0], [1], [0, 0, 1, 1], [], []>} : vector<1x64xf32>, vector<64x32xf32>, vector<1x32xf32> -> vector<1x32xf32>
    %727 = arith.addf %726, %19 : vector<1x32xf32>
    %728 = math.tanh %727 : vector<1x32xf32>
    %cst_133 = arith.constant dense<0.000000e+00> : vector<1x64xf32>
    %729 = tpu.matmul %728, %20, %cst_133 {dimension_numbers = #tpu.dot_dimension_numbers<[1], [0], [0], [1], [0, 0, 1, 1], [], []>} : vector<1x32xf32>, vector<32x64xf32>, vector<1x64xf32> -> vector<1x64xf32>
    %730 = arith.addf %729, %21 : vector<1x64xf32>
    %cst_134 = arith.constant dense<0xFF800000> : vector<1xf32>
    %731 = vector.multi_reduction <maximumf>, %730, %cst_134 [1] : vector<1x64xf32> to vector<1xf32>
    %732 = vector.shape_cast %731 : vector<1xf32> to vector<1x1xf32>
    %733 = vector.broadcast %732 : vector<1x1xf32> to vector<1x64xf32>
    %734 = arith.subf %730, %733 : vector<1x64xf32>
    %735 = math.exp %734 : vector<1x64xf32>
    %cst_135 = arith.constant dense<0.000000e+00> : vector<1xf32>
    %736 = vector.multi_reduction <add>, %735, %cst_135 [1] : vector<1x64xf32> to vector<1xf32>
    %737 = vector.shape_cast %736 : vector<1xf32> to vector<1x1xf32>
    %cst_136 = arith.constant 1.000000e+00 : f32
    %738 = vector.broadcast %cst_136 : f32 to vector<1x1xf32>
    %739 = arith.divf %738, %737 : vector<1x1xf32>
    %740 = vector.broadcast %732 : vector<1x1xf32> to vector<1x64xf32>
    %741 = arith.cmpf oge, %730, %740 : vector<1x64xf32>
    %c64_i32_137 = arith.constant 64 : i32
    %742 = vector.broadcast %c64_i32_137 : i32 to vector<1x64xi32>
    %743 = arith.select %741, %531, %742 : vector<1x64xi1>, vector<1x64xi32>
    %cst_138 = arith.constant dense<2147483647> : vector<1xi32>
    %744 = vector.multi_reduction <minsi>, %743, %cst_138 [1] : vector<1x64xi32> to vector<1xi32>
    %745 = vector.shape_cast %744 : vector<1xi32> to vector<1x1xi32>
    %746 = vector.broadcast %745 : vector<1x1xi32> to vector<1x64xi32>
    %747 = arith.cmpi eq, %531, %746 : vector<1x64xi32>
    %748 = arith.extui %747 : vector<1x64xi1> to vector<1x64xi32>
    %749 = arith.sitofp %748 : vector<1x64xi32> to vector<1x64xf32>
    %cst_139 = arith.constant dense<0.000000e+00> : vector<1x96xf32>
    %750 = tpu.matmul %749, %530, %cst_139 {dimension_numbers = #tpu.dot_dimension_numbers<[1], [0], [0], [1], [0, 0, 1, 1], [], []>} : vector<1x64xf32>, vector<64x96xf32>, vector<1x96xf32> -> vector<1x96xf32>
    %c2_i32 = arith.constant 2 : i32
    %751 = vector.broadcast %c2_i32 : i32 to vector<1x8xi32>
    %752 = arith.cmpi eq, %532, %751 : vector<1x8xi32>
    %753 = vector.shape_cast %745 : vector<1x1xi32> to vector<1x1xi32>
    %754 = vector.broadcast %753 : vector<1x1xi32> to vector<1x8xi32>
    %755 = arith.select %752, %754, %680 : vector<1x8xi1>, vector<1x8xi32>
    %c2_i32_140 = arith.constant 2 : i32
    %756 = vector.broadcast %c2_i32_140 : i32 to vector<1x8xi32>
    %757 = arith.cmpi eq, %532, %756 : vector<1x8xi32>
    %758 = vector.shape_cast %739 : vector<1x1xf32> to vector<1x1xf32>
    %759 = vector.broadcast %758 : vector<1x1xf32> to vector<1x8xf32>
    %760 = arith.select %757, %759, %685 : vector<1x8xi1>, vector<1x8xf32>
    %cst_141 = arith.constant dense<0.000000e+00> : vector<1x96xf32>
    %761 = tpu.matmul %713, %15, %cst_141 {dimension_numbers = #tpu.dot_dimension_numbers<[1], [0], [0], [1], [0, 0, 1, 1], [], []>} : vector<1x32xf32>, vector<32x96xf32>, vector<1x96xf32> -> vector<1x96xf32>
    %762 = arith.addf %761, %17 : vector<1x96xf32>
    %763 = vector.extract_strided_slice %750 {offsets = [0, 0], sizes = [1, 32], strides = [1, 1]} : vector<1x96xf32> to vector<1x32xf32>
    %764 = vector.extract_strided_slice %762 {offsets = [0, 0], sizes = [1, 32], strides = [1, 1]} : vector<1x96xf32> to vector<1x32xf32>
    %765 = arith.addf %763, %764 : vector<1x32xf32>
    %766 = arith.negf %765 : vector<1x32xf32>
    %767 = math.exp %766 : vector<1x32xf32>
    %cst_142 = arith.constant 1.000000e+00 : f32
    %768 = vector.broadcast %cst_142 : f32 to vector<1x32xf32>
    %769 = arith.addf %768, %767 : vector<1x32xf32>
    %770 = arith.divf %768, %769 : vector<1x32xf32>
    %771 = vector.extract_strided_slice %750 {offsets = [0, 32], sizes = [1, 32], strides = [1, 1]} : vector<1x96xf32> to vector<1x32xf32>
    %772 = vector.extract_strided_slice %762 {offsets = [0, 32], sizes = [1, 32], strides = [1, 1]} : vector<1x96xf32> to vector<1x32xf32>
    %773 = arith.addf %771, %772 : vector<1x32xf32>
    %774 = arith.negf %773 : vector<1x32xf32>
    %775 = math.exp %774 : vector<1x32xf32>
    %cst_143 = arith.constant 1.000000e+00 : f32
    %776 = vector.broadcast %cst_143 : f32 to vector<1x32xf32>
    %777 = arith.addf %776, %775 : vector<1x32xf32>
    %778 = arith.divf %776, %777 : vector<1x32xf32>
    %779 = vector.extract_strided_slice %750 {offsets = [0, 64], sizes = [1, 32], strides = [1, 1]} : vector<1x96xf32> to vector<1x32xf32>
    %780 = vector.extract_strided_slice %762 {offsets = [0, 64], sizes = [1, 32], strides = [1, 1]} : vector<1x96xf32> to vector<1x32xf32>
    %781 = arith.mulf %770, %780 : vector<1x32xf32>
    %782 = arith.addf %779, %781 : vector<1x32xf32>
    %783 = math.tanh %782 : vector<1x32xf32>
    %cst_144 = arith.constant 1.000000e+00 : f32
    %784 = vector.broadcast %cst_144 : f32 to vector<1x32xf32>
    %785 = arith.subf %784, %778 : vector<1x32xf32>
    %786 = arith.mulf %785, %783 : vector<1x32xf32>
    %787 = arith.mulf %778, %713 : vector<1x32xf32>
    %788 = arith.addf %786, %787 : vector<1x32xf32>
    %cst_145 = arith.constant dense<0.000000e+00> : vector<1x8xf32>
    %789 = tpu.matmul %788, %527, %cst_145 {dimension_numbers = #tpu.dot_dimension_numbers<[1], [0], [0], [1], [0, 0, 1, 1], [], []>} : vector<1x32xf32>, vector<32x8xf32>, vector<1x8xf32> -> vector<1x8xf32>
    %cst_146 = arith.constant dense<0xFF800000> : vector<1xf32>
    %790 = vector.multi_reduction <maximumf>, %789, %cst_146 [1] : vector<1x8xf32> to vector<1xf32>
    %791 = vector.shape_cast %790 : vector<1xf32> to vector<1x1xf32>
    %792 = vector.broadcast %791 : vector<1x1xf32> to vector<1x8xf32>
    %793 = arith.subf %789, %792 : vector<1x8xf32>
    %794 = math.exp %793 : vector<1x8xf32>
    %cst_147 = arith.constant dense<0.000000e+00> : vector<1xf32>
    %795 = vector.multi_reduction <add>, %794, %cst_147 [1] : vector<1x8xf32> to vector<1xf32>
    %796 = vector.shape_cast %795 : vector<1xf32> to vector<1x1xf32>
    %797 = vector.broadcast %796 : vector<1x1xf32> to vector<1x8xf32>
    %798 = arith.divf %794, %797 : vector<1x8xf32>
    %cst_148 = arith.constant dense<0.000000e+00> : vector<1x32xf32>
    %799 = tpu.matmul %798, %521, %cst_148 {dimension_numbers = #tpu.dot_dimension_numbers<[1], [0], [0], [1], [0, 0, 1, 1], [], []>} : vector<1x8xf32>, vector<8x32xf32>, vector<1x32xf32> -> vector<1x32xf32>
    %800 = tpu.concatenate %788, %799 in 1 : vector<1x32xf32>, vector<1x32xf32> -> vector<1x64xf32>
    %cst_149 = arith.constant dense<0.000000e+00> : vector<1x32xf32>
    %801 = tpu.matmul %800, %18, %cst_149 {dimension_numbers = #tpu.dot_dimension_numbers<[1], [0], [0], [1], [0, 0, 1, 1], [], []>} : vector<1x64xf32>, vector<64x32xf32>, vector<1x32xf32> -> vector<1x32xf32>
    %802 = arith.addf %801, %19 : vector<1x32xf32>
    %803 = math.tanh %802 : vector<1x32xf32>
    %cst_150 = arith.constant dense<0.000000e+00> : vector<1x64xf32>
    %804 = tpu.matmul %803, %20, %cst_150 {dimension_numbers = #tpu.dot_dimension_numbers<[1], [0], [0], [1], [0, 0, 1, 1], [], []>} : vector<1x32xf32>, vector<32x64xf32>, vector<1x64xf32> -> vector<1x64xf32>
    %805 = arith.addf %804, %21 : vector<1x64xf32>
    %cst_151 = arith.constant dense<0xFF800000> : vector<1xf32>
    %806 = vector.multi_reduction <maximumf>, %805, %cst_151 [1] : vector<1x64xf32> to vector<1xf32>
    %807 = vector.shape_cast %806 : vector<1xf32> to vector<1x1xf32>
    %808 = vector.broadcast %807 : vector<1x1xf32> to vector<1x64xf32>
    %809 = arith.subf %805, %808 : vector<1x64xf32>
    %810 = math.exp %809 : vector<1x64xf32>
    %cst_152 = arith.constant dense<0.000000e+00> : vector<1xf32>
    %811 = vector.multi_reduction <add>, %810, %cst_152 [1] : vector<1x64xf32> to vector<1xf32>
    %812 = vector.shape_cast %811 : vector<1xf32> to vector<1x1xf32>
    %cst_153 = arith.constant 1.000000e+00 : f32
    %813 = vector.broadcast %cst_153 : f32 to vector<1x1xf32>
    %814 = arith.divf %813, %812 : vector<1x1xf32>
    %815 = vector.broadcast %807 : vector<1x1xf32> to vector<1x64xf32>
    %816 = arith.cmpf oge, %805, %815 : vector<1x64xf32>
    %c64_i32_154 = arith.constant 64 : i32
    %817 = vector.broadcast %c64_i32_154 : i32 to vector<1x64xi32>
    %818 = arith.select %816, %531, %817 : vector<1x64xi1>, vector<1x64xi32>
    %cst_155 = arith.constant dense<2147483647> : vector<1xi32>
    %819 = vector.multi_reduction <minsi>, %818, %cst_155 [1] : vector<1x64xi32> to vector<1xi32>
    %820 = vector.shape_cast %819 : vector<1xi32> to vector<1x1xi32>
    %821 = vector.broadcast %820 : vector<1x1xi32> to vector<1x64xi32>
    %822 = arith.cmpi eq, %531, %821 : vector<1x64xi32>
    %823 = arith.extui %822 : vector<1x64xi1> to vector<1x64xi32>
    %824 = arith.sitofp %823 : vector<1x64xi32> to vector<1x64xf32>
    %cst_156 = arith.constant dense<0.000000e+00> : vector<1x96xf32>
    %825 = tpu.matmul %824, %530, %cst_156 {dimension_numbers = #tpu.dot_dimension_numbers<[1], [0], [0], [1], [0, 0, 1, 1], [], []>} : vector<1x64xf32>, vector<64x96xf32>, vector<1x96xf32> -> vector<1x96xf32>
    %c3_i32 = arith.constant 3 : i32
    %826 = vector.broadcast %c3_i32 : i32 to vector<1x8xi32>
    %827 = arith.cmpi eq, %532, %826 : vector<1x8xi32>
    %828 = vector.shape_cast %820 : vector<1x1xi32> to vector<1x1xi32>
    %829 = vector.broadcast %828 : vector<1x1xi32> to vector<1x8xi32>
    %830 = arith.select %827, %829, %755 : vector<1x8xi1>, vector<1x8xi32>
    %c3_i32_157 = arith.constant 3 : i32
    %831 = vector.broadcast %c3_i32_157 : i32 to vector<1x8xi32>
    %832 = arith.cmpi eq, %532, %831 : vector<1x8xi32>
    %833 = vector.shape_cast %814 : vector<1x1xf32> to vector<1x1xf32>
    %834 = vector.broadcast %833 : vector<1x1xf32> to vector<1x8xf32>
    %835 = arith.select %832, %834, %760 : vector<1x8xi1>, vector<1x8xf32>
    %cst_158 = arith.constant dense<0.000000e+00> : vector<1x96xf32>
    %836 = tpu.matmul %788, %15, %cst_158 {dimension_numbers = #tpu.dot_dimension_numbers<[1], [0], [0], [1], [0, 0, 1, 1], [], []>} : vector<1x32xf32>, vector<32x96xf32>, vector<1x96xf32> -> vector<1x96xf32>
    %837 = arith.addf %836, %17 : vector<1x96xf32>
    %838 = vector.extract_strided_slice %825 {offsets = [0, 0], sizes = [1, 32], strides = [1, 1]} : vector<1x96xf32> to vector<1x32xf32>
    %839 = vector.extract_strided_slice %837 {offsets = [0, 0], sizes = [1, 32], strides = [1, 1]} : vector<1x96xf32> to vector<1x32xf32>
    %840 = arith.addf %838, %839 : vector<1x32xf32>
    %841 = arith.negf %840 : vector<1x32xf32>
    %842 = math.exp %841 : vector<1x32xf32>
    %cst_159 = arith.constant 1.000000e+00 : f32
    %843 = vector.broadcast %cst_159 : f32 to vector<1x32xf32>
    %844 = arith.addf %843, %842 : vector<1x32xf32>
    %845 = arith.divf %843, %844 : vector<1x32xf32>
    %846 = vector.extract_strided_slice %825 {offsets = [0, 32], sizes = [1, 32], strides = [1, 1]} : vector<1x96xf32> to vector<1x32xf32>
    %847 = vector.extract_strided_slice %837 {offsets = [0, 32], sizes = [1, 32], strides = [1, 1]} : vector<1x96xf32> to vector<1x32xf32>
    %848 = arith.addf %846, %847 : vector<1x32xf32>
    %849 = arith.negf %848 : vector<1x32xf32>
    %850 = math.exp %849 : vector<1x32xf32>
    %cst_160 = arith.constant 1.000000e+00 : f32
    %851 = vector.broadcast %cst_160 : f32 to vector<1x32xf32>
    %852 = arith.addf %851, %850 : vector<1x32xf32>
    %853 = arith.divf %851, %852 : vector<1x32xf32>
    %854 = vector.extract_strided_slice %825 {offsets = [0, 64], sizes = [1, 32], strides = [1, 1]} : vector<1x96xf32> to vector<1x32xf32>
    %855 = vector.extract_strided_slice %837 {offsets = [0, 64], sizes = [1, 32], strides = [1, 1]} : vector<1x96xf32> to vector<1x32xf32>
    %856 = arith.mulf %845, %855 : vector<1x32xf32>
    %857 = arith.addf %854, %856 : vector<1x32xf32>
    %858 = math.tanh %857 : vector<1x32xf32>
    %cst_161 = arith.constant 1.000000e+00 : f32
    %859 = vector.broadcast %cst_161 : f32 to vector<1x32xf32>
    %860 = arith.subf %859, %853 : vector<1x32xf32>
    %861 = arith.mulf %860, %858 : vector<1x32xf32>
    %862 = arith.mulf %853, %788 : vector<1x32xf32>
    %863 = arith.addf %861, %862 : vector<1x32xf32>
    %cst_162 = arith.constant dense<0.000000e+00> : vector<1x8xf32>
    %864 = tpu.matmul %863, %527, %cst_162 {dimension_numbers = #tpu.dot_dimension_numbers<[1], [0], [0], [1], [0, 0, 1, 1], [], []>} : vector<1x32xf32>, vector<32x8xf32>, vector<1x8xf32> -> vector<1x8xf32>
    %cst_163 = arith.constant dense<0xFF800000> : vector<1xf32>
    %865 = vector.multi_reduction <maximumf>, %864, %cst_163 [1] : vector<1x8xf32> to vector<1xf32>
    %866 = vector.shape_cast %865 : vector<1xf32> to vector<1x1xf32>
    %867 = vector.broadcast %866 : vector<1x1xf32> to vector<1x8xf32>
    %868 = arith.subf %864, %867 : vector<1x8xf32>
    %869 = math.exp %868 : vector<1x8xf32>
    %cst_164 = arith.constant dense<0.000000e+00> : vector<1xf32>
    %870 = vector.multi_reduction <add>, %869, %cst_164 [1] : vector<1x8xf32> to vector<1xf32>
    %871 = vector.shape_cast %870 : vector<1xf32> to vector<1x1xf32>
    %872 = vector.broadcast %871 : vector<1x1xf32> to vector<1x8xf32>
    %873 = arith.divf %869, %872 : vector<1x8xf32>
    %cst_165 = arith.constant dense<0.000000e+00> : vector<1x32xf32>
    %874 = tpu.matmul %873, %521, %cst_165 {dimension_numbers = #tpu.dot_dimension_numbers<[1], [0], [0], [1], [0, 0, 1, 1], [], []>} : vector<1x8xf32>, vector<8x32xf32>, vector<1x32xf32> -> vector<1x32xf32>
    %875 = tpu.concatenate %863, %874 in 1 : vector<1x32xf32>, vector<1x32xf32> -> vector<1x64xf32>
    %cst_166 = arith.constant dense<0.000000e+00> : vector<1x32xf32>
    %876 = tpu.matmul %875, %18, %cst_166 {dimension_numbers = #tpu.dot_dimension_numbers<[1], [0], [0], [1], [0, 0, 1, 1], [], []>} : vector<1x64xf32>, vector<64x32xf32>, vector<1x32xf32> -> vector<1x32xf32>
    %877 = arith.addf %876, %19 : vector<1x32xf32>
    %878 = math.tanh %877 : vector<1x32xf32>
    %cst_167 = arith.constant dense<0.000000e+00> : vector<1x64xf32>
    %879 = tpu.matmul %878, %20, %cst_167 {dimension_numbers = #tpu.dot_dimension_numbers<[1], [0], [0], [1], [0, 0, 1, 1], [], []>} : vector<1x32xf32>, vector<32x64xf32>, vector<1x64xf32> -> vector<1x64xf32>
    %880 = arith.addf %879, %21 : vector<1x64xf32>
    %cst_168 = arith.constant dense<0xFF800000> : vector<1xf32>
    %881 = vector.multi_reduction <maximumf>, %880, %cst_168 [1] : vector<1x64xf32> to vector<1xf32>
    %882 = vector.shape_cast %881 : vector<1xf32> to vector<1x1xf32>
    %883 = vector.broadcast %882 : vector<1x1xf32> to vector<1x64xf32>
    %884 = arith.subf %880, %883 : vector<1x64xf32>
    %885 = math.exp %884 : vector<1x64xf32>
    %cst_169 = arith.constant dense<0.000000e+00> : vector<1xf32>
    %886 = vector.multi_reduction <add>, %885, %cst_169 [1] : vector<1x64xf32> to vector<1xf32>
    %887 = vector.shape_cast %886 : vector<1xf32> to vector<1x1xf32>
    %cst_170 = arith.constant 1.000000e+00 : f32
    %888 = vector.broadcast %cst_170 : f32 to vector<1x1xf32>
    %889 = arith.divf %888, %887 : vector<1x1xf32>
    %890 = vector.broadcast %882 : vector<1x1xf32> to vector<1x64xf32>
    %891 = arith.cmpf oge, %880, %890 : vector<1x64xf32>
    %c64_i32_171 = arith.constant 64 : i32
    %892 = vector.broadcast %c64_i32_171 : i32 to vector<1x64xi32>
    %893 = arith.select %891, %531, %892 : vector<1x64xi1>, vector<1x64xi32>
    %cst_172 = arith.constant dense<2147483647> : vector<1xi32>
    %894 = vector.multi_reduction <minsi>, %893, %cst_172 [1] : vector<1x64xi32> to vector<1xi32>
    %895 = vector.shape_cast %894 : vector<1xi32> to vector<1x1xi32>
    %896 = vector.broadcast %895 : vector<1x1xi32> to vector<1x64xi32>
    %897 = arith.cmpi eq, %531, %896 : vector<1x64xi32>
    %898 = arith.extui %897 : vector<1x64xi1> to vector<1x64xi32>
    %899 = arith.sitofp %898 : vector<1x64xi32> to vector<1x64xf32>
    %cst_173 = arith.constant dense<0.000000e+00> : vector<1x96xf32>
    %900 = tpu.matmul %899, %530, %cst_173 {dimension_numbers = #tpu.dot_dimension_numbers<[1], [0], [0], [1], [0, 0, 1, 1], [], []>} : vector<1x64xf32>, vector<64x96xf32>, vector<1x96xf32> -> vector<1x96xf32>
    %c4_i32 = arith.constant 4 : i32
    %901 = vector.broadcast %c4_i32 : i32 to vector<1x8xi32>
    %902 = arith.cmpi eq, %532, %901 : vector<1x8xi32>
    %903 = vector.shape_cast %895 : vector<1x1xi32> to vector<1x1xi32>
    %904 = vector.broadcast %903 : vector<1x1xi32> to vector<1x8xi32>
    %905 = arith.select %902, %904, %830 : vector<1x8xi1>, vector<1x8xi32>
    %c4_i32_174 = arith.constant 4 : i32
    %906 = vector.broadcast %c4_i32_174 : i32 to vector<1x8xi32>
    %907 = arith.cmpi eq, %532, %906 : vector<1x8xi32>
    %908 = vector.shape_cast %889 : vector<1x1xf32> to vector<1x1xf32>
    %909 = vector.broadcast %908 : vector<1x1xf32> to vector<1x8xf32>
    %910 = arith.select %907, %909, %835 : vector<1x8xi1>, vector<1x8xf32>
    %cst_175 = arith.constant dense<0.000000e+00> : vector<1x96xf32>
    %911 = tpu.matmul %863, %15, %cst_175 {dimension_numbers = #tpu.dot_dimension_numbers<[1], [0], [0], [1], [0, 0, 1, 1], [], []>} : vector<1x32xf32>, vector<32x96xf32>, vector<1x96xf32> -> vector<1x96xf32>
    %912 = arith.addf %911, %17 : vector<1x96xf32>
    %913 = vector.extract_strided_slice %900 {offsets = [0, 0], sizes = [1, 32], strides = [1, 1]} : vector<1x96xf32> to vector<1x32xf32>
    %914 = vector.extract_strided_slice %912 {offsets = [0, 0], sizes = [1, 32], strides = [1, 1]} : vector<1x96xf32> to vector<1x32xf32>
    %915 = arith.addf %913, %914 : vector<1x32xf32>
    %916 = arith.negf %915 : vector<1x32xf32>
    %917 = math.exp %916 : vector<1x32xf32>
    %cst_176 = arith.constant 1.000000e+00 : f32
    %918 = vector.broadcast %cst_176 : f32 to vector<1x32xf32>
    %919 = arith.addf %918, %917 : vector<1x32xf32>
    %920 = arith.divf %918, %919 : vector<1x32xf32>
    %921 = vector.extract_strided_slice %900 {offsets = [0, 32], sizes = [1, 32], strides = [1, 1]} : vector<1x96xf32> to vector<1x32xf32>
    %922 = vector.extract_strided_slice %912 {offsets = [0, 32], sizes = [1, 32], strides = [1, 1]} : vector<1x96xf32> to vector<1x32xf32>
    %923 = arith.addf %921, %922 : vector<1x32xf32>
    %924 = arith.negf %923 : vector<1x32xf32>
    %925 = math.exp %924 : vector<1x32xf32>
    %cst_177 = arith.constant 1.000000e+00 : f32
    %926 = vector.broadcast %cst_177 : f32 to vector<1x32xf32>
    %927 = arith.addf %926, %925 : vector<1x32xf32>
    %928 = arith.divf %926, %927 : vector<1x32xf32>
    %929 = vector.extract_strided_slice %900 {offsets = [0, 64], sizes = [1, 32], strides = [1, 1]} : vector<1x96xf32> to vector<1x32xf32>
    %930 = vector.extract_strided_slice %912 {offsets = [0, 64], sizes = [1, 32], strides = [1, 1]} : vector<1x96xf32> to vector<1x32xf32>
    %931 = arith.mulf %920, %930 : vector<1x32xf32>
    %932 = arith.addf %929, %931 : vector<1x32xf32>
    %933 = math.tanh %932 : vector<1x32xf32>
    %cst_178 = arith.constant 1.000000e+00 : f32
    %934 = vector.broadcast %cst_178 : f32 to vector<1x32xf32>
    %935 = arith.subf %934, %928 : vector<1x32xf32>
    %936 = arith.mulf %935, %933 : vector<1x32xf32>
    %937 = arith.mulf %928, %863 : vector<1x32xf32>
    %938 = arith.addf %936, %937 : vector<1x32xf32>
    %cst_179 = arith.constant dense<0.000000e+00> : vector<1x8xf32>
    %939 = tpu.matmul %938, %527, %cst_179 {dimension_numbers = #tpu.dot_dimension_numbers<[1], [0], [0], [1], [0, 0, 1, 1], [], []>} : vector<1x32xf32>, vector<32x8xf32>, vector<1x8xf32> -> vector<1x8xf32>
    %cst_180 = arith.constant dense<0xFF800000> : vector<1xf32>
    %940 = vector.multi_reduction <maximumf>, %939, %cst_180 [1] : vector<1x8xf32> to vector<1xf32>
    %941 = vector.shape_cast %940 : vector<1xf32> to vector<1x1xf32>
    %942 = vector.broadcast %941 : vector<1x1xf32> to vector<1x8xf32>
    %943 = arith.subf %939, %942 : vector<1x8xf32>
    %944 = math.exp %943 : vector<1x8xf32>
    %cst_181 = arith.constant dense<0.000000e+00> : vector<1xf32>
    %945 = vector.multi_reduction <add>, %944, %cst_181 [1] : vector<1x8xf32> to vector<1xf32>
    %946 = vector.shape_cast %945 : vector<1xf32> to vector<1x1xf32>
    %947 = vector.broadcast %946 : vector<1x1xf32> to vector<1x8xf32>
    %948 = arith.divf %944, %947 : vector<1x8xf32>
    %cst_182 = arith.constant dense<0.000000e+00> : vector<1x32xf32>
    %949 = tpu.matmul %948, %521, %cst_182 {dimension_numbers = #tpu.dot_dimension_numbers<[1], [0], [0], [1], [0, 0, 1, 1], [], []>} : vector<1x8xf32>, vector<8x32xf32>, vector<1x32xf32> -> vector<1x32xf32>
    %950 = tpu.concatenate %938, %949 in 1 : vector<1x32xf32>, vector<1x32xf32> -> vector<1x64xf32>
    %cst_183 = arith.constant dense<0.000000e+00> : vector<1x32xf32>
    %951 = tpu.matmul %950, %18, %cst_183 {dimension_numbers = #tpu.dot_dimension_numbers<[1], [0], [0], [1], [0, 0, 1, 1], [], []>} : vector<1x64xf32>, vector<64x32xf32>, vector<1x32xf32> -> vector<1x32xf32>
    %952 = arith.addf %951, %19 : vector<1x32xf32>
    %953 = math.tanh %952 : vector<1x32xf32>
    %cst_184 = arith.constant dense<0.000000e+00> : vector<1x64xf32>
    %954 = tpu.matmul %953, %20, %cst_184 {dimension_numbers = #tpu.dot_dimension_numbers<[1], [0], [0], [1], [0, 0, 1, 1], [], []>} : vector<1x32xf32>, vector<32x64xf32>, vector<1x64xf32> -> vector<1x64xf32>
    %955 = arith.addf %954, %21 : vector<1x64xf32>
    %cst_185 = arith.constant dense<0xFF800000> : vector<1xf32>
    %956 = vector.multi_reduction <maximumf>, %955, %cst_185 [1] : vector<1x64xf32> to vector<1xf32>
    %957 = vector.shape_cast %956 : vector<1xf32> to vector<1x1xf32>
    %958 = vector.broadcast %957 : vector<1x1xf32> to vector<1x64xf32>
    %959 = arith.subf %955, %958 : vector<1x64xf32>
    %960 = math.exp %959 : vector<1x64xf32>
    %cst_186 = arith.constant dense<0.000000e+00> : vector<1xf32>
    %961 = vector.multi_reduction <add>, %960, %cst_186 [1] : vector<1x64xf32> to vector<1xf32>
    %962 = vector.shape_cast %961 : vector<1xf32> to vector<1x1xf32>
    %cst_187 = arith.constant 1.000000e+00 : f32
    %963 = vector.broadcast %cst_187 : f32 to vector<1x1xf32>
    %964 = arith.divf %963, %962 : vector<1x1xf32>
    %965 = vector.broadcast %957 : vector<1x1xf32> to vector<1x64xf32>
    %966 = arith.cmpf oge, %955, %965 : vector<1x64xf32>
    %c64_i32_188 = arith.constant 64 : i32
    %967 = vector.broadcast %c64_i32_188 : i32 to vector<1x64xi32>
    %968 = arith.select %966, %531, %967 : vector<1x64xi1>, vector<1x64xi32>
    %cst_189 = arith.constant dense<2147483647> : vector<1xi32>
    %969 = vector.multi_reduction <minsi>, %968, %cst_189 [1] : vector<1x64xi32> to vector<1xi32>
    %970 = vector.shape_cast %969 : vector<1xi32> to vector<1x1xi32>
    %971 = vector.broadcast %970 : vector<1x1xi32> to vector<1x64xi32>
    %972 = arith.cmpi eq, %531, %971 : vector<1x64xi32>
    %973 = arith.extui %972 : vector<1x64xi1> to vector<1x64xi32>
    %974 = arith.sitofp %973 : vector<1x64xi32> to vector<1x64xf32>
    %cst_190 = arith.constant dense<0.000000e+00> : vector<1x96xf32>
    %975 = tpu.matmul %974, %530, %cst_190 {dimension_numbers = #tpu.dot_dimension_numbers<[1], [0], [0], [1], [0, 0, 1, 1], [], []>} : vector<1x64xf32>, vector<64x96xf32>, vector<1x96xf32> -> vector<1x96xf32>
    %c5_i32 = arith.constant 5 : i32
    %976 = vector.broadcast %c5_i32 : i32 to vector<1x8xi32>
    %977 = arith.cmpi eq, %532, %976 : vector<1x8xi32>
    %978 = vector.shape_cast %970 : vector<1x1xi32> to vector<1x1xi32>
    %979 = vector.broadcast %978 : vector<1x1xi32> to vector<1x8xi32>
    %980 = arith.select %977, %979, %905 : vector<1x8xi1>, vector<1x8xi32>
    %c5_i32_191 = arith.constant 5 : i32
    %981 = vector.broadcast %c5_i32_191 : i32 to vector<1x8xi32>
    %982 = arith.cmpi eq, %532, %981 : vector<1x8xi32>
    %983 = vector.shape_cast %964 : vector<1x1xf32> to vector<1x1xf32>
    %984 = vector.broadcast %983 : vector<1x1xf32> to vector<1x8xf32>
    %985 = arith.select %982, %984, %910 : vector<1x8xi1>, vector<1x8xf32>
    %cst_192 = arith.constant dense<0.000000e+00> : vector<1x96xf32>
    %986 = tpu.matmul %938, %15, %cst_192 {dimension_numbers = #tpu.dot_dimension_numbers<[1], [0], [0], [1], [0, 0, 1, 1], [], []>} : vector<1x32xf32>, vector<32x96xf32>, vector<1x96xf32> -> vector<1x96xf32>
    %987 = arith.addf %986, %17 : vector<1x96xf32>
    %988 = vector.extract_strided_slice %975 {offsets = [0, 0], sizes = [1, 32], strides = [1, 1]} : vector<1x96xf32> to vector<1x32xf32>
    %989 = vector.extract_strided_slice %987 {offsets = [0, 0], sizes = [1, 32], strides = [1, 1]} : vector<1x96xf32> to vector<1x32xf32>
    %990 = arith.addf %988, %989 : vector<1x32xf32>
    %991 = arith.negf %990 : vector<1x32xf32>
    %992 = math.exp %991 : vector<1x32xf32>
    %cst_193 = arith.constant 1.000000e+00 : f32
    %993 = vector.broadcast %cst_193 : f32 to vector<1x32xf32>
    %994 = arith.addf %993, %992 : vector<1x32xf32>
    %995 = arith.divf %993, %994 : vector<1x32xf32>
    %996 = vector.extract_strided_slice %975 {offsets = [0, 32], sizes = [1, 32], strides = [1, 1]} : vector<1x96xf32> to vector<1x32xf32>
    %997 = vector.extract_strided_slice %987 {offsets = [0, 32], sizes = [1, 32], strides = [1, 1]} : vector<1x96xf32> to vector<1x32xf32>
    %998 = arith.addf %996, %997 : vector<1x32xf32>
    %999 = arith.negf %998 : vector<1x32xf32>
    %1000 = math.exp %999 : vector<1x32xf32>
    %cst_194 = arith.constant 1.000000e+00 : f32
    %1001 = vector.broadcast %cst_194 : f32 to vector<1x32xf32>
    %1002 = arith.addf %1001, %1000 : vector<1x32xf32>
    %1003 = arith.divf %1001, %1002 : vector<1x32xf32>
    %1004 = vector.extract_strided_slice %975 {offsets = [0, 64], sizes = [1, 32], strides = [1, 1]} : vector<1x96xf32> to vector<1x32xf32>
    %1005 = vector.extract_strided_slice %987 {offsets = [0, 64], sizes = [1, 32], strides = [1, 1]} : vector<1x96xf32> to vector<1x32xf32>
    %1006 = arith.mulf %995, %1005 : vector<1x32xf32>
    %1007 = arith.addf %1004, %1006 : vector<1x32xf32>
    %1008 = math.tanh %1007 : vector<1x32xf32>
    %cst_195 = arith.constant 1.000000e+00 : f32
    %1009 = vector.broadcast %cst_195 : f32 to vector<1x32xf32>
    %1010 = arith.subf %1009, %1003 : vector<1x32xf32>
    %1011 = arith.mulf %1010, %1008 : vector<1x32xf32>
    %1012 = arith.mulf %1003, %938 : vector<1x32xf32>
    %1013 = arith.addf %1011, %1012 : vector<1x32xf32>
    %cst_196 = arith.constant dense<0.000000e+00> : vector<1x8xf32>
    %1014 = tpu.matmul %1013, %527, %cst_196 {dimension_numbers = #tpu.dot_dimension_numbers<[1], [0], [0], [1], [0, 0, 1, 1], [], []>} : vector<1x32xf32>, vector<32x8xf32>, vector<1x8xf32> -> vector<1x8xf32>
    %cst_197 = arith.constant dense<0xFF800000> : vector<1xf32>
    %1015 = vector.multi_reduction <maximumf>, %1014, %cst_197 [1] : vector<1x8xf32> to vector<1xf32>
    %1016 = vector.shape_cast %1015 : vector<1xf32> to vector<1x1xf32>
    %1017 = vector.broadcast %1016 : vector<1x1xf32> to vector<1x8xf32>
    %1018 = arith.subf %1014, %1017 : vector<1x8xf32>
    %1019 = math.exp %1018 : vector<1x8xf32>
    %cst_198 = arith.constant dense<0.000000e+00> : vector<1xf32>
    %1020 = vector.multi_reduction <add>, %1019, %cst_198 [1] : vector<1x8xf32> to vector<1xf32>
    %1021 = vector.shape_cast %1020 : vector<1xf32> to vector<1x1xf32>
    %1022 = vector.broadcast %1021 : vector<1x1xf32> to vector<1x8xf32>
    %1023 = arith.divf %1019, %1022 : vector<1x8xf32>
    %cst_199 = arith.constant dense<0.000000e+00> : vector<1x32xf32>
    %1024 = tpu.matmul %1023, %521, %cst_199 {dimension_numbers = #tpu.dot_dimension_numbers<[1], [0], [0], [1], [0, 0, 1, 1], [], []>} : vector<1x8xf32>, vector<8x32xf32>, vector<1x32xf32> -> vector<1x32xf32>
    %1025 = tpu.concatenate %1013, %1024 in 1 : vector<1x32xf32>, vector<1x32xf32> -> vector<1x64xf32>
    %cst_200 = arith.constant dense<0.000000e+00> : vector<1x32xf32>
    %1026 = tpu.matmul %1025, %18, %cst_200 {dimension_numbers = #tpu.dot_dimension_numbers<[1], [0], [0], [1], [0, 0, 1, 1], [], []>} : vector<1x64xf32>, vector<64x32xf32>, vector<1x32xf32> -> vector<1x32xf32>
    %1027 = arith.addf %1026, %19 : vector<1x32xf32>
    %1028 = math.tanh %1027 : vector<1x32xf32>
    %cst_201 = arith.constant dense<0.000000e+00> : vector<1x64xf32>
    %1029 = tpu.matmul %1028, %20, %cst_201 {dimension_numbers = #tpu.dot_dimension_numbers<[1], [0], [0], [1], [0, 0, 1, 1], [], []>} : vector<1x32xf32>, vector<32x64xf32>, vector<1x64xf32> -> vector<1x64xf32>
    %1030 = arith.addf %1029, %21 : vector<1x64xf32>
    %cst_202 = arith.constant dense<0xFF800000> : vector<1xf32>
    %1031 = vector.multi_reduction <maximumf>, %1030, %cst_202 [1] : vector<1x64xf32> to vector<1xf32>
    %1032 = vector.shape_cast %1031 : vector<1xf32> to vector<1x1xf32>
    %1033 = vector.broadcast %1032 : vector<1x1xf32> to vector<1x64xf32>
    %1034 = arith.subf %1030, %1033 : vector<1x64xf32>
    %1035 = math.exp %1034 : vector<1x64xf32>
    %cst_203 = arith.constant dense<0.000000e+00> : vector<1xf32>
    %1036 = vector.multi_reduction <add>, %1035, %cst_203 [1] : vector<1x64xf32> to vector<1xf32>
    %1037 = vector.shape_cast %1036 : vector<1xf32> to vector<1x1xf32>
    %cst_204 = arith.constant 1.000000e+00 : f32
    %1038 = vector.broadcast %cst_204 : f32 to vector<1x1xf32>
    %1039 = arith.divf %1038, %1037 : vector<1x1xf32>
    %1040 = vector.broadcast %1032 : vector<1x1xf32> to vector<1x64xf32>
    %1041 = arith.cmpf oge, %1030, %1040 : vector<1x64xf32>
    %c64_i32_205 = arith.constant 64 : i32
    %1042 = vector.broadcast %c64_i32_205 : i32 to vector<1x64xi32>
    %1043 = arith.select %1041, %531, %1042 : vector<1x64xi1>, vector<1x64xi32>
    %cst_206 = arith.constant dense<2147483647> : vector<1xi32>
    %1044 = vector.multi_reduction <minsi>, %1043, %cst_206 [1] : vector<1x64xi32> to vector<1xi32>
    %1045 = vector.shape_cast %1044 : vector<1xi32> to vector<1x1xi32>
    %1046 = vector.broadcast %1045 : vector<1x1xi32> to vector<1x64xi32>
    %1047 = arith.cmpi eq, %531, %1046 : vector<1x64xi32>
    %1048 = arith.extui %1047 : vector<1x64xi1> to vector<1x64xi32>
    %1049 = arith.sitofp %1048 : vector<1x64xi32> to vector<1x64xf32>
    %cst_207 = arith.constant dense<0.000000e+00> : vector<1x96xf32>
    %1050 = tpu.matmul %1049, %530, %cst_207 {dimension_numbers = #tpu.dot_dimension_numbers<[1], [0], [0], [1], [0, 0, 1, 1], [], []>} : vector<1x64xf32>, vector<64x96xf32>, vector<1x96xf32> -> vector<1x96xf32>
    %c6_i32 = arith.constant 6 : i32
    %1051 = vector.broadcast %c6_i32 : i32 to vector<1x8xi32>
    %1052 = arith.cmpi eq, %532, %1051 : vector<1x8xi32>
    %1053 = vector.shape_cast %1045 : vector<1x1xi32> to vector<1x1xi32>
    %1054 = vector.broadcast %1053 : vector<1x1xi32> to vector<1x8xi32>
    %1055 = arith.select %1052, %1054, %980 : vector<1x8xi1>, vector<1x8xi32>
    %c6_i32_208 = arith.constant 6 : i32
    %1056 = vector.broadcast %c6_i32_208 : i32 to vector<1x8xi32>
    %1057 = arith.cmpi eq, %532, %1056 : vector<1x8xi32>
    %1058 = vector.shape_cast %1039 : vector<1x1xf32> to vector<1x1xf32>
    %1059 = vector.broadcast %1058 : vector<1x1xf32> to vector<1x8xf32>
    %1060 = arith.select %1057, %1059, %985 : vector<1x8xi1>, vector<1x8xf32>
    %cst_209 = arith.constant dense<0.000000e+00> : vector<1x96xf32>
    %1061 = tpu.matmul %1013, %15, %cst_209 {dimension_numbers = #tpu.dot_dimension_numbers<[1], [0], [0], [1], [0, 0, 1, 1], [], []>} : vector<1x32xf32>, vector<32x96xf32>, vector<1x96xf32> -> vector<1x96xf32>
    %1062 = arith.addf %1061, %17 : vector<1x96xf32>
    %1063 = vector.extract_strided_slice %1050 {offsets = [0, 0], sizes = [1, 32], strides = [1, 1]} : vector<1x96xf32> to vector<1x32xf32>
    %1064 = vector.extract_strided_slice %1062 {offsets = [0, 0], sizes = [1, 32], strides = [1, 1]} : vector<1x96xf32> to vector<1x32xf32>
    %1065 = arith.addf %1063, %1064 : vector<1x32xf32>
    %1066 = arith.negf %1065 : vector<1x32xf32>
    %1067 = math.exp %1066 : vector<1x32xf32>
    %cst_210 = arith.constant 1.000000e+00 : f32
    %1068 = vector.broadcast %cst_210 : f32 to vector<1x32xf32>
    %1069 = arith.addf %1068, %1067 : vector<1x32xf32>
    %1070 = arith.divf %1068, %1069 : vector<1x32xf32>
    %1071 = vector.extract_strided_slice %1050 {offsets = [0, 32], sizes = [1, 32], strides = [1, 1]} : vector<1x96xf32> to vector<1x32xf32>
    %1072 = vector.extract_strided_slice %1062 {offsets = [0, 32], sizes = [1, 32], strides = [1, 1]} : vector<1x96xf32> to vector<1x32xf32>
    %1073 = arith.addf %1071, %1072 : vector<1x32xf32>
    %1074 = arith.negf %1073 : vector<1x32xf32>
    %1075 = math.exp %1074 : vector<1x32xf32>
    %cst_211 = arith.constant 1.000000e+00 : f32
    %1076 = vector.broadcast %cst_211 : f32 to vector<1x32xf32>
    %1077 = arith.addf %1076, %1075 : vector<1x32xf32>
    %1078 = arith.divf %1076, %1077 : vector<1x32xf32>
    %1079 = vector.extract_strided_slice %1050 {offsets = [0, 64], sizes = [1, 32], strides = [1, 1]} : vector<1x96xf32> to vector<1x32xf32>
    %1080 = vector.extract_strided_slice %1062 {offsets = [0, 64], sizes = [1, 32], strides = [1, 1]} : vector<1x96xf32> to vector<1x32xf32>
    %1081 = arith.mulf %1070, %1080 : vector<1x32xf32>
    %1082 = arith.addf %1079, %1081 : vector<1x32xf32>
    %1083 = math.tanh %1082 : vector<1x32xf32>
    %cst_212 = arith.constant 1.000000e+00 : f32
    %1084 = vector.broadcast %cst_212 : f32 to vector<1x32xf32>
    %1085 = arith.subf %1084, %1078 : vector<1x32xf32>
    %1086 = arith.mulf %1085, %1083 : vector<1x32xf32>
    %1087 = arith.mulf %1078, %1013 : vector<1x32xf32>
    %1088 = arith.addf %1086, %1087 : vector<1x32xf32>
    %cst_213 = arith.constant dense<0.000000e+00> : vector<1x8xf32>
    %1089 = tpu.matmul %1088, %527, %cst_213 {dimension_numbers = #tpu.dot_dimension_numbers<[1], [0], [0], [1], [0, 0, 1, 1], [], []>} : vector<1x32xf32>, vector<32x8xf32>, vector<1x8xf32> -> vector<1x8xf32>
    %cst_214 = arith.constant dense<0xFF800000> : vector<1xf32>
    %1090 = vector.multi_reduction <maximumf>, %1089, %cst_214 [1] : vector<1x8xf32> to vector<1xf32>
    %1091 = vector.shape_cast %1090 : vector<1xf32> to vector<1x1xf32>
    %1092 = vector.broadcast %1091 : vector<1x1xf32> to vector<1x8xf32>
    %1093 = arith.subf %1089, %1092 : vector<1x8xf32>
    %1094 = math.exp %1093 : vector<1x8xf32>
    %cst_215 = arith.constant dense<0.000000e+00> : vector<1xf32>
    %1095 = vector.multi_reduction <add>, %1094, %cst_215 [1] : vector<1x8xf32> to vector<1xf32>
    %1096 = vector.shape_cast %1095 : vector<1xf32> to vector<1x1xf32>
    %1097 = vector.broadcast %1096 : vector<1x1xf32> to vector<1x8xf32>
    %1098 = arith.divf %1094, %1097 : vector<1x8xf32>
    %cst_216 = arith.constant dense<0.000000e+00> : vector<1x32xf32>
    %1099 = tpu.matmul %1098, %521, %cst_216 {dimension_numbers = #tpu.dot_dimension_numbers<[1], [0], [0], [1], [0, 0, 1, 1], [], []>} : vector<1x8xf32>, vector<8x32xf32>, vector<1x32xf32> -> vector<1x32xf32>
    %1100 = tpu.concatenate %1088, %1099 in 1 : vector<1x32xf32>, vector<1x32xf32> -> vector<1x64xf32>
    %cst_217 = arith.constant dense<0.000000e+00> : vector<1x32xf32>
    %1101 = tpu.matmul %1100, %18, %cst_217 {dimension_numbers = #tpu.dot_dimension_numbers<[1], [0], [0], [1], [0, 0, 1, 1], [], []>} : vector<1x64xf32>, vector<64x32xf32>, vector<1x32xf32> -> vector<1x32xf32>
    %1102 = arith.addf %1101, %19 : vector<1x32xf32>
    %1103 = math.tanh %1102 : vector<1x32xf32>
    %cst_218 = arith.constant dense<0.000000e+00> : vector<1x64xf32>
    %1104 = tpu.matmul %1103, %20, %cst_218 {dimension_numbers = #tpu.dot_dimension_numbers<[1], [0], [0], [1], [0, 0, 1, 1], [], []>} : vector<1x32xf32>, vector<32x64xf32>, vector<1x64xf32> -> vector<1x64xf32>
    %1105 = arith.addf %1104, %21 : vector<1x64xf32>
    %cst_219 = arith.constant dense<0xFF800000> : vector<1xf32>
    %1106 = vector.multi_reduction <maximumf>, %1105, %cst_219 [1] : vector<1x64xf32> to vector<1xf32>
    %1107 = vector.shape_cast %1106 : vector<1xf32> to vector<1x1xf32>
    %1108 = vector.broadcast %1107 : vector<1x1xf32> to vector<1x64xf32>
    %1109 = arith.subf %1105, %1108 : vector<1x64xf32>
    %1110 = math.exp %1109 : vector<1x64xf32>
    %cst_220 = arith.constant dense<0.000000e+00> : vector<1xf32>
    %1111 = vector.multi_reduction <add>, %1110, %cst_220 [1] : vector<1x64xf32> to vector<1xf32>
    %1112 = vector.shape_cast %1111 : vector<1xf32> to vector<1x1xf32>
    %cst_221 = arith.constant 1.000000e+00 : f32
    %1113 = vector.broadcast %cst_221 : f32 to vector<1x1xf32>
    %1114 = arith.divf %1113, %1112 : vector<1x1xf32>
    %1115 = vector.broadcast %1107 : vector<1x1xf32> to vector<1x64xf32>
    %1116 = arith.cmpf oge, %1105, %1115 : vector<1x64xf32>
    %c64_i32_222 = arith.constant 64 : i32
    %1117 = vector.broadcast %c64_i32_222 : i32 to vector<1x64xi32>
    %1118 = arith.select %1116, %531, %1117 : vector<1x64xi1>, vector<1x64xi32>
    %cst_223 = arith.constant dense<2147483647> : vector<1xi32>
    %1119 = vector.multi_reduction <minsi>, %1118, %cst_223 [1] : vector<1x64xi32> to vector<1xi32>
    %1120 = vector.shape_cast %1119 : vector<1xi32> to vector<1x1xi32>
    %c7_i32 = arith.constant 7 : i32
    %1121 = vector.broadcast %c7_i32 : i32 to vector<1x8xi32>
    %1122 = arith.cmpi eq, %532, %1121 : vector<1x8xi32>
    %1123 = vector.shape_cast %1120 : vector<1x1xi32> to vector<1x1xi32>
    %1124 = vector.broadcast %1123 : vector<1x1xi32> to vector<1x8xi32>
    %1125 = arith.select %1122, %1124, %1055 : vector<1x8xi1>, vector<1x8xi32>
    %c7_i32_224 = arith.constant 7 : i32
    %1126 = vector.broadcast %c7_i32_224 : i32 to vector<1x8xi32>
    %1127 = arith.cmpi eq, %532, %1126 : vector<1x8xi32>
    %1128 = vector.shape_cast %1114 : vector<1x1xf32> to vector<1x1xf32>
    %1129 = vector.broadcast %1128 : vector<1x1xf32> to vector<1x8xf32>
    %1130 = arith.select %1127, %1129, %1060 : vector<1x8xi1>, vector<1x8xf32>
    %c0_225 = arith.constant 0 : index
    %c0_226 = arith.constant 0 : index
    %1131 = vector.load %arg7[%c0_225, %c0_226] : memref<1x8xi32, #tpu.memory_space<vmem>>, vector<1x8xi32>
    tpu.vector_store %arg7[%c0_225, %c0_226], %1125 {strides = array<i32>} : memref<1x8xi32, #tpu.memory_space<vmem>>, vector<1x8xi32>,
    %c0_227 = arith.constant 0 : index
    %c0_228 = arith.constant 0 : index
    %1132 = vector.load %arg8[%c0_227, %c0_228] : memref<1x8xf32, #tpu.memory_space<vmem>>, vector<1x8xf32>
    tpu.vector_store %arg8[%c0_227, %c0_228], %1130 {strides = array<i32>} : memref<1x8xf32, #tpu.memory_space<vmem>>, vector<1x8xf32>,
    return
  }
}

</mosaic_0001>

<llo_original>
// kernel: greedy_search_decoder.1
$region0: #{greedy_search_decoder.1}
  #allocation0 [shape = 'u32[]', space=smem, size = 0x4, offset = 0x4, fixed_abs, tag = 'smem constant byte address 0x4 - core index']
  #allocation1 [shape = 'u32[72,128]{1,0:T(1,128)}', space=vmem, size = 0x9000, scoped, tag = 'internal scratch']
  %s0 = inlined_call_operand.vmem [shape: s32[8], index: 0, kind: input, shape index: {}]
  %s1 = inlined_call_operand.vmem [shape: f32[64,32], index: 1, kind: input, shape index: {}]
  %s2 = inlined_call_operand.vmem [shape: f32[66,96], index: 2, kind: input, shape index: {}]
  %s3 = inlined_call_operand.vmem [shape: f32[66,96], index: 3, kind: input, shape index: {}]
  %s4 = inlined_call_operand.hbm [shape: f32[66,96], index: 4, kind: input, shape index: {}]
  %s5 = inlined_call_operand.vmem [shape: f32[65,32], index: 5, kind: input, shape index: {}]
  %s6 = inlined_call_operand.hbm [shape: f32[33,64], index: 6, kind: input, shape index: {}]
  %s7 = inlined_call_operand.hbm [shape: s32[1,8], index: 7, kind: output, shape index: {0}]
  %s8 = inlined_call_operand.hbm [shape: f32[1,8], index: 8, kind: output, shape index: {1}]
  %9 = xla_tuple %s7, %s8
  %s10 = sld [smem:[#allocation0]]
  $region58: #{greedy_search_decoder.1} parent=0
    _
  %s12 = ssub.s32 1, %s10
  %s13 = scalar_select 0, %s12, %s10
  $region1: #{greedy_search_decoder.1} parent=0
    #allocation2 [shape = 'u8[512]{0}', space=smem, size = 0x200, scoped, tag = 'input window, operand 0, single buffered']
    #allocation3 [shape = 's32[1]{0}', space=sflag, size = 0x4, scoped, tag = 'scoped memory for greedy_search_decoder.1']
    #allocation4 [shape = 's32[1]{0}', space=sflag, size = 0x4, scoped, tag = 'scoped memory for greedy_search_decoder.1']
    #allocation5 [shape = 's32[1]{0}', space=sflag, size = 0x4, scoped, tag = 'scoped memory for greedy_search_decoder.1']
    #allocation6 [shape = 'u8[36864]{0}', space=vmem, size = 0x9000, scoped, tag = 'input window, operand 4, single buffered']
    #allocation7 [shape = 'u8[20480]{0}', space=vmem, size = 0x5000, scoped, tag = 'input window, operand 6, single buffered']
    #allocation8 [shape = 's32[1]{0}', space=sflag, size = 0x4, scoped, tag = 'scoped memory for greedy_search_decoder.1']
    #allocation9 [shape = 'u8[512]{0}', space=vmem, size = 0x400, scoped, tag = 'output window, operand 0, single buffered']
    #allocation10 [shape = 'u8[512]{0}', space=vmem, size = 0x400, scoped, tag = 'output window, operand 1, single buffered']
    #allocation11 [shape = 's32[1]{0}', space=sflag, size = 0x4, scoped, tag = 'scoped memory for greedy_search_decoder.1']
    %14 = vsyncpa [#allocation5], 0
    %15 = vsyncpa [#allocation3], 0
    %16 = vsyncpa [#allocation8], 0
    %17 = vsyncpa [#allocation4], 0
    %18 = vsyncpa [#allocation11], 0
    // Predicated region
    $region2: #{greedy_search_decoder.1} parent=1 // pred_check
      _
    $region3: #{greedy_search_decoder.1} parent=1 // pred_check_branch
      %20 = sbr.rel (0) target = $region5
    $region4: #{greedy_search_decoder.1} parent=1 // pred_region
      %22 = vsyncadd [#allocation5], 0
      %s24 = sshll.u32 %s0, 4
      %s25 = int_to_ptr.vmem [resolvable:$true] %s24
      %27 = dma.vmem_to_smem %s25, 16, [#allocation2], [#allocation5]
    $region5: #{greedy_search_decoder.1} parent=1 // pred_fallthru
      _
    // Predicated region
    $region6: #{greedy_search_decoder.1} parent=1 // pred_check
      _
    $region7: #{greedy_search_decoder.1} parent=1 // pred_check_branch
      %29 = sbr.rel (0) target = $region9
    $region8: #{greedy_search_decoder.1} parent=1 // pred_region
      _
    $region9: #{greedy_search_decoder.1} parent=1 // pred_fallthru
      _
    // Predicated region
    $region10: #{greedy_search_decoder.1} parent=1 // pred_check
      _
    $region11: #{greedy_search_decoder.1} parent=1 // pred_check_branch
      %31 = sbr.rel (0) target = $region13
    $region12: #{greedy_search_decoder.1} parent=1 // pred_region
      _
    $region13: #{greedy_search_decoder.1} parent=1 // pred_fallthru
      _
    // Predicated region
    $region14: #{greedy_search_decoder.1} parent=1 // pred_check
      _
    $region15: #{greedy_search_decoder.1} parent=1 // pred_check_branch
      %33 = sbr.rel (0) target = $region17
    $region16: #{greedy_search_decoder.1} parent=1 // pred_region
      _
    $region17: #{greedy_search_decoder.1} parent=1 // pred_fallthru
      _
    // Predicated region
    $region18: #{greedy_search_decoder.1} parent=1 // pred_check
      _
    $region19: #{greedy_search_decoder.1} parent=1 // pred_check_branch
      %35 = sbr.rel (0) target = $region21
    $region20: #{greedy_search_decoder.1} parent=1 // pred_region
      %37 = vsyncadd [#allocation3], 0
      %s38 = sshll.u32 %s4, 4
      %s39 = int_to_ptr.hbm [resolvable:$true] %s38
      %s40 = sshll.u32 [#allocation6], 4
      %s41 = int_to_ptr.vmem [resolvable:$true] %s40
      %46 = dma.hbm_to_vmem [thread:$0]  %s39, 1152, %s41, [#allocation3], 128, 128, 8
    $region21: #{greedy_search_decoder.1} parent=1 // pred_fallthru
      _
    // Predicated region
    $region22: #{greedy_search_decoder.1} parent=1 // pred_check
      _
    $region23: #{greedy_search_decoder.1} parent=1 // pred_check_branch
      %48 = sbr.rel (0) target = $region25
    $region24: #{greedy_search_decoder.1} parent=1 // pred_region
      _
    $region25: #{greedy_search_decoder.1} parent=1 // pred_fallthru
      _
    // Predicated region
    $region26: #{greedy_search_decoder.1} parent=1 // pred_check
      _
    $region27: #{greedy_search_decoder.1} parent=1 // pred_check_branch
      %50 = sbr.rel (0) target = $region29
    $region28: #{greedy_search_decoder.1} parent=1 // pred_region
      %52 = vsyncadd [#allocation8], 0
      %s53 = sshll.u32 %s6, 4
      %s54 = int_to_ptr.hbm [resolvable:$true] %s53
      %s55 = sshll.u32 [#allocation7], 4
      %s56 = int_to_ptr.vmem [resolvable:$true] %s55
      %61 = dma.hbm_to_vmem [thread:$0]  %s54, 640, %s56, [#allocation8], 128, 128, 8
    $region29: #{greedy_search_decoder.1} parent=1 // pred_fallthru
      _
    // Predicated region
    $region30: #{greedy_search_decoder.1} parent=1 // pred_check
      _
    $region31: #{greedy_search_decoder.1} parent=1 // pred_check_branch
      %63 = sbr.rel (0) target = $region33
    $region32: #{greedy_search_decoder.1} parent=1 // pred_region
      %65 = dma.done [#allocation5], 16
    $region33: #{greedy_search_decoder.1} parent=1 // pred_fallthru
      _
    // Predicated region
    $region34: #{greedy_search_decoder.1} parent=1 // pred_check
      _
    $region35: #{greedy_search_decoder.1} parent=1 // pred_check_branch
      %67 = sbr.rel (0) target = $region37
    $region36: #{greedy_search_decoder.1} parent=1 // pred_region
      %69 = dma.done [#allocation3], 1152
    $region37: #{greedy_search_decoder.1} parent=1 // pred_fallthru
      _
    // Predicated region
    $region38: #{greedy_search_decoder.1} parent=1 // pred_check
      _
    $region39: #{greedy_search_decoder.1} parent=1 // pred_check_branch
      %71 = sbr.rel (0) target = $region41
    $region40: #{greedy_search_decoder.1} parent=1 // pred_region
      %73 = dma.done [#allocation8], 640
    $region41: #{greedy_search_decoder.1} parent=1 // pred_fallthru
      _
    %74 = sfence
    %v75 = vld [vmem:[%s1] sm:$0xff]
    %v76 = vld [vmem:[%s1 + $0x8] sm:$0xff]
    %v77 = vld [vmem:[%s1 + $0x10] sm:$0xff]
    %v78 = vld [vmem:[%s1 + $0x18] sm:$0xff]
    %v79 = vld [vmem:[%s1 + $0x20] sm:$0xff]
    %v80 = vld [vmem:[%s1 + $0x28] sm:$0xff]
    %v81 = vld [vmem:[%s1 + $0x30] sm:$0xff]
    %v82 = vld [vmem:[%s1 + $0x38] sm:$0xff]
    %v83 = vld [vmem:[%s2] sm:$0xff]
    %v84 = vld [vmem:[%s2 + $0x8] sm:$0xff]
    %v85 = vld [vmem:[%s2 + $0x10] sm:$0xff]
    %v86 = vld [vmem:[%s2 + $0x18] sm:$0xff]
    %v87 = vld [vmem:[%s2 + $0x20] sm:$0xff]
    %v88 = vld [vmem:[%s2 + $0x28] sm:$0xff]
    %v89 = vld [vmem:[%s2 + $0x30] sm:$0xff]
    %v90 = vld [vmem:[%s2 + $0x38] sm:$0xff]
    %v91 = vld [vmem:[%s2 + $0x40] sm:$0x3]
    %v92 = vld [vmem:[%s3] sm:$0xff]
    %v93 = vld [vmem:[%s3 + $0x8] sm:$0xff]
    %v94 = vld [vmem:[%s3 + $0x10] sm:$0xff]
    %v95 = vld [vmem:[%s3 + $0x18] sm:$0xff]
    %v96 = vld [vmem:[%s3 + $0x20] sm:$0xff]
    %v97 = vld [vmem:[%s3 + $0x28] sm:$0xff]
    %v98 = vld [vmem:[%s3 + $0x30] sm:$0xff]
    %v99 = vld [vmem:[%s3 + $0x38] sm:$0xff]
    %v100 = vld [vmem:[%s3 + $0x40] sm:$0x3]
    %v101 = vld [vmem:[#allocation6] sm:$0xff]
    %v102 = vld [vmem:[#allocation6 + $0x8] sm:$0xff]
    %v103 = vld [vmem:[#allocation6 + $0x10] sm:$0xff]
    %v104 = vld [vmem:[#allocation6 + $0x18] sm:$0xff]
    %v105 = vld [vmem:[#allocation6 + $0x20] sm:$0xff]
    %v106 = vld [vmem:[#allocation6 + $0x28] sm:$0xff]
    %v107 = vld [vmem:[#allocation6 + $0x30] sm:$0xff]
    %v108 = vld [vmem:[#allocation6 + $0x38] sm:$0xff]
    %v109 = vld [vmem:[#allocation6 + $0x40] sm:$0x3]
    %v110 = vld [vmem:[%s5] sm:$0xff]
    %v111 = vld [vmem:[%s5 + $0x8] sm:$0xff]
    %v112 = vld [vmem:[%s5 + $0x10] sm:$0xff]
    %v113 = vld [vmem:[%s5 + $0x18] sm:$0xff]
    %v114 = vld [vmem:[%s5 + $0x20] sm:$0xff]
    %v115 = vld [vmem:[%s5 + $0x28] sm:$0xff]
    %v116 = vld [vmem:[%s5 + $0x30] sm:$0xff]
    %v117 = vld [vmem:[%s5 + $0x38] sm:$0xff]
    %v118 = vld [vmem:[%s5 + $0x40] sm:$0x1]
    %v119 = vld [vmem:[#allocation7] sm:$0xff]
    %v120 = vld [vmem:[#allocation7 + $0x8] sm:$0xff]
    %v121 = vld [vmem:[#allocation7 + $0x10] sm:$0xff]
    %v122 = vld [vmem:[#allocation7 + $0x18] sm:$0xff]
    %v123 = vld [vmem:[#allocation7 + $0x20] sm:$0x1]
    %s124 = sld [smem:[#allocation2]]
    %s125 = scalar_lea.vmem %s1, %s124
    %v126 = vld [vmem:[%s125] sm:$0x1]
    %s127 = sld [smem:[#allocation2 + $0x1]]
    %s128 = scalar_lea.vmem %s1, %s127
    %v129 = vld [vmem:[%s128] sm:$0x1]
    %s130 = sld [smem:[#allocation2 + $0x2]]
    %s131 = scalar_lea.vmem %s1, %s130
    %v132 = vld [vmem:[%s131] sm:$0x1]
    %s133 = sld [smem:[#allocation2 + $0x3]]
    %s134 = scalar_lea.vmem %s1, %s133
    %v135 = vld [vmem:[%s134] sm:$0x1]
    %s136 = sld [smem:[#allocation2 + $0x4]]
    %s137 = scalar_lea.vmem %s1, %s136
    %v138 = vld [vmem:[%s137] sm:$0x1]
    %s139 = sld [smem:[#allocation2 + $0x5]]
    %s140 = scalar_lea.vmem %s1, %s139
    %v141 = vld [vmem:[%s140] sm:$0x1]
    %s142 = sld [smem:[#allocation2 + $0x6]]
    %s143 = scalar_lea.vmem %s1, %s142
    %v144 = vld [vmem:[%s143] sm:$0x1]
    %s145 = sld [smem:[#allocation2 + $0x7]]
    %s146 = scalar_lea.vmem %s1, %s145
    %v147 = vld [vmem:[%s146] sm:$0x1]
    %v149 = vrot.slane %v129, 7
    %v152 = vrot.slane %v132, 6
    %v155 = vrot.slane %v135, 5
    %v158 = vrot.slane %v138, 4
    %v161 = vrot.slane %v141, 3
    %v164 = vrot.slane %v144, 2
    %v167 = vrot.slane %v147, 1
    %vm169 = vcmask 1040384
    %v170 = vsel %vm169, %v126, %v149
    %vm171 = vcmask 1041408
    %v172 = vsel %vm171, %v170, %v152
    %vm173 = vcmask 1042432
    %v174 = vsel %vm173, %v172, %v155
    %vm175 = vcmask 1043456
    %v176 = vsel %vm175, %v174, %v158
    %vm177 = vcmask 1044480
    %v178 = vsel %vm177, %v176, %v161
    %vm179 = vcmask 1045504
    %v180 = vsel %vm179, %v178, %v164
    %vm181 = vcmask 1046528
    %v182 = vsel %vm181, %v180, %v167
    %v183 = vperm.slane %v91, 0
    %vm184 = vcmask 261120
    %v186 = vsel %vm184, %v182, 0
    %188 = vmatpush.msra.mxu0 0.0
    %189 = vmatpush.msra.mxu0 0.0
    %190 = vmatpush.msra.mxu0 0.0
    %191 = vmatpush.msra.mxu0 0.0
    %192 = vmatpush.msra.mxu0 0.0
    %193 = vmatpush.msra.mxu0 0.0
    %194 = vmatpush.msra.mxu0 0.0
    %195 = vmatpush.msra.mxu0 0.0
    %196 = vmatpush.msra.mxu0 0.0
    %197 = vmatpush.msra.mxu0 0.0
    %198 = vmatpush.msra.mxu0 0.0
    %199 = vmatpush.msra.mxu0 0.0
    %200 = vmatpush.msra.mxu0 %v86
    %201 = vmatpush.msra.mxu0 %v85
    %202 = vmatpush.msra.mxu0 %v84
    %203 = vmatpush.msra.mxu0 %v83
    %204 = vmatmul.f32.gmra.mxu0 %v186
    %v205 = vpop.f32.mrf.mxu0
    %v206 = vadd.f32 %v183, %v205
    %207 = vdwg.mxu0
    %v208 = vperm.slane %v100, 0
    %209 = vmatpush.msra.mxu0 0.0
    %210 = vmatpush.msra.mxu0 0.0
    %211 = vmatpush.msra.mxu0 0.0
    %212 = vmatpush.msra.mxu0 0.0
    %213 = vmatpush.msra.mxu0 0.0
    %214 = vmatpush.msra.mxu0 0.0
    %215 = vmatpush.msra.mxu0 0.0
    %216 = vmatpush.msra.mxu0 0.0
    %217 = vmatpush.msra.mxu0 0.0
    %218 = vmatpush.msra.mxu0 0.0
    %219 = vmatpush.msra.mxu0 0.0
    %220 = vmatpush.msra.mxu0 0.0
    %221 = vmatpush.msra.mxu0 %v95
    %222 = vmatpush.msra.mxu0 %v94
    %223 = vmatpush.msra.mxu0 %v93
    %224 = vmatpush.msra.mxu0 %v92
    %225 = vmatmul.f32.gmra.mxu0 %v186
    %v226 = vpop.f32.mrf.mxu0
    %v227 = vadd.f32 %v208, %v226
    %228 = vdwg.mxu0
    %v230 = vrot.slane %v91, 1
    %v233 = vsel %vm184, 0.0, 0
    %235 = vmatpush.msra.mxu0 0.0
    %236 = vmatpush.msra.mxu0 0.0
    %237 = vmatpush.msra.mxu0 0.0
    %238 = vmatpush.msra.mxu0 0.0
    %239 = vmatpush.msra.mxu0 0.0
    %240 = vmatpush.msra.mxu0 0.0
    %241 = vmatpush.msra.mxu0 0.0
    %242 = vmatpush.msra.mxu0 0.0
    %243 = vmatpush.msra.mxu0 0.0
    %244 = vmatpush.msra.mxu0 0.0
    %245 = vmatpush.msra.mxu0 0.0
    %246 = vmatpush.msra.mxu0 0.0
    %247 = vmatpush.msra.mxu0 %v90
    %248 = vmatpush.msra.mxu0 %v89
    %249 = vmatpush.msra.mxu0 %v88
    %250 = vmatpush.msra.mxu0 %v87
    %251 = vmatmul.f32.gmra.mxu0 %v233
    %v252 = vpop.f32.mrf.mxu0
    %v253 = vadd.f32 %v230, %v252
    %254 = vdwg.mxu0
    %v255 = vadd.f32 %v206, %v253
    %v256 = vxor.u32 %v255, 2147483648
    %v257 = vmul.f32 %v256, 1.442695
    %v258 = vpow.pop %v257
    %v259 = vadd.f32 %v258, 1.0
    %v260 = vrcp.pop %v259
    %v261 = vmul.f32 %v259, %v260
    %v262 = vsub.f32 1.0, %v261
    %v263 = vmul.f32 %v260, %v262
    %v264 = vadd.f32 %v260, %v263
    %vm265 = vweird.f32 %v259
    %vm266 = vweird.f32 %v260
    %vm267 = vmor %vm265, %vm266
    %v268 = vsel %vm267, %v260, %v264
    %v269 = vand.u32 2147483647, %v259
    %vm270 = vcmp.eq.f32.partialorder %v269, 8.507059e+37
    %v271 = vand.u32 %v259, 2147483648
    %v272 = vor.u32 1.1754944e-38, %v271
    %v273 = vsel %vm270, %v272, %v268
    %v274 = vmul.f32 1.0, %v273
    %276 = vrot.lane.b32.xlu0 %v253, 64
    %v277 = vpop.permute.xlu0 %276
    %v279 = vmul.f32 %v274, %v277
    %281 = vrot.lane.b32.xlu0 %v279, 64
    %v282 = vpop.permute.xlu0 %281
    %v284 = vadd.f32 %v206, %v282
    %v285 = vtanh.pop %v284
    %v286 = vsub.f32 1.0, %v274
    %288 = vrot.lane.b32.xlu0 %v285, 96
    %v289 = vpop.permute.xlu0 %288
    %v291 = vmul.f32 %v286, %v289
    %v292 = vmul.f32 %v274, 0.0
    %v293 = vadd.f32 %v291, %v292
    %v295 = vrot.slane %v100, 1
    %297 = vmatpush.msra.mxu0 0.0
    %298 = vmatpush.msra.mxu0 0.0
    %299 = vmatpush.msra.mxu0 0.0
    %300 = vmatpush.msra.mxu0 0.0
    %301 = vmatpush.msra.mxu0 0.0
    %302 = vmatpush.msra.mxu0 0.0
    %303 = vmatpush.msra.mxu0 0.0
    %304 = vmatpush.msra.mxu0 0.0
    %305 = vmatpush.msra.mxu0 0.0
    %306 = vmatpush.msra.mxu0 0.0
    %307 = vmatpush.msra.mxu0 0.0
    %308 = vmatpush.msra.mxu0 0.0
    %309 = vmatpush.msra.mxu0 %v99
    %310 = vmatpush.msra.mxu0 %v98
    %311 = vmatpush.msra.mxu0 %v97
    %312 = vmatpush.msra.mxu0 %v96
    %313 = vmatmul.f32.gmra.mxu0 %v233
    %v314 = vpop.f32.mrf.mxu0
    %v315 = vadd.f32 %v295, %v314
    %316 = vdwg.mxu0
    %v318 = vrot.slane %v315, 1
    %v320 = vadd.f32 %v227, %v318
    %v321 = vxor.u32 %v320, 2147483648
    %v322 = vmul.f32 %v321, 1.442695
    %v323 = vpow.pop %v322
    %v324 = vadd.f32 %v323, 1.0
    %v325 = vrcp.pop %v324
    %v326 = vmul.f32 %v324, %v325
    %v327 = vsub.f32 1.0, %v326
    %v328 = vmul.f32 %v325, %v327
    %v329 = vadd.f32 %v325, %v328
    %vm330 = vweird.f32 %v324
    %vm331 = vweird.f32 %v325
    %vm332 = vmor %vm330, %vm331
    %v333 = vsel %vm332, %v325, %v329
    %v334 = vand.u32 2147483647, %v324
    %vm335 = vcmp.eq.f32.partialorder %v334, 8.507059e+37
    %v336 = vand.u32 %v324, 2147483648
    %v337 = vor.u32 1.1754944e-38, %v336
    %v338 = vsel %vm335, %v337, %v333
    %v339 = vmul.f32 1.0, %v338
    %340 = vrot.lane.b32.xlu0 %v318, 64
    %v341 = vpop.permute.xlu0 %340
    %v343 = vmul.f32 %v339, %v341
    %345 = vrot.lane.b32.xlu0 %v343, 64
    %v346 = vpop.permute.xlu0 %345
    %v348 = vadd.f32 %v227, %v346
    %v349 = vtanh.pop %v348
    %v350 = vsub.f32 1.0, %v339
    %352 = vrot.lane.b32.xlu0 %v349, 96
    %v353 = vpop.permute.xlu0 %352
    %v355 = vmul.f32 %v350, %v353
    %v356 = vmul.f32 %v339, 0.0
    %v357 = vadd.f32 %v355, %v356
    %359 = vrot.lane.b32.xlu0 %v293, 96
    %v360 = vpop.permute.xlu0 %359
    %v361 = vsel %vm184, %v360, 0
    %363 = vmatpush.msra.mxu0 0.0
    %364 = vmatpush.msra.mxu0 0.0
    %365 = vmatpush.msra.mxu0 0.0
    %366 = vmatpush.msra.mxu0 0.0
    %367 = vmatpush.msra.mxu0 0.0
    %368 = vmatpush.msra.mxu0 0.0
    %369 = vmatpush.msra.mxu0 0.0
    %370 = vmatpush.msra.mxu0 0.0
    %371 = vmatpush.msra.mxu0 0.0
    %372 = vmatpush.msra.mxu0 0.0
    %373 = vmatpush.msra.mxu0 0.0
    %374 = vmatpush.msra.mxu0 0.0
    %375 = vmatpush.msra.mxu0 %v90
    %376 = vmatpush.msra.mxu0 %v89
    %377 = vmatpush.msra.mxu0 %v88
    %378 = vmatpush.msra.mxu0 %v87
    %379 = vmatmul.f32.gmra.mxu0 %v361
    %v380 = vpop.f32.mrf.mxu0
    %v381 = vadd.f32 %v230, %v380
    %382 = vdwg.mxu0
    %v384 = vrot.slane %v381, 7
    %v386 = vadd.f32 %v206, %v384
    %v387 = vxor.u32 %v386, 2147483648
    %v388 = vmul.f32 %v387, 1.442695
    %v389 = vpow.pop %v388
    %v390 = vadd.f32 %v389, 1.0
    %v391 = vrcp.pop %v390
    %v392 = vmul.f32 %v390, %v391
    %v393 = vsub.f32 1.0, %v392
    %v394 = vmul.f32 %v391, %v393
    %v395 = vadd.f32 %v391, %v394
    %vm396 = vweird.f32 %v390
    %vm397 = vweird.f32 %v391
    %vm398 = vmor %vm396, %vm397
    %v399 = vsel %vm398, %v391, %v395
    %v400 = vand.u32 2147483647, %v390
    %vm401 = vcmp.eq.f32.partialorder %v400, 8.507059e+37
    %v402 = vand.u32 %v390, 2147483648
    %v403 = vor.u32 1.1754944e-38, %v402
    %v404 = vsel %vm401, %v403, %v399
    %v405 = vmul.f32 1.0, %v404
    %406 = vrot.lane.b32.xlu0 %v384, 64
    %v407 = vpop.permute.xlu0 %406
    %v409 = vmul.f32 %v405, %v407
    %411 = vrot.lane.b32.xlu0 %v409, 64
    %v412 = vpop.permute.xlu0 %411
    %v414 = vadd.f32 %v206, %v412
    %v415 = vtanh.pop %v414
    %v416 = vsub.f32 1.0, %v405
    %418 = vrot.lane.b32.xlu0 %v415, 96
    %v419 = vpop.permute.xlu0 %418
    %v421 = vmul.f32 %v416, %v419
    %v422 = vrot.slane %v293, 7
    %v424 = vmul.f32 %v405, %v422
    %v425 = vadd.f32 %v421, %v424
    %v427 = vrot.slane %v357, 7
    %428 = vrot.lane.b32.xlu0 %v427, 96
    %v429 = vpop.permute.xlu0 %428
    %v430 = vsel %vm184, %v429, 0
    %432 = vmatpush.msra.mxu0 0.0
    %433 = vmatpush.msra.mxu0 0.0
    %434 = vmatpush.msra.mxu0 0.0
    %435 = vmatpush.msra.mxu0 0.0
    %436 = vmatpush.msra.mxu0 0.0
    %437 = vmatpush.msra.mxu0 0.0
    %438 = vmatpush.msra.mxu0 0.0
    %439 = vmatpush.msra.mxu0 0.0
    %440 = vmatpush.msra.mxu0 0.0
    %441 = vmatpush.msra.mxu0 0.0
    %442 = vmatpush.msra.mxu0 0.0
    %443 = vmatpush.msra.mxu0 0.0
    %444 = vmatpush.msra.mxu0 %v99
    %445 = vmatpush.msra.mxu0 %v98
    %446 = vmatpush.msra.mxu0 %v97
    %447 = vmatpush.msra.mxu0 %v96
    %448 = vmatmul.f32.gmra.mxu0 %v430
    %v449 = vpop.f32.mrf.mxu0
    %v450 = vadd.f32 %v295, %v449
    %451 = vdwg.mxu0
    %v453 = vrot.slane %v450, 2
    %v455 = vadd.f32 %v227, %v453
    %v456 = vxor.u32 %v455, 2147483648
    %v457 = vmul.f32 %v456, 1.442695
    %v458 = vpow.pop %v457
    %v459 = vadd.f32 %v458, 1.0
    %v460 = vrcp.pop %v459
    %v461 = vmul.f32 %v459, %v460
    %v462 = vsub.f32 1.0, %v461
    %v463 = vmul.f32 %v460, %v462
    %v464 = vadd.f32 %v460, %v463
    %vm465 = vweird.f32 %v459
    %vm466 = vweird.f32 %v460
    %vm467 = vmor %vm465, %vm466
    %v468 = vsel %vm467, %v460, %v464
    %v469 = vand.u32 2147483647, %v459
    %vm470 = vcmp.eq.f32.partialorder %v469, 8.507059e+37
    %v471 = vand.u32 %v459, 2147483648
    %v472 = vor.u32 1.1754944e-38, %v471
    %v473 = vsel %vm470, %v472, %v468
    %v474 = vmul.f32 1.0, %v473
    %475 = vrot.lane.b32.xlu0 %v453, 64
    %v476 = vpop.permute.xlu0 %475
    %v478 = vmul.f32 %v474, %v476
    %480 = vrot.lane.b32.xlu0 %v478, 64
    %v481 = vpop.permute.xlu0 %480
    %v483 = vadd.f32 %v227, %v481
    %v484 = vtanh.pop %v483
    %v485 = vsub.f32 1.0, %v474
    %487 = vrot.lane.b32.xlu0 %v484, 96
    %v488 = vpop.permute.xlu0 %487
    %v490 = vmul.f32 %v485, %v488
    %v491 = vrot.slane %v357, 1
    %v493 = vmul.f32 %v474, %v491
    %v494 = vadd.f32 %v490, %v493
    %v496 = vrot.slane %v425, 1
    %497 = vrot.lane.b32.xlu0 %v496, 96
    %v498 = vpop.permute.xlu0 %497
    %v499 = vsel %vm184, %v498, 0
    %501 = vmatpush.msra.mxu0 0.0
    %502 = vmatpush.msra.mxu0 0.0
    %503 = vmatpush.msra.mxu0 0.0
    %504 = vmatpush.msra.mxu0 0.0
    %505 = vmatpush.msra.mxu0 0.0
    %506 = vmatpush.msra.mxu0 0.0
    %507 = vmatpush.msra.mxu0 0.0
    %508 = vmatpush.msra.mxu0 0.0
    %509 = vmatpush.msra.mxu0 0.0
    %510 = vmatpush.msra.mxu0 0.0
    %511 = vmatpush.msra.mxu0 0.0
    %512 = vmatpush.msra.mxu0 0.0
    %513 = vmatpush.msra.mxu0 %v90
    %514 = vmatpush.msra.mxu0 %v89
    %515 = vmatpush.msra.mxu0 %v88
    %516 = vmatpush.msra.mxu0 %v87
    %517 = vmatmul.f32.gmra.mxu0 %v499
    %v518 = vpop.f32.mrf.mxu0
    %v519 = vadd.f32 %v230, %v518
    %520 = vdwg.mxu0
    %v522 = vrot.slane %v519, 6
    %v524 = vadd.f32 %v206, %v522
    %v525 = vxor.u32 %v524, 2147483648
    %v526 = vmul.f32 %v525, 1.442695
    %v527 = vpow.pop %v526
    %v528 = vadd.f32 %v527, 1.0
    %v529 = vrcp.pop %v528
    %v530 = vmul.f32 %v528, %v529
    %v531 = vsub.f32 1.0, %v530
    %v532 = vmul.f32 %v529, %v531
    %v533 = vadd.f32 %v529, %v532
    %vm534 = vweird.f32 %v528
    %vm535 = vweird.f32 %v529
    %vm536 = vmor %vm534, %vm535
    %v537 = vsel %vm536, %v529, %v533
    %v538 = vand.u32 2147483647, %v528
    %vm539 = vcmp.eq.f32.partialorder %v538, 8.507059e+37
    %v540 = vand.u32 %v528, 2147483648
    %v541 = vor.u32 1.1754944e-38, %v540
    %v542 = vsel %vm539, %v541, %v537
    %v543 = vmul.f32 1.0, %v542
    %544 = vrot.lane.b32.xlu0 %v522, 64
    %v545 = vpop.permute.xlu0 %544
    %v547 = vmul.f32 %v543, %v545
    %549 = vrot.lane.b32.xlu0 %v547, 64
    %v550 = vpop.permute.xlu0 %549
    %v552 = vadd.f32 %v206, %v550
    %v553 = vtanh.pop %v552
    %v554 = vsub.f32 1.0, %v543
    %556 = vrot.lane.b32.xlu0 %v553, 96
    %v557 = vpop.permute.xlu0 %556
    %v559 = vmul.f32 %v554, %v557
    %v560 = vrot.slane %v425, 7
    %v562 = vmul.f32 %v543, %v560
    %v563 = vadd.f32 %v559, %v562
    %v565 = vrot.slane %v494, 6
    %566 = vrot.lane.b32.xlu0 %v565, 96
    %v567 = vpop.permute.xlu0 %566
    %v568 = vsel %vm184, %v567, 0
    %570 = vmatpush.msra.mxu0 0.0
    %571 = vmatpush.msra.mxu0 0.0
    %572 = vmatpush.msra.mxu0 0.0
    %573 = vmatpush.msra.mxu0 0.0
    %574 = vmatpush.msra.mxu0 0.0
    %575 = vmatpush.msra.mxu0 0.0
    %576 = vmatpush.msra.mxu0 0.0
    %577 = vmatpush.msra.mxu0 0.0
    %578 = vmatpush.msra.mxu0 0.0
    %579 = vmatpush.msra.mxu0 0.0
    %580 = vmatpush.msra.mxu0 0.0
    %581 = vmatpush.msra.mxu0 0.0
    %582 = vmatpush.msra.mxu0 %v99
    %583 = vmatpush.msra.mxu0 %v98
    %584 = vmatpush.msra.mxu0 %v97
    %585 = vmatpush.msra.mxu0 %v96
    %586 = vmatmul.f32.gmra.mxu0 %v568
    %v587 = vpop.f32.mrf.mxu0
    %v588 = vadd.f32 %v295, %v587
    %589 = vdwg.mxu0
    %v591 = vrot.slane %v588, 3
    %v593 = vadd.f32 %v227, %v591
    %v594 = vxor.u32 %v593, 2147483648
    %v595 = vmul.f32 %v594, 1.442695
    %v596 = vpow.pop %v595
    %v597 = vadd.f32 %v596, 1.0
    %v598 = vrcp.pop %v597
    %v599 = vmul.f32 %v597, %v598
    %v600 = vsub.f32 1.0, %v599
    %v601 = vmul.f32 %v598, %v600
    %v602 = vadd.f32 %v598, %v601
    %vm603 = vweird.f32 %v597
    %vm604 = vweird.f32 %v598
    %vm605 = vmor %vm603, %vm604
    %v606 = vsel %vm605, %v598, %v602
    %v607 = vand.u32 2147483647, %v597
    %vm608 = vcmp.eq.f32.partialorder %v607, 8.507059e+37
    %v609 = vand.u32 %v597, 2147483648
    %v610 = vor.u32 1.1754944e-38, %v609
    %v611 = vsel %vm608, %v610, %v606
    %v612 = vmul.f32 1.0, %v611
    %613 = vrot.lane.b32.xlu0 %v591, 64
    %v614 = vpop.permute.xlu0 %613
    %v616 = vmul.f32 %v612, %v614
    %618 = vrot.lane.b32.xlu0 %v616, 64
    %v619 = vpop.permute.xlu0 %618
    %v621 = vadd.f32 %v227, %v619
    %v622 = vtanh.pop %v621
    %v623 = vsub.f32 1.0, %v612
    %625 = vrot.lane.b32.xlu0 %v622, 96
    %v626 = vpop.permute.xlu0 %625
    %v628 = vmul.f32 %v623, %v626
    %v629 = vrot.slane %v494, 1
    %v631 = vmul.f32 %v612, %v629
    %v632 = vadd.f32 %v628, %v631
    %v634 = vrot.slane %v563, 2
    %635 = vrot.lane.b32.xlu0 %v634, 96
    %v636 = vpop.permute.xlu0 %635
    %v637 = vsel %vm184, %v636, 0
    %639 = vmatpush.msra.mxu0 0.0
    %640 = vmatpush.msra.mxu0 0.0
    %641 = vmatpush.msra.mxu0 0.0
    %642 = vmatpush.msra.mxu0 0.0
    %643 = vmatpush.msra.mxu0 0.0
    %644 = vmatpush.msra.mxu0 0.0
    %645 = vmatpush.msra.mxu0 0.0
    %646 = vmatpush.msra.mxu0 0.0
    %647 = vmatpush.msra.mxu0 0.0
    %648 = vmatpush.msra.mxu0 0.0
    %649 = vmatpush.msra.mxu0 0.0
    %650 = vmatpush.msra.mxu0 0.0
    %651 = vmatpush.msra.mxu0 %v90
    %652 = vmatpush.msra.mxu0 %v89
    %653 = vmatpush.msra.mxu0 %v88
    %654 = vmatpush.msra.mxu0 %v87
    %655 = vmatmul.f32.gmra.mxu0 %v637
    %v656 = vpop.f32.mrf.mxu0
    %v657 = vadd.f32 %v230, %v656
    %658 = vdwg.mxu0
    %v660 = vrot.slane %v657, 5
    %v662 = vadd.f32 %v206, %v660
    %v663 = vxor.u32 %v662, 2147483648
    %v664 = vmul.f32 %v663, 1.442695
    %v665 = vpow.pop %v664
    %v666 = vadd.f32 %v665, 1.0
    %v667 = vrcp.pop %v666
    %v668 = vmul.f32 %v666, %v667
    %v669 = vsub.f32 1.0, %v668
    %v670 = vmul.f32 %v667, %v669
    %v671 = vadd.f32 %v667, %v670
    %vm672 = vweird.f32 %v666
    %vm673 = vweird.f32 %v667
    %vm674 = vmor %vm672, %vm673
    %v675 = vsel %vm674, %v667, %v671
    %v676 = vand.u32 2147483647, %v666
    %vm677 = vcmp.eq.f32.partialorder %v676, 8.507059e+37
    %v678 = vand.u32 %v666, 2147483648
    %v679 = vor.u32 1.1754944e-38, %v678
    %v680 = vsel %vm677, %v679, %v675
    %v681 = vmul.f32 1.0, %v680
    %682 = vrot.lane.b32.xlu0 %v660, 64
    %v683 = vpop.permute.xlu0 %682
    %v685 = vmul.f32 %v681, %v683
    %687 = vrot.lane.b32.xlu0 %v685, 64
    %v688 = vpop.permute.xlu0 %687
    %v690 = vadd.f32 %v206, %v688
    %v691 = vtanh.pop %v690
    %v692 = vsub.f32 1.0, %v681
    %694 = vrot.lane.b32.xlu0 %v691, 96
    %v695 = vpop.permute.xlu0 %694
    %v697 = vmul.f32 %v692, %v695
    %v698 = vrot.slane %v563, 7
    %v700 = vmul.f32 %v681, %v698
    %v701 = vadd.f32 %v697, %v700
    %v703 = vrot.slane %v632, 5
    %704 = vrot.lane.b32.xlu0 %v703, 96
    %v705 = vpop.permute.xlu0 %704
    %v706 = vsel %vm184, %v705, 0
    %708 = vmatpush.msra.mxu0 0.0
    %709 = vmatpush.msra.mxu0 0.0
    %710 = vmatpush.msra.mxu0 0.0
    %711 = vmatpush.msra.mxu0 0.0
    %712 = vmatpush.msra.mxu0 0.0
    %713 = vmatpush.msra.mxu0 0.0
    %714 = vmatpush.msra.mxu0 0.0
    %715 = vmatpush.msra.mxu0 0.0
    %716 = vmatpush.msra.mxu0 0.0
    %717 = vmatpush.msra.mxu0 0.0
    %718 = vmatpush.msra.mxu0 0.0
    %719 = vmatpush.msra.mxu0 0.0
    %720 = vmatpush.msra.mxu0 %v99
    %721 = vmatpush.msra.mxu0 %v98
    %722 = vmatpush.msra.mxu0 %v97
    %723 = vmatpush.msra.mxu0 %v96
    %724 = vmatmul.f32.gmra.mxu0 %v706
    %v725 = vpop.f32.mrf.mxu0
    %v726 = vadd.f32 %v295, %v725
    %727 = vdwg.mxu0
    %v729 = vrot.slane %v726, 4
    %v731 = vadd.f32 %v227, %v729
    %v732 = vxor.u32 %v731, 2147483648
    %v733 = vmul.f32 %v732, 1.442695
    %v734 = vpow.pop %v733
    %v735 = vadd.f32 %v734, 1.0
    %v736 = vrcp.pop %v735
    %v737 = vmul.f32 %v735, %v736
    %v738 = vsub.f32 1.0, %v737
    %v739 = vmul.f32 %v736, %v738
    %v740 = vadd.f32 %v736, %v739
    %vm741 = vweird.f32 %v735
    %vm742 = vweird.f32 %v736
    %vm743 = vmor %vm741, %vm742
    %v744 = vsel %vm743, %v736, %v740
    %v745 = vand.u32 2147483647, %v735
    %vm746 = vcmp.eq.f32.partialorder %v745, 8.507059e+37
    %v747 = vand.u32 %v735, 2147483648
    %v748 = vor.u32 1.1754944e-38, %v747
    %v749 = vsel %vm746, %v748, %v744
    %v750 = vmul.f32 1.0, %v749
    %751 = vrot.lane.b32.xlu0 %v729, 64
    %v752 = vpop.permute.xlu0 %751
    %v754 = vmul.f32 %v750, %v752
    %756 = vrot.lane.b32.xlu0 %v754, 64
    %v757 = vpop.permute.xlu0 %756
    %v759 = vadd.f32 %v227, %v757
    %v760 = vtanh.pop %v759
    %v761 = vsub.f32 1.0, %v750
    %763 = vrot.lane.b32.xlu0 %v760, 96
    %v764 = vpop.permute.xlu0 %763
    %v766 = vmul.f32 %v761, %v764
    %v767 = vrot.slane %v632, 1
    %v769 = vmul.f32 %v750, %v767
    %v770 = vadd.f32 %v766, %v769
    %v772 = vrot.slane %v701, 3
    %773 = vrot.lane.b32.xlu0 %v772, 96
    %v774 = vpop.permute.xlu0 %773
    %v775 = vsel %vm184, %v774, 0
    %777 = vmatpush.msra.mxu0 0.0
    %778 = vmatpush.msra.mxu0 0.0
    %779 = vmatpush.msra.mxu0 0.0
    %780 = vmatpush.msra.mxu0 0.0
    %781 = vmatpush.msra.mxu0 0.0
    %782 = vmatpush.msra.mxu0 0.0
    %783 = vmatpush.msra.mxu0 0.0
    %784 = vmatpush.msra.mxu0 0.0
    %785 = vmatpush.msra.mxu0 0.0
    %786 = vmatpush.msra.mxu0 0.0
    %787 = vmatpush.msra.mxu0 0.0
    %788 = vmatpush.msra.mxu0 0.0
    %789 = vmatpush.msra.mxu0 %v90
    %790 = vmatpush.msra.mxu0 %v89
    %791 = vmatpush.msra.mxu0 %v88
    %792 = vmatpush.msra.mxu0 %v87
    %793 = vmatmul.f32.gmra.mxu0 %v775
    %v794 = vpop.f32.mrf.mxu0
    %v795 = vadd.f32 %v230, %v794
    %796 = vdwg.mxu0
    %v798 = vrot.slane %v795, 4
    %v800 = vadd.f32 %v206, %v798
    %v801 = vxor.u32 %v800, 2147483648
    %v802 = vmul.f32 %v801, 1.442695
    %v803 = vpow.pop %v802
    %v804 = vadd.f32 %v803, 1.0
    %v805 = vrcp.pop %v804
    %v806 = vmul.f32 %v804, %v805
    %v807 = vsub.f32 1.0, %v806
    %v808 = vmul.f32 %v805, %v807
    %v809 = vadd.f32 %v805, %v808
    %vm810 = vweird.f32 %v804
    %vm811 = vweird.f32 %v805
    %vm812 = vmor %vm810, %vm811
    %v813 = vsel %vm812, %v805, %v809
    %v814 = vand.u32 2147483647, %v804
    %vm815 = vcmp.eq.f32.partialorder %v814, 8.507059e+37
    %v816 = vand.u32 %v804, 2147483648
    %v817 = vor.u32 1.1754944e-38, %v816
    %v818 = vsel %vm815, %v817, %v813
    %v819 = vmul.f32 1.0, %v818
    %820 = vrot.lane.b32.xlu0 %v798, 64
    %v821 = vpop.permute.xlu0 %820
    %v823 = vmul.f32 %v819, %v821
    %825 = vrot.lane.b32.xlu0 %v823, 64
    %v826 = vpop.permute.xlu0 %825
    %v828 = vadd.f32 %v206, %v826
    %v829 = vtanh.pop %v828
    %v830 = vsub.f32 1.0, %v819
    %832 = vrot.lane.b32.xlu0 %v829, 96
    %v833 = vpop.permute.xlu0 %832
    %v835 = vmul.f32 %v830, %v833
    %v836 = vrot.slane %v701, 7
    %v838 = vmul.f32 %v819, %v836
    %v839 = vadd.f32 %v835, %v838
    %v841 = vrot.slane %v770, 4
    %842 = vrot.lane.b32.xlu0 %v841, 96
    %v843 = vpop.permute.xlu0 %842
    %v844 = vsel %vm184, %v843, 0
    %846 = vmatpush.msra.mxu0 0.0
    %847 = vmatpush.msra.mxu0 0.0
    %848 = vmatpush.msra.mxu0 0.0
    %849 = vmatpush.msra.mxu0 0.0
    %850 = vmatpush.msra.mxu0 0.0
    %851 = vmatpush.msra.mxu0 0.0
    %852 = vmatpush.msra.mxu0 0.0
    %853 = vmatpush.msra.mxu0 0.0
    %854 = vmatpush.msra.mxu0 0.0
    %855 = vmatpush.msra.mxu0 0.0
    %856 = vmatpush.msra.mxu0 0.0
    %857 = vmatpush.msra.mxu0 0.0
    %858 = vmatpush.msra.mxu0 %v99
    %859 = vmatpush.msra.mxu0 %v98
    %860 = vmatpush.msra.mxu0 %v97
    %861 = vmatpush.msra.mxu0 %v96
    %862 = vmatmul.f32.gmra.mxu0 %v844
    %v863 = vpop.f32.mrf.mxu0
    %v864 = vadd.f32 %v295, %v863
    %865 = vdwg.mxu0
    %v867 = vrot.slane %v864, 5
    %v869 = vadd.f32 %v227, %v867
    %v870 = vxor.u32 %v869, 2147483648
    %v871 = vmul.f32 %v870, 1.442695
    %v872 = vpow.pop %v871
    %v873 = vadd.f32 %v872, 1.0
    %v874 = vrcp.pop %v873
    %v875 = vmul.f32 %v873, %v874
    %v876 = vsub.f32 1.0, %v875
    %v877 = vmul.f32 %v874, %v876
    %v878 = vadd.f32 %v874, %v877
    %vm879 = vweird.f32 %v873
    %vm880 = vweird.f32 %v874
    %vm881 = vmor %vm879, %vm880
    %v882 = vsel %vm881, %v874, %v878
    %v883 = vand.u32 2147483647, %v873
    %vm884 = vcmp.eq.f32.partialorder %v883, 8.507059e+37
    %v885 = vand.u32 %v873, 2147483648
    %v886 = vor.u32 1.1754944e-38, %v885
    %v887 = vsel %vm884, %v886, %v882
    %v888 = vmul.f32 1.0, %v887
    %889 = vrot.lane.b32.xlu0 %v867, 64
    %v890 = vpop.permute.xlu0 %889
    %v892 = vmul.f32 %v888, %v890
    %894 = vrot.lane.b32.xlu0 %v892, 64
    %v895 = vpop.permute.xlu0 %894
    %v897 = vadd.f32 %v227, %v895
    %v898 = vtanh.pop %v897
    %v899 = vsub.f32 1.0, %v888
    %901 = vrot.lane.b32.xlu0 %v898, 96
    %v902 = vpop.permute.xlu0 %901
    %v904 = vmul.f32 %v899, %v902
    %v905 = vrot.slane %v770, 1
    %v907 = vmul.f32 %v888, %v905
    %v908 = vadd.f32 %v904, %v907
    %v910 = vrot.slane %v839, 4
    %911 = vrot.lane.b32.xlu0 %v910, 96
    %v912 = vpop.permute.xlu0 %911
    %v913 = vsel %vm184, %v912, 0
    %915 = vmatpush.msra.mxu0 0.0
    %916 = vmatpush.msra.mxu0 0.0
    %917 = vmatpush.msra.mxu0 0.0
    %918 = vmatpush.msra.mxu0 0.0
    %919 = vmatpush.msra.mxu0 0.0
    %920 = vmatpush.msra.mxu0 0.0
    %921 = vmatpush.msra.mxu0 0.0
    %922 = vmatpush.msra.mxu0 0.0
    %923 = vmatpush.msra.mxu0 0.0
    %924 = vmatpush.msra.mxu0 0.0
    %925 = vmatpush.msra.mxu0 0.0
    %926 = vmatpush.msra.mxu0 0.0
    %927 = vmatpush.msra.mxu0 %v90
    %928 = vmatpush.msra.mxu0 %v89
    %929 = vmatpush.msra.mxu0 %v88
    %930 = vmatpush.msra.mxu0 %v87
    %931 = vmatmul.f32.gmra.mxu0 %v913
    %v932 = vpop.f32.mrf.mxu0
    %v933 = vadd.f32 %v230, %v932
    %934 = vdwg.mxu0
    %v936 = vrot.slane %v933, 3
    %v938 = vadd.f32 %v206, %v936
    %v939 = vxor.u32 %v938, 2147483648
    %v940 = vmul.f32 %v939, 1.442695
    %v941 = vpow.pop %v940
    %v942 = vadd.f32 %v941, 1.0
    %v943 = vrcp.pop %v942
    %v944 = vmul.f32 %v942, %v943
    %v945 = vsub.f32 1.0, %v944
    %v946 = vmul.f32 %v943, %v945
    %v947 = vadd.f32 %v943, %v946
    %vm948 = vweird.f32 %v942
    %vm949 = vweird.f32 %v943
    %vm950 = vmor %vm948, %vm949
    %v951 = vsel %vm950, %v943, %v947
    %v952 = vand.u32 2147483647, %v942
    %vm953 = vcmp.eq.f32.partialorder %v952, 8.507059e+37
    %v954 = vand.u32 %v942, 2147483648
    %v955 = vor.u32 1.1754944e-38, %v954
    %v956 = vsel %vm953, %v955, %v951
    %v957 = vmul.f32 1.0, %v956
    %958 = vrot.lane.b32.xlu0 %v936, 64
    %v959 = vpop.permute.xlu0 %958
    %v961 = vmul.f32 %v957, %v959
    %963 = vrot.lane.b32.xlu0 %v961, 64
    %v964 = vpop.permute.xlu0 %963
    %v966 = vadd.f32 %v206, %v964
    %v967 = vtanh.pop %v966
    %v968 = vsub.f32 1.0, %v957
    %970 = vrot.lane.b32.xlu0 %v967, 96
    %v971 = vpop.permute.xlu0 %970
    %v973 = vmul.f32 %v968, %v971
    %v974 = vrot.slane %v839, 7
    %v976 = vmul.f32 %v957, %v974
    %v977 = vadd.f32 %v973, %v976
    %v979 = vrot.slane %v908, 3
    %980 = vrot.lane.b32.xlu0 %v979, 96
    %v981 = vpop.permute.xlu0 %980
    %v982 = vsel %vm184, %v981, 0
    %984 = vmatpush.msra.mxu0 0.0
    %985 = vmatpush.msra.mxu0 0.0
    %986 = vmatpush.msra.mxu0 0.0
    %987 = vmatpush.msra.mxu0 0.0
    %988 = vmatpush.msra.mxu0 0.0
    %989 = vmatpush.msra.mxu0 0.0
    %990 = vmatpush.msra.mxu0 0.0
    %991 = vmatpush.msra.mxu0 0.0
    %992 = vmatpush.msra.mxu0 0.0
    %993 = vmatpush.msra.mxu0 0.0
    %994 = vmatpush.msra.mxu0 0.0
    %995 = vmatpush.msra.mxu0 0.0
    %996 = vmatpush.msra.mxu0 %v99
    %997 = vmatpush.msra.mxu0 %v98
    %998 = vmatpush.msra.mxu0 %v97
    %999 = vmatpush.msra.mxu0 %v96
    %1000 = vmatmul.f32.gmra.mxu0 %v982
    %v1001 = vpop.f32.mrf.mxu0
    %v1002 = vadd.f32 %v295, %v1001
    %1003 = vdwg.mxu0
    %v1005 = vrot.slane %v1002, 6
    %v1007 = vadd.f32 %v227, %v1005
    %v1008 = vxor.u32 %v1007, 2147483648
    %v1009 = vmul.f32 %v1008, 1.442695
    %v1010 = vpow.pop %v1009
    %v1011 = vadd.f32 %v1010, 1.0
    %v1012 = vrcp.pop %v1011
    %v1013 = vmul.f32 %v1011, %v1012
    %v1014 = vsub.f32 1.0, %v1013
    %v1015 = vmul.f32 %v1012, %v1014
    %v1016 = vadd.f32 %v1012, %v1015
    %vm1017 = vweird.f32 %v1011
    %vm1018 = vweird.f32 %v1012
    %vm1019 = vmor %vm1017, %vm1018
    %v1020 = vsel %vm1019, %v1012, %v1016
    %v1021 = vand.u32 2147483647, %v1011
    %vm1022 = vcmp.eq.f32.partialorder %v1021, 8.507059e+37
    %v1023 = vand.u32 %v1011, 2147483648
    %v1024 = vor.u32 1.1754944e-38, %v1023
    %v1025 = vsel %vm1022, %v1024, %v1020
    %v1026 = vmul.f32 1.0, %v1025
    %1027 = vrot.lane.b32.xlu0 %v1005, 64
    %v1028 = vpop.permute.xlu0 %1027
    %v1030 = vmul.f32 %v1026, %v1028
    %1032 = vrot.lane.b32.xlu0 %v1030, 64
    %v1033 = vpop.permute.xlu0 %1032
    %v1035 = vadd.f32 %v227, %v1033
    %v1036 = vtanh.pop %v1035
    %v1037 = vsub.f32 1.0, %v1026
    %1039 = vrot.lane.b32.xlu0 %v1036, 96
    %v1040 = vpop.permute.xlu0 %1039
    %v1042 = vmul.f32 %v1037, %v1040
    %v1043 = vrot.slane %v908, 1
    %v1045 = vmul.f32 %v1026, %v1043
    %v1046 = vadd.f32 %v1042, %v1045
    %v1048 = vrot.slane %v977, 5
    %1049 = vrot.lane.b32.xlu0 %v1048, 96
    %v1050 = vpop.permute.xlu0 %1049
    %v1051 = vsel %vm184, %v1050, 0
    %1053 = vmatpush.msra.mxu0 0.0
    %1054 = vmatpush.msra.mxu0 0.0
    %1055 = vmatpush.msra.mxu0 0.0
    %1056 = vmatpush.msra.mxu0 0.0
    %1057 = vmatpush.msra.mxu0 0.0
    %1058 = vmatpush.msra.mxu0 0.0
    %1059 = vmatpush.msra.mxu0 0.0
    %1060 = vmatpush.msra.mxu0 0.0
    %1061 = vmatpush.msra.mxu0 0.0
    %1062 = vmatpush.msra.mxu0 0.0
    %1063 = vmatpush.msra.mxu0 0.0
    %1064 = vmatpush.msra.mxu0 0.0
    %1065 = vmatpush.msra.mxu0 %v90
    %1066 = vmatpush.msra.mxu0 %v89
    %1067 = vmatpush.msra.mxu0 %v88
    %1068 = vmatpush.msra.mxu0 %v87
    %1069 = vmatmul.f32.gmra.mxu0 %v1051
    %v1070 = vpop.f32.mrf.mxu0
    %v1071 = vadd.f32 %v230, %v1070
    %1072 = vdwg.mxu0
    %v1074 = vrot.slane %v1071, 2
    %v1076 = vadd.f32 %v206, %v1074
    %v1077 = vxor.u32 %v1076, 2147483648
    %v1078 = vmul.f32 %v1077, 1.442695
    %v1079 = vpow.pop %v1078
    %v1080 = vadd.f32 %v1079, 1.0
    %v1081 = vrcp.pop %v1080
    %v1082 = vmul.f32 %v1080, %v1081
    %v1083 = vsub.f32 1.0, %v1082
    %v1084 = vmul.f32 %v1081, %v1083
    %v1085 = vadd.f32 %v1081, %v1084
    %vm1086 = vweird.f32 %v1080
    %vm1087 = vweird.f32 %v1081
    %vm1088 = vmor %vm1086, %vm1087
    %v1089 = vsel %vm1088, %v1081, %v1085
    %v1090 = vand.u32 2147483647, %v1080
    %vm1091 = vcmp.eq.f32.partialorder %v1090, 8.507059e+37
    %v1092 = vand.u32 %v1080, 2147483648
    %v1093 = vor.u32 1.1754944e-38, %v1092
    %v1094 = vsel %vm1091, %v1093, %v1089
    %v1095 = vmul.f32 1.0, %v1094
    %1096 = vrot.lane.b32.xlu0 %v1074, 64
    %v1097 = vpop.permute.xlu0 %1096
    %v1099 = vmul.f32 %v1095, %v1097
    %1101 = vrot.lane.b32.xlu0 %v1099, 64
    %v1102 = vpop.permute.xlu0 %1101
    %v1104 = vadd.f32 %v206, %v1102
    %v1105 = vtanh.pop %v1104
    %v1106 = vsub.f32 1.0, %v1095
    %1108 = vrot.lane.b32.xlu0 %v1105, 96
    %v1109 = vpop.permute.xlu0 %1108
    %v1111 = vmul.f32 %v1106, %v1109
    %v1112 = vrot.slane %v977, 7
    %v1114 = vmul.f32 %v1095, %v1112
    %v1115 = vadd.f32 %v1111, %v1114
    %v1117 = vrot.slane %v1046, 2
    %1118 = vrot.lane.b32.xlu0 %v1117, 96
    %v1119 = vpop.permute.xlu0 %1118
    %v1120 = vsel %vm184, %v1119, 0
    %1122 = vmatpush.msra.mxu0 0.0
    %1123 = vmatpush.msra.mxu0 0.0
    %1124 = vmatpush.msra.mxu0 0.0
    %1125 = vmatpush.msra.mxu0 0.0
    %1126 = vmatpush.msra.mxu0 0.0
    %1127 = vmatpush.msra.mxu0 0.0
    %1128 = vmatpush.msra.mxu0 0.0
    %1129 = vmatpush.msra.mxu0 0.0
    %1130 = vmatpush.msra.mxu0 0.0
    %1131 = vmatpush.msra.mxu0 0.0
    %1132 = vmatpush.msra.mxu0 0.0
    %1133 = vmatpush.msra.mxu0 0.0
    %1134 = vmatpush.msra.mxu0 %v99
    %1135 = vmatpush.msra.mxu0 %v98
    %1136 = vmatpush.msra.mxu0 %v97
    %1137 = vmatpush.msra.mxu0 %v96
    %1138 = vmatmul.f32.gmra.mxu0 %v1120
    %v1139 = vpop.f32.mrf.mxu0
    %v1140 = vadd.f32 %v295, %v1139
    %1141 = vdwg.mxu0
    %v1143 = vrot.slane %v1140, 7
    %v1145 = vadd.f32 %v227, %v1143
    %v1146 = vxor.u32 %v1145, 2147483648
    %v1147 = vmul.f32 %v1146, 1.442695
    %v1148 = vpow.pop %v1147
    %v1149 = vadd.f32 %v1148, 1.0
    %v1150 = vrcp.pop %v1149
    %v1151 = vmul.f32 %v1149, %v1150
    %v1152 = vsub.f32 1.0, %v1151
    %v1153 = vmul.f32 %v1150, %v1152
    %v1154 = vadd.f32 %v1150, %v1153
    %vm1155 = vweird.f32 %v1149
    %vm1156 = vweird.f32 %v1150
    %vm1157 = vmor %vm1155, %vm1156
    %v1158 = vsel %vm1157, %v1150, %v1154
    %v1159 = vand.u32 2147483647, %v1149
    %vm1160 = vcmp.eq.f32.partialorder %v1159, 8.507059e+37
    %v1161 = vand.u32 %v1149, 2147483648
    %v1162 = vor.u32 1.1754944e-38, %v1161
    %v1163 = vsel %vm1160, %v1162, %v1158
    %v1164 = vmul.f32 1.0, %v1163
    %1165 = vrot.lane.b32.xlu0 %v1143, 64
    %v1166 = vpop.permute.xlu0 %1165
    %v1168 = vmul.f32 %v1164, %v1166
    %1170 = vrot.lane.b32.xlu0 %v1168, 64
    %v1171 = vpop.permute.xlu0 %1170
    %v1173 = vadd.f32 %v227, %v1171
    %v1174 = vtanh.pop %v1173
    %v1175 = vsub.f32 1.0, %v1164
    %1177 = vrot.lane.b32.xlu0 %v1174, 96
    %v1178 = vpop.permute.xlu0 %1177
    %v1180 = vmul.f32 %v1175, %v1178
    %v1181 = vrot.slane %v1046, 1
    %v1183 = vmul.f32 %v1164, %v1181
    %v1184 = vadd.f32 %v1180, %v1183
    %v1186 = vrot.slane %v1115, 6
    %1187 = vrot.lane.b32.xlu0 %v1186, 96
    %v1188 = vpop.permute.xlu0 %1187
    %v1189 = vsel %vm184, %v1188, 0
    %1191 = vmatpush.msra.mxu0 0.0
    %1192 = vmatpush.msra.mxu0 0.0
    %1193 = vmatpush.msra.mxu0 0.0
    %1194 = vmatpush.msra.mxu0 0.0
    %1195 = vmatpush.msra.mxu0 0.0
    %1196 = vmatpush.msra.mxu0 0.0
    %1197 = vmatpush.msra.mxu0 0.0
    %1198 = vmatpush.msra.mxu0 0.0
    %1199 = vmatpush.msra.mxu0 0.0
    %1200 = vmatpush.msra.mxu0 0.0
    %1201 = vmatpush.msra.mxu0 0.0
    %1202 = vmatpush.msra.mxu0 0.0
    %1203 = vmatpush.msra.mxu0 %v90
    %1204 = vmatpush.msra.mxu0 %v89
    %1205 = vmatpush.msra.mxu0 %v88
    %1206 = vmatpush.msra.mxu0 %v87
    %1207 = vmatmul.f32.gmra.mxu0 %v1189
    %v1208 = vpop.f32.mrf.mxu0
    %v1209 = vadd.f32 %v230, %v1208
    %1210 = vdwg.mxu0
    %v1212 = vrot.slane %v1209, 1
    %v1214 = vadd.f32 %v206, %v1212
    %v1215 = vxor.u32 %v1214, 2147483648
    %v1216 = vmul.f32 %v1215, 1.442695
    %v1217 = vpow.pop %v1216
    %v1218 = vadd.f32 %v1217, 1.0
    %v1219 = vrcp.pop %v1218
    %v1220 = vmul.f32 %v1218, %v1219
    %v1221 = vsub.f32 1.0, %v1220
    %v1222 = vmul.f32 %v1219, %v1221
    %v1223 = vadd.f32 %v1219, %v1222
    %vm1224 = vweird.f32 %v1218
    %vm1225 = vweird.f32 %v1219
    %vm1226 = vmor %vm1224, %vm1225
    %v1227 = vsel %vm1226, %v1219, %v1223
    %v1228 = vand.u32 2147483647, %v1218
    %vm1229 = vcmp.eq.f32.partialorder %v1228, 8.507059e+37
    %v1230 = vand.u32 %v1218, 2147483648
    %v1231 = vor.u32 1.1754944e-38, %v1230
    %v1232 = vsel %vm1229, %v1231, %v1227
    %v1233 = vmul.f32 1.0, %v1232
    %1234 = vrot.lane.b32.xlu0 %v1212, 64
    %v1235 = vpop.permute.xlu0 %1234
    %v1237 = vmul.f32 %v1233, %v1235
    %1239 = vrot.lane.b32.xlu0 %v1237, 64
    %v1240 = vpop.permute.xlu0 %1239
    %v1242 = vadd.f32 %v206, %v1240
    %v1243 = vtanh.pop %v1242
    %v1244 = vsub.f32 1.0, %v1233
    %1246 = vrot.lane.b32.xlu0 %v1243, 96
    %v1247 = vpop.permute.xlu0 %1246
    %v1249 = vmul.f32 %v1244, %v1247
    %v1250 = vrot.slane %v1115, 7
    %v1252 = vmul.f32 %v1233, %v1250
    %v1253 = vadd.f32 %v1249, %v1252
    %v1255 = vrot.slane %v1184, 1
    %1256 = vrot.lane.b32.xlu0 %v1255, 96
    %v1257 = vpop.permute.xlu0 %1256
    %v1258 = vsel %vm184, %v1257, 0
    %1260 = vmatpush.msra.mxu0 0.0
    %1261 = vmatpush.msra.mxu0 0.0
    %1262 = vmatpush.msra.mxu0 0.0
    %1263 = vmatpush.msra.mxu0 0.0
    %1264 = vmatpush.msra.mxu0 0.0
    %1265 = vmatpush.msra.mxu0 0.0
    %1266 = vmatpush.msra.mxu0 0.0
    %1267 = vmatpush.msra.mxu0 0.0
    %1268 = vmatpush.msra.mxu0 0.0
    %1269 = vmatpush.msra.mxu0 0.0
    %1270 = vmatpush.msra.mxu0 0.0
    %1271 = vmatpush.msra.mxu0 0.0
    %1272 = vmatpush.msra.mxu0 %v99
    %1273 = vmatpush.msra.mxu0 %v98
    %1274 = vmatpush.msra.mxu0 %v97
    %1275 = vmatpush.msra.mxu0 %v96
    %1276 = vmatmul.f32.gmra.mxu0 %v1258
    %v1277 = vpop.f32.mrf.mxu0
    %v1278 = vadd.f32 %v295, %v1277
    %1279 = vdwg.mxu0
    %v1280 = vadd.f32 %v227, %v1278
    %v1281 = vxor.u32 %v1280, 2147483648
    %v1282 = vmul.f32 %v1281, 1.442695
    %v1283 = vpow.pop %v1282
    %v1284 = vadd.f32 %v1283, 1.0
    %v1285 = vrcp.pop %v1284
    %v1286 = vmul.f32 %v1284, %v1285
    %v1287 = vsub.f32 1.0, %v1286
    %v1288 = vmul.f32 %v1285, %v1287
    %v1289 = vadd.f32 %v1285, %v1288
    %vm1290 = vweird.f32 %v1284
    %vm1291 = vweird.f32 %v1285
    %vm1292 = vmor %vm1290, %vm1291
    %v1293 = vsel %vm1292, %v1285, %v1289
    %v1294 = vand.u32 2147483647, %v1284
    %vm1295 = vcmp.eq.f32.partialorder %v1294, 8.507059e+37
    %v1296 = vand.u32 %v1284, 2147483648
    %v1297 = vor.u32 1.1754944e-38, %v1296
    %v1298 = vsel %vm1295, %v1297, %v1293
    %v1299 = vmul.f32 1.0, %v1298
    %1301 = vrot.lane.b32.xlu0 %v1278, 64
    %v1302 = vpop.permute.xlu0 %1301
    %v1304 = vmul.f32 %v1299, %v1302
    %1306 = vrot.lane.b32.xlu0 %v1304, 64
    %v1307 = vpop.permute.xlu0 %1306
    %v1309 = vadd.f32 %v227, %v1307
    %v1310 = vtanh.pop %v1309
    %v1311 = vsub.f32 1.0, %v1299
    %1313 = vrot.lane.b32.xlu0 %v1310, 96
    %v1314 = vpop.permute.xlu0 %1313
    %v1316 = vmul.f32 %v1311, %v1314
    %v1318 = vmul.f32 %v1299, %v1255
    %v1319 = vadd.f32 %v1316, %v1318
    %v1320 = vsel %vm169, %v293, %v425
    %v1321 = vsel %vm171, %v1320, %v563
    %v1322 = vsel %vm173, %v1321, %v701
    %v1323 = vsel %vm175, %v1322, %v839
    %v1324 = vsel %vm177, %v1323, %v977
    %v1325 = vsel %vm179, %v1324, %v1115
    %v1326 = vsel %vm181, %v1325, %v1253
    %v1327 = vsel %vm169, %v1319, %v1184
    %v1328 = vsel %vm171, %v1327, %v1046
    %v1329 = vsel %vm173, %v1328, %v908
    %v1330 = vsel %vm175, %v1329, %v770
    %v1331 = vsel %vm177, %v1330, %v632
    %v1332 = vsel %vm179, %v1331, %v494
    %v1333 = vsel %vm181, %v1332, %v357
    %v1334 = vadd.f32 %v1326, %v1333
    %v1335 = vlaneseq
    %v1336 = vshrl.u32 %v1335, 7
    %v1337 = vadd.s32 %v1336, 8
    %v1338 = vadd.s32 %v1336, 16
    %v1339 = vadd.s32 %v1336, 24
    %v1340 = vlaneseq
    %v1341 = vand.u32 %v1340, 127
    %vm1342 = vcmp.eq.s32.totalorder %v1336, %v1341
    %vm1343 = vcmp.eq.s32.totalorder %v1337, %v1341
    %vm1344 = vcmp.eq.s32.totalorder %v1338, %v1341
    %vm1345 = vcmp.eq.s32.totalorder %v1339, %v1341
    %v1346 = vsel %vm1342, 1, 0
    %v1347 = vsel %vm1343, 1, 0
    %v1348 = vsel %vm1344, 1, 0
    %v1349 = vsel %vm1345, 1, 0
    %v1350 = vcvt.s32.f32 %v1346
    %v1351 = vcvt.s32.f32 %v1347
    %v1352 = vcvt.s32.f32 %v1348
    %v1353 = vcvt.s32.f32 %v1349
    %1355 = vrot.lane.b32.xlu0 %v1334, 96
    %v1356 = vpop.permute.xlu0 %1355
    %v1358 = vsel %vm184, %v1350, 0
    %v1361 = vsel %vm184, %v1351, 0
    %v1364 = vsel %vm184, %v1352, 0
    %v1367 = vsel %vm184, %v1353, 0
    %v1369 = vsel %vm184, %v1356, 0
    %1371 = vmatpush.xpose.msra.mxu0 0.0
    %1372 = vmatpush.xpose.msra.mxu0 0.0
    %1373 = vmatpush.xpose.msra.mxu0 0.0
    %1374 = vmatpush.xpose.msra.mxu0 0.0
    %1375 = vmatpush.xpose.msra.mxu0 0.0
    %1376 = vmatpush.xpose.msra.mxu0 0.0
    %1377 = vmatpush.xpose.msra.mxu0 0.0
    %1378 = vmatpush.xpose.msra.mxu0 0.0
    %1379 = vmatpush.xpose.msra.mxu0 0.0
    %1380 = vmatpush.xpose.msra.mxu0 0.0
    %1381 = vmatpush.xpose.msra.mxu0 0.0
    %1382 = vmatpush.xpose.msra.mxu0 0.0
    %1383 = vmatpush.xpose.msra.mxu0 0.0
    %1384 = vmatpush.xpose.msra.mxu0 0.0
    %1385 = vmatpush.xpose.msra.mxu0 0.0
    %1386 = vmatpush.xpose.msra.mxu0 %v1369
    %1387 = vmatmul.f32.gmra.mxu0 %v1358
    %v1388 = vpop.f32.mrf.mxu0
    %v1389 = vadd.f32 0.0, %v1388
    %1390 = vmatmul.f32.gmra.mxu0 %v1361
    %v1391 = vpop.f32.mrf.mxu0
    %v1392 = vadd.f32 0.0, %v1391
    %1393 = vmatmul.f32.gmra.mxu0 %v1364
    %v1394 = vpop.f32.mrf.mxu0
    %v1395 = vadd.f32 0.0, %v1394
    %1396 = vmatmul.f32.gmra.mxu0 %v1367
    %v1397 = vpop.f32.mrf.mxu0
    %v1398 = vadd.f32 0.0, %v1397
    %1399 = vdwg.mxu0
    %v1400 = vperm.slane %v109, 0
    %v1402 = vsel %vm184, %v75, 0
    %v1405 = vsel %vm184, %v76, 0
    %v1408 = vsel %vm184, %v77, 0
    %v1411 = vsel %vm184, %v78, 0
    %v1414 = vsel %vm184, %v79, 0
    %v1417 = vsel %vm184, %v80, 0
    %v1420 = vsel %vm184, %v81, 0
    %v1423 = vsel %vm184, %v82, 0
    %1425 = vmatpush.msra.mxu0 0.0
    %1426 = vmatpush.msra.mxu0 0.0
    %1427 = vmatpush.msra.mxu0 0.0
    %1428 = vmatpush.msra.mxu0 0.0
    %1429 = vmatpush.msra.mxu0 0.0
    %1430 = vmatpush.msra.mxu0 0.0
    %1431 = vmatpush.msra.mxu0 0.0
    %1432 = vmatpush.msra.mxu0 0.0
    %1433 = vmatpush.msra.mxu0 0.0
    %1434 = vmatpush.msra.mxu0 0.0
    %1435 = vmatpush.msra.mxu0 0.0
    %1436 = vmatpush.msra.mxu0 0.0
    %1437 = vmatpush.msra.mxu0 %v104
    %1438 = vmatpush.msra.mxu0 %v103
    %1439 = vmatpush.msra.mxu0 %v102
    %1440 = vmatpush.msra.mxu0 %v101
    %1441 = vmatmul.f32.gmra.mxu0 %v1402
    %v1442 = vpop.f32.mrf.mxu0
    %v1443 = vadd.f32 %v1400, %v1442
    %1444 = vmatmul.f32.gmra.mxu0 %v1405
    %v1445 = vpop.f32.mrf.mxu0
    %v1446 = vadd.f32 %v1400, %v1445
    %1447 = vmatmul.f32.gmra.mxu0 %v1408
    %v1448 = vpop.f32.mrf.mxu0
    %v1449 = vadd.f32 %v1400, %v1448
    %1450 = vmatmul.f32.gmra.mxu0 %v1411
    %v1451 = vpop.f32.mrf.mxu0
    %v1452 = vadd.f32 %v1400, %v1451
    %1453 = vmatmul.f32.gmra.mxu0 %v1414
    %v1454 = vpop.f32.mrf.mxu0
    %v1455 = vadd.f32 %v1400, %v1454
    %1456 = vmatmul.f32.gmra.mxu0 %v1417
    %v1457 = vpop.f32.mrf.mxu0
    %v1458 = vadd.f32 %v1400, %v1457
    %1459 = vmatmul.f32.gmra.mxu0 %v1420
    %v1460 = vpop.f32.mrf.mxu0
    %v1461 = vadd.f32 %v1400, %v1460
    %1462 = vmatmul.f32.gmra.mxu0 %v1423
    %v1463 = vpop.f32.mrf.mxu0
    %v1464 = vadd.f32 %v1400, %v1463
    %1465 = vdwg.mxu0
    %v1467 = vrot.slane %v1253, 7
    %1468 = vrot.lane.b32.xlu0 %v1467, 96
    %v1469 = vpop.permute.xlu0 %1468
    %v1471 = vrot.slane %v109, 1
    %v1473 = vsel %vm184, %v1469, 0
    %1475 = vmatpush.msra.mxu0 0.0
    %1476 = vmatpush.msra.mxu0 0.0
    %1477 = vmatpush.msra.mxu0 0.0
    %1478 = vmatpush.msra.mxu0 0.0
    %1479 = vmatpush.msra.mxu0 0.0
    %1480 = vmatpush.msra.mxu0 0.0
    %1481 = vmatpush.msra.mxu0 0.0
    %1482 = vmatpush.msra.mxu0 0.0
    %1483 = vmatpush.msra.mxu0 0.0
    %1484 = vmatpush.msra.mxu0 0.0
    %1485 = vmatpush.msra.mxu0 0.0
    %1486 = vmatpush.msra.mxu0 0.0
    %1487 = vmatpush.msra.mxu0 %v108
    %1488 = vmatpush.msra.mxu0 %v107
    %1489 = vmatpush.msra.mxu0 %v106
    %1490 = vmatpush.msra.mxu0 %v105
    %1491 = vmatmul.f32.gmra.mxu0 %v1473
    %v1492 = vpop.f32.mrf.mxu0
    %v1493 = vadd.f32 %v1471, %v1492
    %1494 = vdwg.mxu0
    %v1496 = vrot.slane %v1493, 7
    %v1498 = vadd.f32 %v1443, %v1496
    %v1499 = vxor.u32 %v1498, 2147483648
    %v1500 = vmul.f32 %v1499, 1.442695
    %v1501 = vpow.pop %v1500
    %v1502 = vadd.f32 %v1501, 1.0
    %v1503 = vrcp.pop %v1502
    %v1504 = vmul.f32 %v1502, %v1503
    %v1505 = vsub.f32 1.0, %v1504
    %v1506 = vmul.f32 %v1503, %v1505
    %v1507 = vadd.f32 %v1503, %v1506
    %vm1508 = vweird.f32 %v1502
    %vm1509 = vweird.f32 %v1503
    %vm1510 = vmor %vm1508, %vm1509
    %v1511 = vsel %vm1510, %v1503, %v1507
    %v1512 = vand.u32 2147483647, %v1502
    %vm1513 = vcmp.eq.f32.partialorder %v1512, 8.507059e+37
    %v1514 = vand.u32 %v1502, 2147483648
    %v1515 = vor.u32 1.1754944e-38, %v1514
    %v1516 = vsel %vm1513, %v1515, %v1511
    %v1517 = vmul.f32 1.0, %v1516
    %1518 = vrot.lane.b32.xlu0 %v1496, 64
    %v1519 = vpop.permute.xlu0 %1518
    %v1521 = vmul.f32 %v1517, %v1519
    %1523 = vrot.lane.b32.xlu0 %v1521, 64
    %v1524 = vpop.permute.xlu0 %1523
    %v1526 = vadd.f32 %v1443, %v1524
    %v1527 = vtanh.pop %v1526
    %v1528 = vsub.f32 1.0, %v1517
    %1530 = vrot.lane.b32.xlu0 %v1527, 96
    %v1531 = vpop.permute.xlu0 %1530
    %v1533 = vmul.f32 %v1528, %v1531
    %v1534 = vrot.slane %v1253, 6
    %v1536 = vmul.f32 %v1517, %v1534
    %v1537 = vadd.f32 %v1533, %v1536
    %v1539 = vrot.slane %v1537, 1
    %1540 = vrot.lane.b32.xlu0 %v1539, 96
    %v1541 = vpop.permute.xlu0 %1540
    %v1542 = vsel %vm184, %v1541, 0
    %1544 = vmatpush.msra.mxu0 0.0
    %1545 = vmatpush.msra.mxu0 0.0
    %1546 = vmatpush.msra.mxu0 0.0
    %1547 = vmatpush.msra.mxu0 0.0
    %1548 = vmatpush.msra.mxu0 0.0
    %1549 = vmatpush.msra.mxu0 0.0
    %1550 = vmatpush.msra.mxu0 0.0
    %1551 = vmatpush.msra.mxu0 0.0
    %1552 = vmatpush.msra.mxu0 0.0
    %1553 = vmatpush.msra.mxu0 0.0
    %1554 = vmatpush.msra.mxu0 0.0
    %1555 = vmatpush.msra.mxu0 0.0
    %1556 = vmatpush.msra.mxu0 %v1398
    %1557 = vmatpush.msra.mxu0 %v1395
    %1558 = vmatpush.msra.mxu0 %v1392
    %1559 = vmatpush.msra.mxu0 %v1389
    %1560 = vmatmul.f32.gmra.mxu0 %v1542
    %v1561 = vpop.f32.mrf.mxu0
    %v1562 = vadd.f32 0.0, %v1561
    %1563 = vdwg.mxu0
    %vm1564 = vcmask 57344
    %v1565 = vsel %vm1564, %v1562, -inf
    %1566 = vmax.xlane.f32.xlu0 %v1565
    %v1567 = vpop.xlane.xlu0 %1566
    %v1568 = vsub.f32 %v1562, %v1567
    %v1569 = vmul.f32 %v1568, 1.442695
    %v1570 = vpow.pop %v1569
    %v1571 = vsel %vm1564, %v1570, 0.0
    %1572 = vadd.xlane.f32.xlu0 %v1571
    %v1573 = vpop.xlane.xlu0 %1572
    %v1574 = vrcp.pop %v1573
    %v1575 = vmul.f32 %v1573, %v1574
    %v1576 = vsub.f32 1.0, %v1575
    %v1577 = vmul.f32 %v1574, %v1576
    %v1578 = vadd.f32 %v1574, %v1577
    %vm1579 = vweird.f32 %v1573
    %vm1580 = vweird.f32 %v1574
    %vm1581 = vmor %vm1579, %vm1580
    %v1582 = vsel %vm1581, %v1574, %v1578
    %v1583 = vand.u32 2147483647, %v1573
    %vm1584 = vcmp.eq.f32.partialorder %v1583, 8.507059e+37
    %v1585 = vand.u32 %v1573, 2147483648
    %v1586 = vor.u32 1.1754944e-38, %v1585
    %v1587 = vsel %vm1584, %v1586, %v1582
    %v1588 = vmul.f32 %v1570, %v1587
    %vm1590 = vcmask 64512
    %v1592 = vsel %vm1590, %v1588, 0
    %1594 = vmatpush.msra.mxu0 0.0
    %1595 = vmatpush.msra.mxu0 0.0
    %1596 = vmatpush.msra.mxu0 0.0
    %1597 = vmatpush.msra.mxu0 0.0
    %1598 = vmatpush.msra.mxu0 0.0
    %1599 = vmatpush.msra.mxu0 0.0
    %1600 = vmatpush.msra.mxu0 0.0
    %1601 = vmatpush.msra.mxu0 0.0
    %1602 = vmatpush.msra.mxu0 0.0
    %1603 = vmatpush.msra.mxu0 0.0
    %1604 = vmatpush.msra.mxu0 0.0
    %1605 = vmatpush.msra.mxu0 0.0
    %1606 = vmatpush.msra.mxu0 0.0
    %1607 = vmatpush.msra.mxu0 0.0
    %1608 = vmatpush.msra.mxu0 0.0
    %1609 = vmatpush.msra.mxu0 %v1356
    %1610 = vmatmul.f32.gmra.mxu0 %v1592
    %v1611 = vpop.f32.mrf.mxu0
    %v1612 = vadd.f32 0.0, %v1611
    %1613 = vdwg.mxu0
    %1614 = vrot.lane.b32.xlu0 %v1537, 96
    %v1615 = vpop.permute.xlu0 %1614
    %v1618 = vrot.slane %v1612, 7
    %1619 = vrot.lane.b32.xlu0 %v1618, 32
    %v1620 = vpop.permute.xlu0 %1619
    %v1622 = vsel %vm184, %v1615, %v1620
    %v1624 = vrot.slane %v1622, 1
    %vm1625 = vcmask 523264
    %v1626 = vsel %vm1625, %v1624, 0
    %1628 = vmatpush.msra.mxu0 0.0
    %1629 = vmatpush.msra.mxu0 0.0
    %1630 = vmatpush.msra.mxu0 0.0
    %1631 = vmatpush.msra.mxu0 0.0
    %1632 = vmatpush.msra.mxu0 0.0
    %1633 = vmatpush.msra.mxu0 0.0
    %1634 = vmatpush.msra.mxu0 0.0
    %1635 = vmatpush.msra.mxu0 0.0
    %1636 = vmatpush.msra.mxu0 %v117
    %1637 = vmatpush.msra.mxu0 %v116
    %1638 = vmatpush.msra.mxu0 %v115
    %1639 = vmatpush.msra.mxu0 %v114
    %1640 = vmatpush.msra.mxu0 %v113
    %1641 = vmatpush.msra.mxu0 %v112
    %1642 = vmatpush.msra.mxu0 %v111
    %1643 = vmatpush.msra.mxu0 %v110
    %1644 = vmatmul.f32.gmra.mxu0 %v1626
    %v1645 = vpop.f32.mrf.mxu0
    %v1646 = vadd.f32 %v118, %v1645
    %1647 = vdwg.mxu0
    %v1648 = vtanh.pop %v1646
    %v1650 = vsel %vm184, %v1648, 0
    %1652 = vmatpush.msra.mxu0 0.0
    %1653 = vmatpush.msra.mxu0 0.0
    %1654 = vmatpush.msra.mxu0 0.0
    %1655 = vmatpush.msra.mxu0 0.0
    %1656 = vmatpush.msra.mxu0 0.0
    %1657 = vmatpush.msra.mxu0 0.0
    %1658 = vmatpush.msra.mxu0 0.0
    %1659 = vmatpush.msra.mxu0 0.0
    %1660 = vmatpush.msra.mxu0 0.0
    %1661 = vmatpush.msra.mxu0 0.0
    %1662 = vmatpush.msra.mxu0 0.0
    %1663 = vmatpush.msra.mxu0 0.0
    %1664 = vmatpush.msra.mxu0 %v122
    %1665 = vmatpush.msra.mxu0 %v121
    %1666 = vmatpush.msra.mxu0 %v120
    %1667 = vmatpush.msra.mxu0 %v119
    %1668 = vmatmul.f32.gmra.mxu0 %v1650
    %v1669 = vpop.f32.mrf.mxu0
    %v1670 = vadd.f32 %v123, %v1669
    %1671 = vdwg.mxu0
    %vm1672 = vcmask 516096
    %v1673 = vsel %vm1672, %v1670, -inf
    %1674 = vmax.xlane.f32.xlu0 %v1673
    %v1675 = vpop.xlane.xlu0 %1674
    %v1676 = vsub.f32 %v1670, %v1675
    %v1677 = vmul.f32 %v1676, 1.442695
    %v1678 = vpow.pop %v1677
    %v1679 = vsel %vm1672, %v1678, 0.0
    %1680 = vadd.xlane.f32.xlu0 %v1679
    %v1681 = vpop.xlane.xlu0 %1680
    %v1682 = vrcp.pop %v1681
    %v1683 = vmul.f32 %v1681, %v1682
    %v1684 = vsub.f32 1.0, %v1683
    %v1685 = vmul.f32 %v1682, %v1684
    %v1686 = vadd.f32 %v1682, %v1685
    %vm1687 = vweird.f32 %v1681
    %vm1688 = vweird.f32 %v1682
    %vm1689 = vmor %vm1687, %vm1688
    %v1690 = vsel %vm1689, %v1682, %v1686
    %v1691 = vand.u32 2147483647, %v1681
    %vm1692 = vcmp.eq.f32.partialorder %v1691, 8.507059e+37
    %v1693 = vand.u32 %v1681, 2147483648
    %v1694 = vor.u32 1.1754944e-38, %v1693
    %v1695 = vsel %vm1692, %v1694, %v1690
    %v1696 = vmul.f32 1.0, %v1695
    %vm1697 = vcmp.ge.f32.partialorder %v1670, %v1675
    %v1698 = vsel %vm1697, %v1341, 64
    %v1699 = vsel %vm1672, %v1698, 2147483647
    %v1700 = vand.u32 %v1699, 65535
    %v1701 = vshra.s32 %v1699, 16
    %v1702 = vcvt.s32.f32 %v1700
    %v1703 = vcvt.s32.f32 %v1701
    %1704 = vmin.xlane.f32.xlu0 %v1703
    %v1705 = vpop.xlane.xlu0 %1704
    %vm1706 = vcmp.eq.f32.partialorder %v1703, %v1705
    %v1707 = vsel %vm1706, %v1702, inf
    %1708 = vmin.xlane.f32.xlu0 %v1707
    %v1709 = vpop.xlane.xlu0 %1708
    %v1710 = vcvt.f32.s32 %v1709
    %v1711 = vcvt.f32.s32 %v1705
    %v1712 = vshll.u32 %v1711, 16
    %v1713 = vadd.s32 %v1712, %v1710
    %vm1714 = vcmp.eq.s32.totalorder %v1341, %v1713
    %v1715 = vsel %vm1714, 1, 0
    %v1716 = vcvt.s32.f32 %v1715
    %v1718 = vsel %vm1625, %v1716, 0
    %1720 = vmatpush.msra.mxu0 0.0
    %1721 = vmatpush.msra.mxu0 0.0
    %1722 = vmatpush.msra.mxu0 0.0
    %1723 = vmatpush.msra.mxu0 0.0
    %1724 = vmatpush.msra.mxu0 0.0
    %1725 = vmatpush.msra.mxu0 0.0
    %1726 = vmatpush.msra.mxu0 0.0
    %1727 = vmatpush.msra.mxu0 0.0
    %1728 = vmatpush.msra.mxu0 %v1464
    %1729 = vmatpush.msra.mxu0 %v1461
    %1730 = vmatpush.msra.mxu0 %v1458
    %1731 = vmatpush.msra.mxu0 %v1455
    %1732 = vmatpush.msra.mxu0 %v1452
    %1733 = vmatpush.msra.mxu0 %v1449
    %1734 = vmatpush.msra.mxu0 %v1446
    %1735 = vmatpush.msra.mxu0 %v1443
    %1736 = vmatmul.f32.gmra.mxu0 %v1718
    %v1737 = vpop.f32.mrf.mxu0
    %v1738 = vadd.f32 0.0, %v1737
    %1739 = vdwg.mxu0
    %vm1740 = vcmp.eq.s32.totalorder %v1341, 0
    %v1741 = vsel %vm1740, %v1713, 0
    %v1742 = vsel %vm1740, %v1696, 0.0
    %1743 = vmatpush.msra.mxu0 0.0
    %1744 = vmatpush.msra.mxu0 0.0
    %1745 = vmatpush.msra.mxu0 0.0
    %1746 = vmatpush.msra.mxu0 0.0
    %1747 = vmatpush.msra.mxu0 0.0
    %1748 = vmatpush.msra.mxu0 0.0
    %1749 = vmatpush.msra.mxu0 0.0
    %1750 = vmatpush.msra.mxu0 0.0
    %1751 = vmatpush.msra.mxu0 0.0
    %1752 = vmatpush.msra.mxu0 0.0
    %1753 = vmatpush.msra.mxu0 0.0
    %1754 = vmatpush.msra.mxu0 0.0
    %1755 = vmatpush.msra.mxu0 %v108
    %1756 = vmatpush.msra.mxu0 %v107
    %1757 = vmatpush.msra.mxu0 %v106
    %1758 = vmatpush.msra.mxu0 %v105
    %1759 = vmatmul.f32.gmra.mxu0 %v1542
    %v1760 = vpop.f32.mrf.mxu0
    %v1761 = vadd.f32 %v1471, %v1760
    %1762 = vdwg.mxu0
    %v1763 = vadd.f32 %v1738, %v1761
    %v1764 = vxor.u32 %v1763, 2147483648
    %v1765 = vmul.f32 %v1764, 1.442695
    %v1766 = vpow.pop %v1765
    %v1767 = vadd.f32 %v1766, 1.0
    %v1768 = vrcp.pop %v1767
    %v1769 = vmul.f32 %v1767, %v1768
    %v1770 = vsub.f32 1.0, %v1769
    %v1771 = vmul.f32 %v1768, %v1770
    %v1772 = vadd.f32 %v1768, %v1771
    %vm1773 = vweird.f32 %v1767
    %vm1774 = vweird.f32 %v1768
    %vm1775 = vmor %vm1773, %vm1774
    %v1776 = vsel %vm1775, %v1768, %v1772
    %v1777 = vand.u32 2147483647, %v1767
    %vm1778 = vcmp.eq.f32.partialorder %v1777, 8.507059e+37
    %v1779 = vand.u32 %v1767, 2147483648
    %v1780 = vor.u32 1.1754944e-38, %v1779
    %v1781 = vsel %vm1778, %v1780, %v1776
    %v1782 = vmul.f32 1.0, %v1781
    %1784 = vrot.lane.b32.xlu0 %v1761, 64
    %v1785 = vpop.permute.xlu0 %1784
    %v1787 = vmul.f32 %v1782, %v1785
    %1789 = vrot.lane.b32.xlu0 %v1787, 64
    %v1790 = vpop.permute.xlu0 %1789
    %v1792 = vadd.f32 %v1738, %v1790
    %v1793 = vtanh.pop %v1792
    %v1794 = vsub.f32 1.0, %v1782
    %1796 = vrot.lane.b32.xlu0 %v1793, 96
    %v1797 = vpop.permute.xlu0 %1796
    %v1799 = vmul.f32 %v1794, %v1797
    %v1801 = vmul.f32 %v1782, %v1539
    %v1802 = vadd.f32 %v1799, %v1801
    %1804 = vrot.lane.b32.xlu0 %v1802, 96
    %v1805 = vpop.permute.xlu0 %1804
    %v1806 = vsel %vm184, %v1805, 0
    %1808 = vmatpush.msra.mxu0 0.0
    %1809 = vmatpush.msra.mxu0 0.0
    %1810 = vmatpush.msra.mxu0 0.0
    %1811 = vmatpush.msra.mxu0 0.0
    %1812 = vmatpush.msra.mxu0 0.0
    %1813 = vmatpush.msra.mxu0 0.0
    %1814 = vmatpush.msra.mxu0 0.0
    %1815 = vmatpush.msra.mxu0 0.0
    %1816 = vmatpush.msra.mxu0 0.0
    %1817 = vmatpush.msra.mxu0 0.0
    %1818 = vmatpush.msra.mxu0 0.0
    %1819 = vmatpush.msra.mxu0 0.0
    %1820 = vmatpush.msra.mxu0 %v1398
    %1821 = vmatpush.msra.mxu0 %v1395
    %1822 = vmatpush.msra.mxu0 %v1392
    %1823 = vmatpush.msra.mxu0 %v1389
    %1824 = vmatmul.f32.gmra.mxu0 %v1806
    %v1825 = vpop.f32.mrf.mxu0
    %v1826 = vadd.f32 0.0, %v1825
    %1827 = vdwg.mxu0
    %v1828 = vsel %vm1564, %v1826, -inf
    %1829 = vmax.xlane.f32.xlu0 %v1828
    %v1830 = vpop.xlane.xlu0 %1829
    %v1831 = vsub.f32 %v1826, %v1830
    %v1832 = vmul.f32 %v1831, 1.442695
    %v1833 = vpow.pop %v1832
    %v1834 = vsel %vm1564, %v1833, 0.0
    %1835 = vadd.xlane.f32.xlu0 %v1834
    %v1836 = vpop.xlane.xlu0 %1835
    %v1837 = vrcp.pop %v1836
    %v1838 = vmul.f32 %v1836, %v1837
    %v1839 = vsub.f32 1.0, %v1838
    %v1840 = vmul.f32 %v1837, %v1839
    %v1841 = vadd.f32 %v1837, %v1840
    %vm1842 = vweird.f32 %v1836
    %vm1843 = vweird.f32 %v1837
    %vm1844 = vmor %vm1842, %vm1843
    %v1845 = vsel %vm1844, %v1837, %v1841
    %v1846 = vand.u32 2147483647, %v1836
    %vm1847 = vcmp.eq.f32.partialorder %v1846, 8.507059e+37
    %v1848 = vand.u32 %v1836, 2147483648
    %v1849 = vor.u32 1.1754944e-38, %v1848
    %v1850 = vsel %vm1847, %v1849, %v1845
    %v1851 = vmul.f32 %v1833, %v1850
    %v1853 = vsel %vm1590, %v1851, 0
    %1855 = vmatpush.msra.mxu0 0.0
    %1856 = vmatpush.msra.mxu0 0.0
    %1857 = vmatpush.msra.mxu0 0.0
    %1858 = vmatpush.msra.mxu0 0.0
    %1859 = vmatpush.msra.mxu0 0.0
    %1860 = vmatpush.msra.mxu0 0.0
    %1861 = vmatpush.msra.mxu0 0.0
    %1862 = vmatpush.msra.mxu0 0.0
    %1863 = vmatpush.msra.mxu0 0.0
    %1864 = vmatpush.msra.mxu0 0.0
    %1865 = vmatpush.msra.mxu0 0.0
    %1866 = vmatpush.msra.mxu0 0.0
    %1867 = vmatpush.msra.mxu0 0.0
    %1868 = vmatpush.msra.mxu0 0.0
    %1869 = vmatpush.msra.mxu0 0.0
    %1870 = vmatpush.msra.mxu0 %v1356
    %1871 = vmatmul.f32.gmra.mxu0 %v1853
    %v1872 = vpop.f32.mrf.mxu0
    %v1873 = vadd.f32 0.0, %v1872
    %1874 = vdwg.mxu0
    %1877 = vrot.lane.b32.xlu0 %v1873, 32
    %v1878 = vpop.permute.xlu0 %1877
    %v1880 = vsel %vm184, %v1805, %v1878
    %v1882 = vsel %vm1625, %v1880, 0
    %1884 = vmatpush.msra.mxu0 0.0
    %1885 = vmatpush.msra.mxu0 0.0
    %1886 = vmatpush.msra.mxu0 0.0
    %1887 = vmatpush.msra.mxu0 0.0
    %1888 = vmatpush.msra.mxu0 0.0
    %1889 = vmatpush.msra.mxu0 0.0
    %1890 = vmatpush.msra.mxu0 0.0
    %1891 = vmatpush.msra.mxu0 0.0
    %1892 = vmatpush.msra.mxu0 %v117
    %1893 = vmatpush.msra.mxu0 %v116
    %1894 = vmatpush.msra.mxu0 %v115
    %1895 = vmatpush.msra.mxu0 %v114
    %1896 = vmatpush.msra.mxu0 %v113
    %1897 = vmatpush.msra.mxu0 %v112
    %1898 = vmatpush.msra.mxu0 %v111
    %1899 = vmatpush.msra.mxu0 %v110
    %1900 = vmatmul.f32.gmra.mxu0 %v1882
    %v1901 = vpop.f32.mrf.mxu0
    %v1902 = vadd.f32 %v118, %v1901
    %1903 = vdwg.mxu0
    %v1904 = vtanh.pop %v1902
    %v1906 = vsel %vm184, %v1904, 0
    %1908 = vmatpush.msra.mxu0 0.0
    %1909 = vmatpush.msra.mxu0 0.0
    %1910 = vmatpush.msra.mxu0 0.0
    %1911 = vmatpush.msra.mxu0 0.0
    %1912 = vmatpush.msra.mxu0 0.0
    %1913 = vmatpush.msra.mxu0 0.0
    %1914 = vmatpush.msra.mxu0 0.0
    %1915 = vmatpush.msra.mxu0 0.0
    %1916 = vmatpush.msra.mxu0 0.0
    %1917 = vmatpush.msra.mxu0 0.0
    %1918 = vmatpush.msra.mxu0 0.0
    %1919 = vmatpush.msra.mxu0 0.0
    %1920 = vmatpush.msra.mxu0 %v122
    %1921 = vmatpush.msra.mxu0 %v121
    %1922 = vmatpush.msra.mxu0 %v120
    %1923 = vmatpush.msra.mxu0 %v119
    %1924 = vmatmul.f32.gmra.mxu0 %v1906
    %v1925 = vpop.f32.mrf.mxu0
    %v1926 = vadd.f32 %v123, %v1925
    %1927 = vdwg.mxu0
    %v1928 = vsel %vm1672, %v1926, -inf
    %1929 = vmax.xlane.f32.xlu0 %v1928
    %v1930 = vpop.xlane.xlu0 %1929
    %v1931 = vsub.f32 %v1926, %v1930
    %v1932 = vmul.f32 %v1931, 1.442695
    %v1933 = vpow.pop %v1932
    %v1934 = vsel %vm1672, %v1933, 0.0
    %1935 = vadd.xlane.f32.xlu0 %v1934
    %v1936 = vpop.xlane.xlu0 %1935
    %v1937 = vrcp.pop %v1936
    %v1938 = vmul.f32 %v1936, %v1937
    %v1939 = vsub.f32 1.0, %v1938
    %v1940 = vmul.f32 %v1937, %v1939
    %v1941 = vadd.f32 %v1937, %v1940
    %vm1942 = vweird.f32 %v1936
    %vm1943 = vweird.f32 %v1937
    %vm1944 = vmor %vm1942, %vm1943
    %v1945 = vsel %vm1944, %v1937, %v1941
    %v1946 = vand.u32 2147483647, %v1936
    %vm1947 = vcmp.eq.f32.partialorder %v1946, 8.507059e+37
    %v1948 = vand.u32 %v1936, 2147483648
    %v1949 = vor.u32 1.1754944e-38, %v1948
    %v1950 = vsel %vm1947, %v1949, %v1945
    %v1951 = vmul.f32 1.0, %v1950
    %vm1952 = vcmp.ge.f32.partialorder %v1926, %v1930
    %v1953 = vsel %vm1952, %v1341, 64
    %v1954 = vsel %vm1672, %v1953, 2147483647
    %v1955 = vand.u32 %v1954, 65535
    %v1956 = vshra.s32 %v1954, 16
    %v1957 = vcvt.s32.f32 %v1955
    %v1958 = vcvt.s32.f32 %v1956
    %1959 = vmin.xlane.f32.xlu0 %v1958
    %v1960 = vpop.xlane.xlu0 %1959
    %vm1961 = vcmp.eq.f32.partialorder %v1958, %v1960
    %v1962 = vsel %vm1961, %v1957, inf
    %1963 = vmin.xlane.f32.xlu0 %v1962
    %v1964 = vpop.xlane.xlu0 %1963
    %v1965 = vcvt.f32.s32 %v1964
    %v1966 = vcvt.f32.s32 %v1960
    %v1967 = vshll.u32 %v1966, 16
    %v1968 = vadd.s32 %v1967, %v1965
    %vm1969 = vcmp.eq.s32.totalorder %v1341, %v1968
    %v1970 = vsel %vm1969, 1, 0
    %v1971 = vcvt.s32.f32 %v1970
    %v1973 = vsel %vm1625, %v1971, 0
    %1975 = vmatpush.msra.mxu0 0.0
    %1976 = vmatpush.msra.mxu0 0.0
    %1977 = vmatpush.msra.mxu0 0.0
    %1978 = vmatpush.msra.mxu0 0.0
    %1979 = vmatpush.msra.mxu0 0.0
    %1980 = vmatpush.msra.mxu0 0.0
    %1981 = vmatpush.msra.mxu0 0.0
    %1982 = vmatpush.msra.mxu0 0.0
    %1983 = vmatpush.msra.mxu0 %v1464
    %1984 = vmatpush.msra.mxu0 %v1461
    %1985 = vmatpush.msra.mxu0 %v1458
    %1986 = vmatpush.msra.mxu0 %v1455
    %1987 = vmatpush.msra.mxu0 %v1452
    %1988 = vmatpush.msra.mxu0 %v1449
    %1989 = vmatpush.msra.mxu0 %v1446
    %1990 = vmatpush.msra.mxu0 %v1443
    %1991 = vmatmul.f32.gmra.mxu0 %v1973
    %v1992 = vpop.f32.mrf.mxu0
    %v1993 = vadd.f32 0.0, %v1992
    %1994 = vdwg.mxu0
    %vm1995 = vcmp.eq.s32.totalorder %v1341, 1
    %v1996 = vsel %vm1995, %v1968, %v1741
    %v1997 = vsel %vm1995, %v1951, %v1742
    %1998 = vmatpush.msra.mxu0 0.0
    %1999 = vmatpush.msra.mxu0 0.0
    %2000 = vmatpush.msra.mxu0 0.0
    %2001 = vmatpush.msra.mxu0 0.0
    %2002 = vmatpush.msra.mxu0 0.0
    %2003 = vmatpush.msra.mxu0 0.0
    %2004 = vmatpush.msra.mxu0 0.0
    %2005 = vmatpush.msra.mxu0 0.0
    %2006 = vmatpush.msra.mxu0 0.0
    %2007 = vmatpush.msra.mxu0 0.0
    %2008 = vmatpush.msra.mxu0 0.0
    %2009 = vmatpush.msra.mxu0 0.0
    %2010 = vmatpush.msra.mxu0 %v108
    %2011 = vmatpush.msra.mxu0 %v107
    %2012 = vmatpush.msra.mxu0 %v106
    %2013 = vmatpush.msra.mxu0 %v105
    %2014 = vmatmul.f32.gmra.mxu0 %v1806
    %v2015 = vpop.f32.mrf.mxu0
    %v2016 = vadd.f32 %v1471, %v2015
    %2017 = vdwg.mxu0
    %v2018 = vadd.f32 %v1993, %v2016
    %v2019 = vxor.u32 %v2018, 2147483648
    %v2020 = vmul.f32 %v2019, 1.442695
    %v2021 = vpow.pop %v2020
    %v2022 = vadd.f32 %v2021, 1.0
    %v2023 = vrcp.pop %v2022
    %v2024 = vmul.f32 %v2022, %v2023
    %v2025 = vsub.f32 1.0, %v2024
    %v2026 = vmul.f32 %v2023, %v2025
    %v2027 = vadd.f32 %v2023, %v2026
    %vm2028 = vweird.f32 %v2022
    %vm2029 = vweird.f32 %v2023
    %vm2030 = vmor %vm2028, %vm2029
    %v2031 = vsel %vm2030, %v2023, %v2027
    %v2032 = vand.u32 2147483647, %v2022
    %vm2033 = vcmp.eq.f32.partialorder %v2032, 8.507059e+37
    %v2034 = vand.u32 %v2022, 2147483648
    %v2035 = vor.u32 1.1754944e-38, %v2034
    %v2036 = vsel %vm2033, %v2035, %v2031
    %v2037 = vmul.f32 1.0, %v2036
    %2039 = vrot.lane.b32.xlu0 %v2016, 64
    %v2040 = vpop.permute.xlu0 %2039
    %v2042 = vmul.f32 %v2037, %v2040
    %2044 = vrot.lane.b32.xlu0 %v2042, 64
    %v2045 = vpop.permute.xlu0 %2044
    %v2047 = vadd.f32 %v1993, %v2045
    %v2048 = vtanh.pop %v2047
    %v2049 = vsub.f32 1.0, %v2037
    %2051 = vrot.lane.b32.xlu0 %v2048, 96
    %v2052 = vpop.permute.xlu0 %2051
    %v2054 = vmul.f32 %v2049, %v2052
    %v2055 = vmul.f32 %v2037, %v1802
    %v2056 = vadd.f32 %v2054, %v2055
    %2058 = vrot.lane.b32.xlu0 %v2056, 96
    %v2059 = vpop.permute.xlu0 %2058
    %v2060 = vsel %vm184, %v2059, 0
    %2062 = vmatpush.msra.mxu0 0.0
    %2063 = vmatpush.msra.mxu0 0.0
    %2064 = vmatpush.msra.mxu0 0.0
    %2065 = vmatpush.msra.mxu0 0.0
    %2066 = vmatpush.msra.mxu0 0.0
    %2067 = vmatpush.msra.mxu0 0.0
    %2068 = vmatpush.msra.mxu0 0.0
    %2069 = vmatpush.msra.mxu0 0.0
    %2070 = vmatpush.msra.mxu0 0.0
    %2071 = vmatpush.msra.mxu0 0.0
    %2072 = vmatpush.msra.mxu0 0.0
    %2073 = vmatpush.msra.mxu0 0.0
    %2074 = vmatpush.msra.mxu0 %v1398
    %2075 = vmatpush.msra.mxu0 %v1395
    %2076 = vmatpush.msra.mxu0 %v1392
    %2077 = vmatpush.msra.mxu0 %v1389
    %2078 = vmatmul.f32.gmra.mxu0 %v2060
    %v2079 = vpop.f32.mrf.mxu0
    %v2080 = vadd.f32 0.0, %v2079
    %2081 = vdwg.mxu0
    %v2082 = vsel %vm1564, %v2080, -inf
    %2083 = vmax.xlane.f32.xlu0 %v2082
    %v2084 = vpop.xlane.xlu0 %2083
    %v2085 = vsub.f32 %v2080, %v2084
    %v2086 = vmul.f32 %v2085, 1.442695
    %v2087 = vpow.pop %v2086
    %v2088 = vsel %vm1564, %v2087, 0.0
    %2089 = vadd.xlane.f32.xlu0 %v2088
    %v2090 = vpop.xlane.xlu0 %2089
    %v2091 = vrcp.pop %v2090
    %v2092 = vmul.f32 %v2090, %v2091
    %v2093 = vsub.f32 1.0, %v2092
    %v2094 = vmul.f32 %v2091, %v2093
    %v2095 = vadd.f32 %v2091, %v2094
    %vm2096 = vweird.f32 %v2090
    %vm2097 = vweird.f32 %v2091
    %vm2098 = vmor %vm2096, %vm2097
    %v2099 = vsel %vm2098, %v2091, %v2095
    %v2100 = vand.u32 2147483647, %v2090
    %vm2101 = vcmp.eq.f32.partialorder %v2100, 8.507059e+37
    %v2102 = vand.u32 %v2090, 2147483648
    %v2103 = vor.u32 1.1754944e-38, %v2102
    %v2104 = vsel %vm2101, %v2103, %v2099
    %v2105 = vmul.f32 %v2087, %v2104
    %v2107 = vsel %vm1590, %v2105, 0
    %2109 = vmatpush.msra.mxu0 0.0
    %2110 = vmatpush.msra.mxu0 0.0
    %2111 = vmatpush.msra.mxu0 0.0
    %2112 = vmatpush.msra.mxu0 0.0
    %2113 = vmatpush.msra.mxu0 0.0
    %2114 = vmatpush.msra.mxu0 0.0
    %2115 = vmatpush.msra.mxu0 0.0
    %2116 = vmatpush.msra.mxu0 0.0
    %2117 = vmatpush.msra.mxu0 0.0
    %2118 = vmatpush.msra.mxu0 0.0
    %2119 = vmatpush.msra.mxu0 0.0
    %2120 = vmatpush.msra.mxu0 0.0
    %2121 = vmatpush.msra.mxu0 0.0
    %2122 = vmatpush.msra.mxu0 0.0
    %2123 = vmatpush.msra.mxu0 0.0
    %2124 = vmatpush.msra.mxu0 %v1356
    %2125 = vmatmul.f32.gmra.mxu0 %v2107
    %v2126 = vpop.f32.mrf.mxu0
    %v2127 = vadd.f32 0.0, %v2126
    %2128 = vdwg.mxu0
    %2131 = vrot.lane.b32.xlu0 %v2127, 32
    %v2132 = vpop.permute.xlu0 %2131
    %v2134 = vsel %vm184, %v2059, %v2132
    %v2136 = vsel %vm1625, %v2134, 0
    %2138 = vmatpush.msra.mxu0 0.0
    %2139 = vmatpush.msra.mxu0 0.0
    %2140 = vmatpush.msra.mxu0 0.0
    %2141 = vmatpush.msra.mxu0 0.0
    %2142 = vmatpush.msra.mxu0 0.0
    %2143 = vmatpush.msra.mxu0 0.0
    %2144 = vmatpush.msra.mxu0 0.0
    %2145 = vmatpush.msra.mxu0 0.0
    %2146 = vmatpush.msra.mxu0 %v117
    %2147 = vmatpush.msra.mxu0 %v116
    %2148 = vmatpush.msra.mxu0 %v115
    %2149 = vmatpush.msra.mxu0 %v114
    %2150 = vmatpush.msra.mxu0 %v113
    %2151 = vmatpush.msra.mxu0 %v112
    %2152 = vmatpush.msra.mxu0 %v111
    %2153 = vmatpush.msra.mxu0 %v110
    %2154 = vmatmul.f32.gmra.mxu0 %v2136
    %v2155 = vpop.f32.mrf.mxu0
    %v2156 = vadd.f32 %v118, %v2155
    %2157 = vdwg.mxu0
    %v2158 = vtanh.pop %v2156
    %v2160 = vsel %vm184, %v2158, 0
    %2162 = vmatpush.msra.mxu0 0.0
    %2163 = vmatpush.msra.mxu0 0.0
    %2164 = vmatpush.msra.mxu0 0.0
    %2165 = vmatpush.msra.mxu0 0.0
    %2166 = vmatpush.msra.mxu0 0.0
    %2167 = vmatpush.msra.mxu0 0.0
    %2168 = vmatpush.msra.mxu0 0.0
    %2169 = vmatpush.msra.mxu0 0.0
    %2170 = vmatpush.msra.mxu0 0.0
    %2171 = vmatpush.msra.mxu0 0.0
    %2172 = vmatpush.msra.mxu0 0.0
    %2173 = vmatpush.msra.mxu0 0.0
    %2174 = vmatpush.msra.mxu0 %v122
    %2175 = vmatpush.msra.mxu0 %v121
    %2176 = vmatpush.msra.mxu0 %v120
    %2177 = vmatpush.msra.mxu0 %v119
    %2178 = vmatmul.f32.gmra.mxu0 %v2160
    %v2179 = vpop.f32.mrf.mxu0
    %v2180 = vadd.f32 %v123, %v2179
    %2181 = vdwg.mxu0
    %v2182 = vsel %vm1672, %v2180, -inf
    %2183 = vmax.xlane.f32.xlu0 %v2182
    %v2184 = vpop.xlane.xlu0 %2183
    %v2185 = vsub.f32 %v2180, %v2184
    %v2186 = vmul.f32 %v2185, 1.442695
    %v2187 = vpow.pop %v2186
    %v2188 = vsel %vm1672, %v2187, 0.0
    %2189 = vadd.xlane.f32.xlu0 %v2188
    %v2190 = vpop.xlane.xlu0 %2189
    %v2191 = vrcp.pop %v2190
    %v2192 = vmul.f32 %v2190, %v2191
    %v2193 = vsub.f32 1.0, %v2192
    %v2194 = vmul.f32 %v2191, %v2193
    %v2195 = vadd.f32 %v2191, %v2194
    %vm2196 = vweird.f32 %v2190
    %vm2197 = vweird.f32 %v2191
    %vm2198 = vmor %vm2196, %vm2197
    %v2199 = vsel %vm2198, %v2191, %v2195
    %v2200 = vand.u32 2147483647, %v2190
    %vm2201 = vcmp.eq.f32.partialorder %v2200, 8.507059e+37
    %v2202 = vand.u32 %v2190, 2147483648
    %v2203 = vor.u32 1.1754944e-38, %v2202
    %v2204 = vsel %vm2201, %v2203, %v2199
    %v2205 = vmul.f32 1.0, %v2204
    %vm2206 = vcmp.ge.f32.partialorder %v2180, %v2184
    %v2207 = vsel %vm2206, %v1341, 64
    %v2208 = vsel %vm1672, %v2207, 2147483647
    %v2209 = vand.u32 %v2208, 65535
    %v2210 = vshra.s32 %v2208, 16
    %v2211 = vcvt.s32.f32 %v2209
    %v2212 = vcvt.s32.f32 %v2210
    %2213 = vmin.xlane.f32.xlu0 %v2212
    %v2214 = vpop.xlane.xlu0 %2213
    %vm2215 = vcmp.eq.f32.partialorder %v2212, %v2214
    %v2216 = vsel %vm2215, %v2211, inf
    %2217 = vmin.xlane.f32.xlu0 %v2216
    %v2218 = vpop.xlane.xlu0 %2217
    %v2219 = vcvt.f32.s32 %v2218
    %v2220 = vcvt.f32.s32 %v2214
    %v2221 = vshll.u32 %v2220, 16
    %v2222 = vadd.s32 %v2221, %v2219
    %vm2223 = vcmp.eq.s32.totalorder %v1341, %v2222
    %v2224 = vsel %vm2223, 1, 0
    %v2225 = vcvt.s32.f32 %v2224
    %v2227 = vsel %vm1625, %v2225, 0
    %2229 = vmatpush.msra.mxu0 0.0
    %2230 = vmatpush.msra.mxu0 0.0
    %2231 = vmatpush.msra.mxu0 0.0
    %2232 = vmatpush.msra.mxu0 0.0
    %2233 = vmatpush.msra.mxu0 0.0
    %2234 = vmatpush.msra.mxu0 0.0
    %2235 = vmatpush.msra.mxu0 0.0
    %2236 = vmatpush.msra.mxu0 0.0
    %2237 = vmatpush.msra.mxu0 %v1464
    %2238 = vmatpush.msra.mxu0 %v1461
    %2239 = vmatpush.msra.mxu0 %v1458
    %2240 = vmatpush.msra.mxu0 %v1455
    %2241 = vmatpush.msra.mxu0 %v1452
    %2242 = vmatpush.msra.mxu0 %v1449
    %2243 = vmatpush.msra.mxu0 %v1446
    %2244 = vmatpush.msra.mxu0 %v1443
    %2245 = vmatmul.f32.gmra.mxu0 %v2227
    %v2246 = vpop.f32.mrf.mxu0
    %v2247 = vadd.f32 0.0, %v2246
    %2248 = vdwg.mxu0
    %vm2249 = vcmp.eq.s32.totalorder %v1341, 2
    %v2250 = vsel %vm2249, %v2222, %v1996
    %v2251 = vsel %vm2249, %v2205, %v1997
    %2252 = vmatpush.msra.mxu0 0.0
    %2253 = vmatpush.msra.mxu0 0.0
    %2254 = vmatpush.msra.mxu0 0.0
    %2255 = vmatpush.msra.mxu0 0.0
    %2256 = vmatpush.msra.mxu0 0.0
    %2257 = vmatpush.msra.mxu0 0.0
    %2258 = vmatpush.msra.mxu0 0.0
    %2259 = vmatpush.msra.mxu0 0.0
    %2260 = vmatpush.msra.mxu0 0.0
    %2261 = vmatpush.msra.mxu0 0.0
    %2262 = vmatpush.msra.mxu0 0.0
    %2263 = vmatpush.msra.mxu0 0.0
    %2264 = vmatpush.msra.mxu0 %v108
    %2265 = vmatpush.msra.mxu0 %v107
    %2266 = vmatpush.msra.mxu0 %v106
    %2267 = vmatpush.msra.mxu0 %v105
    %2268 = vmatmul.f32.gmra.mxu0 %v2060
    %v2269 = vpop.f32.mrf.mxu0
    %v2270 = vadd.f32 %v1471, %v2269
    %2271 = vdwg.mxu0
    %v2272 = vadd.f32 %v2247, %v2270
    %v2273 = vxor.u32 %v2272, 2147483648
    %v2274 = vmul.f32 %v2273, 1.442695
    %v2275 = vpow.pop %v2274
    %v2276 = vadd.f32 %v2275, 1.0
    %v2277 = vrcp.pop %v2276
    %v2278 = vmul.f32 %v2276, %v2277
    %v2279 = vsub.f32 1.0, %v2278
    %v2280 = vmul.f32 %v2277, %v2279
    %v2281 = vadd.f32 %v2277, %v2280
    %vm2282 = vweird.f32 %v2276
    %vm2283 = vweird.f32 %v2277
    %vm2284 = vmor %vm2282, %vm2283
    %v2285 = vsel %vm2284, %v2277, %v2281
    %v2286 = vand.u32 2147483647, %v2276
    %vm2287 = vcmp.eq.f32.partialorder %v2286, 8.507059e+37
    %v2288 = vand.u32 %v2276, 2147483648
    %v2289 = vor.u32 1.1754944e-38, %v2288
    %v2290 = vsel %vm2287, %v2289, %v2285
    %v2291 = vmul.f32 1.0, %v2290
    %2293 = vrot.lane.b32.xlu0 %v2270, 64
    %v2294 = vpop.permute.xlu0 %2293
    %v2296 = vmul.f32 %v2291, %v2294
    %2298 = vrot.lane.b32.xlu0 %v2296, 64
    %v2299 = vpop.permute.xlu0 %2298
    %v2301 = vadd.f32 %v2247, %v2299
    %v2302 = vtanh.pop %v2301
    %v2303 = vsub.f32 1.0, %v2291
    %2305 = vrot.lane.b32.xlu0 %v2302, 96
    %v2306 = vpop.permute.xlu0 %2305
    %v2308 = vmul.f32 %v2303, %v2306
    %v2309 = vmul.f32 %v2291, %v2056
    %v2310 = vadd.f32 %v2308, %v2309
    %2312 = vrot.lane.b32.xlu0 %v2310, 96
    %v2313 = vpop.permute.xlu0 %2312
    %v2314 = vsel %vm184, %v2313, 0
    %2316 = vmatpush.msra.mxu0 0.0
    %2317 = vmatpush.msra.mxu0 0.0
    %2318 = vmatpush.msra.mxu0 0.0
    %2319 = vmatpush.msra.mxu0 0.0
    %2320 = vmatpush.msra.mxu0 0.0
    %2321 = vmatpush.msra.mxu0 0.0
    %2322 = vmatpush.msra.mxu0 0.0
    %2323 = vmatpush.msra.mxu0 0.0
    %2324 = vmatpush.msra.mxu0 0.0
    %2325 = vmatpush.msra.mxu0 0.0
    %2326 = vmatpush.msra.mxu0 0.0
    %2327 = vmatpush.msra.mxu0 0.0
    %2328 = vmatpush.msra.mxu0 %v1398
    %2329 = vmatpush.msra.mxu0 %v1395
    %2330 = vmatpush.msra.mxu0 %v1392
    %2331 = vmatpush.msra.mxu0 %v1389
    %2332 = vmatmul.f32.gmra.mxu0 %v2314
    %v2333 = vpop.f32.mrf.mxu0
    %v2334 = vadd.f32 0.0, %v2333
    %2335 = vdwg.mxu0
    %v2336 = vsel %vm1564, %v2334, -inf
    %2337 = vmax.xlane.f32.xlu0 %v2336
    %v2338 = vpop.xlane.xlu0 %2337
    %v2339 = vsub.f32 %v2334, %v2338
    %v2340 = vmul.f32 %v2339, 1.442695
    %v2341 = vpow.pop %v2340
    %v2342 = vsel %vm1564, %v2341, 0.0
    %2343 = vadd.xlane.f32.xlu0 %v2342
    %v2344 = vpop.xlane.xlu0 %2343
    %v2345 = vrcp.pop %v2344
    %v2346 = vmul.f32 %v2344, %v2345
    %v2347 = vsub.f32 1.0, %v2346
    %v2348 = vmul.f32 %v2345, %v2347
    %v2349 = vadd.f32 %v2345, %v2348
    %vm2350 = vweird.f32 %v2344
    %vm2351 = vweird.f32 %v2345
    %vm2352 = vmor %vm2350, %vm2351
    %v2353 = vsel %vm2352, %v2345, %v2349
    %v2354 = vand.u32 2147483647, %v2344
    %vm2355 = vcmp.eq.f32.partialorder %v2354, 8.507059e+37
    %v2356 = vand.u32 %v2344, 2147483648
    %v2357 = vor.u32 1.1754944e-38, %v2356
    %v2358 = vsel %vm2355, %v2357, %v2353
    %v2359 = vmul.f32 %v2341, %v2358
    %v2361 = vsel %vm1590, %v2359, 0
    %2363 = vmatpush.msra.mxu0 0.0
    %2364 = vmatpush.msra.mxu0 0.0
    %2365 = vmatpush.msra.mxu0 0.0
    %2366 = vmatpush.msra.mxu0 0.0
    %2367 = vmatpush.msra.mxu0 0.0
    %2368 = vmatpush.msra.mxu0 0.0
    %2369 = vmatpush.msra.mxu0 0.0
    %2370 = vmatpush.msra.mxu0 0.0
    %2371 = vmatpush.msra.mxu0 0.0
    %2372 = vmatpush.msra.mxu0 0.0
    %2373 = vmatpush.msra.mxu0 0.0
    %2374 = vmatpush.msra.mxu0 0.0
    %2375 = vmatpush.msra.mxu0 0.0
    %2376 = vmatpush.msra.mxu0 0.0
    %2377 = vmatpush.msra.mxu0 0.0
    %2378 = vmatpush.msra.mxu0 %v1356
    %2379 = vmatmul.f32.gmra.mxu0 %v2361
    %v2380 = vpop.f32.mrf.mxu0
    %v2381 = vadd.f32 0.0, %v2380
    %2382 = vdwg.mxu0
    %2385 = vrot.lane.b32.xlu0 %v2381, 32
    %v2386 = vpop.permute.xlu0 %2385
    %v2388 = vsel %vm184, %v2313, %v2386
    %v2390 = vsel %vm1625, %v2388, 0
    %2392 = vmatpush.msra.mxu0 0.0
    %2393 = vmatpush.msra.mxu0 0.0
    %2394 = vmatpush.msra.mxu0 0.0
    %2395 = vmatpush.msra.mxu0 0.0
    %2396 = vmatpush.msra.mxu0 0.0
    %2397 = vmatpush.msra.mxu0 0.0
    %2398 = vmatpush.msra.mxu0 0.0
    %2399 = vmatpush.msra.mxu0 0.0
    %2400 = vmatpush.msra.mxu0 %v117
    %2401 = vmatpush.msra.mxu0 %v116
    %2402 = vmatpush.msra.mxu0 %v115
    %2403 = vmatpush.msra.mxu0 %v114
    %2404 = vmatpush.msra.mxu0 %v113
    %2405 = vmatpush.msra.mxu0 %v112
    %2406 = vmatpush.msra.mxu0 %v111
    %2407 = vmatpush.msra.mxu0 %v110
    %2408 = vmatmul.f32.gmra.mxu0 %v2390
    %v2409 = vpop.f32.mrf.mxu0
    %v2410 = vadd.f32 %v118, %v2409
    %2411 = vdwg.mxu0
    %v2412 = vtanh.pop %v2410
    %v2414 = vsel %vm184, %v2412, 0
    %2416 = vmatpush.msra.mxu0 0.0
    %2417 = vmatpush.msra.mxu0 0.0
    %2418 = vmatpush.msra.mxu0 0.0
    %2419 = vmatpush.msra.mxu0 0.0
    %2420 = vmatpush.msra.mxu0 0.0
    %2421 = vmatpush.msra.mxu0 0.0
    %2422 = vmatpush.msra.mxu0 0.0
    %2423 = vmatpush.msra.mxu0 0.0
    %2424 = vmatpush.msra.mxu0 0.0
    %2425 = vmatpush.msra.mxu0 0.0
    %2426 = vmatpush.msra.mxu0 0.0
    %2427 = vmatpush.msra.mxu0 0.0
    %2428 = vmatpush.msra.mxu0 %v122
    %2429 = vmatpush.msra.mxu0 %v121
    %2430 = vmatpush.msra.mxu0 %v120
    %2431 = vmatpush.msra.mxu0 %v119
    %2432 = vmatmul.f32.gmra.mxu0 %v2414
    %v2433 = vpop.f32.mrf.mxu0
    %v2434 = vadd.f32 %v123, %v2433
    %2435 = vdwg.mxu0
    %v2436 = vsel %vm1672, %v2434, -inf
    %2437 = vmax.xlane.f32.xlu0 %v2436
    %v2438 = vpop.xlane.xlu0 %2437
    %v2439 = vsub.f32 %v2434, %v2438
    %v2440 = vmul.f32 %v2439, 1.442695
    %v2441 = vpow.pop %v2440
    %v2442 = vsel %vm1672, %v2441, 0.0
    %2443 = vadd.xlane.f32.xlu0 %v2442
    %v2444 = vpop.xlane.xlu0 %2443
    %v2445 = vrcp.pop %v2444
    %v2446 = vmul.f32 %v2444, %v2445
    %v2447 = vsub.f32 1.0, %v2446
    %v2448 = vmul.f32 %v2445, %v2447
    %v2449 = vadd.f32 %v2445, %v2448
    %vm2450 = vweird.f32 %v2444
    %vm2451 = vweird.f32 %v2445
    %vm2452 = vmor %vm2450, %vm2451
    %v2453 = vsel %vm2452, %v2445, %v2449
    %v2454 = vand.u32 2147483647, %v2444
    %vm2455 = vcmp.eq.f32.partialorder %v2454, 8.507059e+37
    %v2456 = vand.u32 %v2444, 2147483648
    %v2457 = vor.u32 1.1754944e-38, %v2456
    %v2458 = vsel %vm2455, %v2457, %v2453
    %v2459 = vmul.f32 1.0, %v2458
    %vm2460 = vcmp.ge.f32.partialorder %v2434, %v2438
    %v2461 = vsel %vm2460, %v1341, 64
    %v2462 = vsel %vm1672, %v2461, 2147483647
    %v2463 = vand.u32 %v2462, 65535
    %v2464 = vshra.s32 %v2462, 16
    %v2465 = vcvt.s32.f32 %v2463
    %v2466 = vcvt.s32.f32 %v2464
    %2467 = vmin.xlane.f32.xlu0 %v2466
    %v2468 = vpop.xlane.xlu0 %2467
    %vm2469 = vcmp.eq.f32.partialorder %v2466, %v2468
    %v2470 = vsel %vm2469, %v2465, inf
    %2471 = vmin.xlane.f32.xlu0 %v2470
    %v2472 = vpop.xlane.xlu0 %2471
    %v2473 = vcvt.f32.s32 %v2472
    %v2474 = vcvt.f32.s32 %v2468
    %v2475 = vshll.u32 %v2474, 16
    %v2476 = vadd.s32 %v2475, %v2473
    %vm2477 = vcmp.eq.s32.totalorder %v1341, %v2476
    %v2478 = vsel %vm2477, 1, 0
    %v2479 = vcvt.s32.f32 %v2478
    %v2481 = vsel %vm1625, %v2479, 0
    %2483 = vmatpush.msra.mxu0 0.0
    %2484 = vmatpush.msra.mxu0 0.0
    %2485 = vmatpush.msra.mxu0 0.0
    %2486 = vmatpush.msra.mxu0 0.0
    %2487 = vmatpush.msra.mxu0 0.0
    %2488 = vmatpush.msra.mxu0 0.0
    %2489 = vmatpush.msra.mxu0 0.0
    %2490 = vmatpush.msra.mxu0 0.0
    %2491 = vmatpush.msra.mxu0 %v1464
    %2492 = vmatpush.msra.mxu0 %v1461
    %2493 = vmatpush.msra.mxu0 %v1458
    %2494 = vmatpush.msra.mxu0 %v1455
    %2495 = vmatpush.msra.mxu0 %v1452
    %2496 = vmatpush.msra.mxu0 %v1449
    %2497 = vmatpush.msra.mxu0 %v1446
    %2498 = vmatpush.msra.mxu0 %v1443
    %2499 = vmatmul.f32.gmra.mxu0 %v2481
    %v2500 = vpop.f32.mrf.mxu0
    %v2501 = vadd.f32 0.0, %v2500
    %2502 = vdwg.mxu0
    %vm2503 = vcmp.eq.s32.totalorder %v1341, 3
    %v2504 = vsel %vm2503, %v2476, %v2250
    %v2505 = vsel %vm2503, %v2459, %v2251
    %2506 = vmatpush.msra.mxu0 0.0
    %2507 = vmatpush.msra.mxu0 0.0
    %2508 = vmatpush.msra.mxu0 0.0
    %2509 = vmatpush.msra.mxu0 0.0
    %2510 = vmatpush.msra.mxu0 0.0
    %2511 = vmatpush.msra.mxu0 0.0
    %2512 = vmatpush.msra.mxu0 0.0
    %2513 = vmatpush.msra.mxu0 0.0
    %2514 = vmatpush.msra.mxu0 0.0
    %2515 = vmatpush.msra.mxu0 0.0
    %2516 = vmatpush.msra.mxu0 0.0
    %2517 = vmatpush.msra.mxu0 0.0
    %2518 = vmatpush.msra.mxu0 %v108
    %2519 = vmatpush.msra.mxu0 %v107
    %2520 = vmatpush.msra.mxu0 %v106
    %2521 = vmatpush.msra.mxu0 %v105
    %2522 = vmatmul.f32.gmra.mxu0 %v2314
    %v2523 = vpop.f32.mrf.mxu0
    %v2524 = vadd.f32 %v1471, %v2523
    %2525 = vdwg.mxu0
    %v2526 = vadd.f32 %v2501, %v2524
    %v2527 = vxor.u32 %v2526, 2147483648
    %v2528 = vmul.f32 %v2527, 1.442695
    %v2529 = vpow.pop %v2528
    %v2530 = vadd.f32 %v2529, 1.0
    %v2531 = vrcp.pop %v2530
    %v2532 = vmul.f32 %v2530, %v2531
    %v2533 = vsub.f32 1.0, %v2532
    %v2534 = vmul.f32 %v2531, %v2533
    %v2535 = vadd.f32 %v2531, %v2534
    %vm2536 = vweird.f32 %v2530
    %vm2537 = vweird.f32 %v2531
    %vm2538 = vmor %vm2536, %vm2537
    %v2539 = vsel %vm2538, %v2531, %v2535
    %v2540 = vand.u32 2147483647, %v2530
    %vm2541 = vcmp.eq.f32.partialorder %v2540, 8.507059e+37
    %v2542 = vand.u32 %v2530, 2147483648
    %v2543 = vor.u32 1.1754944e-38, %v2542
    %v2544 = vsel %vm2541, %v2543, %v2539
    %v2545 = vmul.f32 1.0, %v2544
    %2547 = vrot.lane.b32.xlu0 %v2524, 64
    %v2548 = vpop.permute.xlu0 %2547
    %v2550 = vmul.f32 %v2545, %v2548
    %2552 = vrot.lane.b32.xlu0 %v2550, 64
    %v2553 = vpop.permute.xlu0 %2552
    %v2555 = vadd.f32 %v2501, %v2553
    %v2556 = vtanh.pop %v2555
    %v2557 = vsub.f32 1.0, %v2545
    %2559 = vrot.lane.b32.xlu0 %v2556, 96
    %v2560 = vpop.permute.xlu0 %2559
    %v2562 = vmul.f32 %v2557, %v2560
    %v2563 = vmul.f32 %v2545, %v2310
    %v2564 = vadd.f32 %v2562, %v2563
    %2566 = vrot.lane.b32.xlu0 %v2564, 96
    %v2567 = vpop.permute.xlu0 %2566
    %v2568 = vsel %vm184, %v2567, 0
    %2570 = vmatpush.msra.mxu0 0.0
    %2571 = vmatpush.msra.mxu0 0.0
    %2572 = vmatpush.msra.mxu0 0.0
    %2573 = vmatpush.msra.mxu0 0.0
    %2574 = vmatpush.msra.mxu0 0.0
    %2575 = vmatpush.msra.mxu0 0.0
    %2576 = vmatpush.msra.mxu0 0.0
    %2577 = vmatpush.msra.mxu0 0.0
    %2578 = vmatpush.msra.mxu0 0.0
    %2579 = vmatpush.msra.mxu0 0.0
    %2580 = vmatpush.msra.mxu0 0.0
    %2581 = vmatpush.msra.mxu0 0.0
    %2582 = vmatpush.msra.mxu0 %v1398
    %2583 = vmatpush.msra.mxu0 %v1395
    %2584 = vmatpush.msra.mxu0 %v1392
    %2585 = vmatpush.msra.mxu0 %v1389
    %2586 = vmatmul.f32.gmra.mxu0 %v2568
    %v2587 = vpop.f32.mrf.mxu0
    %v2588 = vadd.f32 0.0, %v2587
    %2589 = vdwg.mxu0
    %v2590 = vsel %vm1564, %v2588, -inf
    %2591 = vmax.xlane.f32.xlu0 %v2590
    %v2592 = vpop.xlane.xlu0 %2591
    %v2593 = vsub.f32 %v2588, %v2592
    %v2594 = vmul.f32 %v2593, 1.442695
    %v2595 = vpow.pop %v2594
    %v2596 = vsel %vm1564, %v2595, 0.0
    %2597 = vadd.xlane.f32.xlu0 %v2596
    %v2598 = vpop.xlane.xlu0 %2597
    %v2599 = vrcp.pop %v2598
    %v2600 = vmul.f32 %v2598, %v2599
    %v2601 = vsub.f32 1.0, %v2600
    %v2602 = vmul.f32 %v2599, %v2601
    %v2603 = vadd.f32 %v2599, %v2602
    %vm2604 = vweird.f32 %v2598
    %vm2605 = vweird.f32 %v2599
    %vm2606 = vmor %vm2604, %vm2605
    %v2607 = vsel %vm2606, %v2599, %v2603
    %v2608 = vand.u32 2147483647, %v2598
    %vm2609 = vcmp.eq.f32.partialorder %v2608, 8.507059e+37
    %v2610 = vand.u32 %v2598, 2147483648
    %v2611 = vor.u32 1.1754944e-38, %v2610
    %v2612 = vsel %vm2609, %v2611, %v2607
    %v2613 = vmul.f32 %v2595, %v2612
    %v2615 = vsel %vm1590, %v2613, 0
    %2617 = vmatpush.msra.mxu0 0.0
    %2618 = vmatpush.msra.mxu0 0.0
    %2619 = vmatpush.msra.mxu0 0.0
    %2620 = vmatpush.msra.mxu0 0.0
    %2621 = vmatpush.msra.mxu0 0.0
    %2622 = vmatpush.msra.mxu0 0.0
    %2623 = vmatpush.msra.mxu0 0.0
    %2624 = vmatpush.msra.mxu0 0.0
    %2625 = vmatpush.msra.mxu0 0.0
    %2626 = vmatpush.msra.mxu0 0.0
    %2627 = vmatpush.msra.mxu0 0.0
    %2628 = vmatpush.msra.mxu0 0.0
    %2629 = vmatpush.msra.mxu0 0.0
    %2630 = vmatpush.msra.mxu0 0.0
    %2631 = vmatpush.msra.mxu0 0.0
    %2632 = vmatpush.msra.mxu0 %v1356
    %2633 = vmatmul.f32.gmra.mxu0 %v2615
    %v2634 = vpop.f32.mrf.mxu0
    %v2635 = vadd.f32 0.0, %v2634
    %2636 = vdwg.mxu0
    %2639 = vrot.lane.b32.xlu0 %v2635, 32
    %v2640 = vpop.permute.xlu0 %2639
    %v2642 = vsel %vm184, %v2567, %v2640
    %v2644 = vsel %vm1625, %v2642, 0
    %2646 = vmatpush.msra.mxu0 0.0
    %2647 = vmatpush.msra.mxu0 0.0
    %2648 = vmatpush.msra.mxu0 0.0
    %2649 = vmatpush.msra.mxu0 0.0
    %2650 = vmatpush.msra.mxu0 0.0
    %2651 = vmatpush.msra.mxu0 0.0
    %2652 = vmatpush.msra.mxu0 0.0
    %2653 = vmatpush.msra.mxu0 0.0
    %2654 = vmatpush.msra.mxu0 %v117
    %2655 = vmatpush.msra.mxu0 %v116
    %2656 = vmatpush.msra.mxu0 %v115
    %2657 = vmatpush.msra.mxu0 %v114
    %2658 = vmatpush.msra.mxu0 %v113
    %2659 = vmatpush.msra.mxu0 %v112
    %2660 = vmatpush.msra.mxu0 %v111
    %2661 = vmatpush.msra.mxu0 %v110
    %2662 = vmatmul.f32.gmra.mxu0 %v2644
    %v2663 = vpop.f32.mrf.mxu0
    %v2664 = vadd.f32 %v118, %v2663
    %2665 = vdwg.mxu0
    %v2666 = vtanh.pop %v2664
    %v2668 = vsel %vm184, %v2666, 0
    %2670 = vmatpush.msra.mxu0 0.0
    %2671 = vmatpush.msra.mxu0 0.0
    %2672 = vmatpush.msra.mxu0 0.0
    %2673 = vmatpush.msra.mxu0 0.0
    %2674 = vmatpush.msra.mxu0 0.0
    %2675 = vmatpush.msra.mxu0 0.0
    %2676 = vmatpush.msra.mxu0 0.0
    %2677 = vmatpush.msra.mxu0 0.0
    %2678 = vmatpush.msra.mxu0 0.0
    %2679 = vmatpush.msra.mxu0 0.0
    %2680 = vmatpush.msra.mxu0 0.0
    %2681 = vmatpush.msra.mxu0 0.0
    %2682 = vmatpush.msra.mxu0 %v122
    %2683 = vmatpush.msra.mxu0 %v121
    %2684 = vmatpush.msra.mxu0 %v120
    %2685 = vmatpush.msra.mxu0 %v119
    %2686 = vmatmul.f32.gmra.mxu0 %v2668
    %v2687 = vpop.f32.mrf.mxu0
    %v2688 = vadd.f32 %v123, %v2687
    %2689 = vdwg.mxu0
    %v2690 = vsel %vm1672, %v2688, -inf
    %2691 = vmax.xlane.f32.xlu0 %v2690
    %v2692 = vpop.xlane.xlu0 %2691
    %v2693 = vsub.f32 %v2688, %v2692
    %v2694 = vmul.f32 %v2693, 1.442695
    %v2695 = vpow.pop %v2694
    %v2696 = vsel %vm1672, %v2695, 0.0
    %2697 = vadd.xlane.f32.xlu0 %v2696
    %v2698 = vpop.xlane.xlu0 %2697
    %v2699 = vrcp.pop %v2698
    %v2700 = vmul.f32 %v2698, %v2699
    %v2701 = vsub.f32 1.0, %v2700
    %v2702 = vmul.f32 %v2699, %v2701
    %v2703 = vadd.f32 %v2699, %v2702
    %vm2704 = vweird.f32 %v2698
    %vm2705 = vweird.f32 %v2699
    %vm2706 = vmor %vm2704, %vm2705
    %v2707 = vsel %vm2706, %v2699, %v2703
    %v2708 = vand.u32 2147483647, %v2698
    %vm2709 = vcmp.eq.f32.partialorder %v2708, 8.507059e+37
    %v2710 = vand.u32 %v2698, 2147483648
    %v2711 = vor.u32 1.1754944e-38, %v2710
    %v2712 = vsel %vm2709, %v2711, %v2707
    %v2713 = vmul.f32 1.0, %v2712
    %vm2714 = vcmp.ge.f32.partialorder %v2688, %v2692
    %v2715 = vsel %vm2714, %v1341, 64
    %v2716 = vsel %vm1672, %v2715, 2147483647
    %v2717 = vand.u32 %v2716, 65535
    %v2718 = vshra.s32 %v2716, 16
    %v2719 = vcvt.s32.f32 %v2717
    %v2720 = vcvt.s32.f32 %v2718
    %2721 = vmin.xlane.f32.xlu0 %v2720
    %v2722 = vpop.xlane.xlu0 %2721
    %vm2723 = vcmp.eq.f32.partialorder %v2720, %v2722
    %v2724 = vsel %vm2723, %v2719, inf
    %2725 = vmin.xlane.f32.xlu0 %v2724
    %v2726 = vpop.xlane.xlu0 %2725
    %v2727 = vcvt.f32.s32 %v2726
    %v2728 = vcvt.f32.s32 %v2722
    %v2729 = vshll.u32 %v2728, 16
    %v2730 = vadd.s32 %v2729, %v2727
    %vm2731 = vcmp.eq.s32.totalorder %v1341, %v2730
    %v2732 = vsel %vm2731, 1, 0
    %v2733 = vcvt.s32.f32 %v2732
    %v2735 = vsel %vm1625, %v2733, 0
    %2737 = vmatpush.msra.mxu0 0.0
    %2738 = vmatpush.msra.mxu0 0.0
    %2739 = vmatpush.msra.mxu0 0.0
    %2740 = vmatpush.msra.mxu0 0.0
    %2741 = vmatpush.msra.mxu0 0.0
    %2742 = vmatpush.msra.mxu0 0.0
    %2743 = vmatpush.msra.mxu0 0.0
    %2744 = vmatpush.msra.mxu0 0.0
    %2745 = vmatpush.msra.mxu0 %v1464
    %2746 = vmatpush.msra.mxu0 %v1461
    %2747 = vmatpush.msra.mxu0 %v1458
    %2748 = vmatpush.msra.mxu0 %v1455
    %2749 = vmatpush.msra.mxu0 %v1452
    %2750 = vmatpush.msra.mxu0 %v1449
    %2751 = vmatpush.msra.mxu0 %v1446
    %2752 = vmatpush.msra.mxu0 %v1443
    %2753 = vmatmul.f32.gmra.mxu0 %v2735
    %v2754 = vpop.f32.mrf.mxu0
    %v2755 = vadd.f32 0.0, %v2754
    %2756 = vdwg.mxu0
    %vm2757 = vcmp.eq.s32.totalorder %v1341, 4
    %v2758 = vsel %vm2757, %v2730, %v2504
    %v2759 = vsel %vm2757, %v2713, %v2505
    %2760 = vmatpush.msra.mxu0 0.0
    %2761 = vmatpush.msra.mxu0 0.0
    %2762 = vmatpush.msra.mxu0 0.0
    %2763 = vmatpush.msra.mxu0 0.0
    %2764 = vmatpush.msra.mxu0 0.0
    %2765 = vmatpush.msra.mxu0 0.0
    %2766 = vmatpush.msra.mxu0 0.0
    %2767 = vmatpush.msra.mxu0 0.0
    %2768 = vmatpush.msra.mxu0 0.0
    %2769 = vmatpush.msra.mxu0 0.0
    %2770 = vmatpush.msra.mxu0 0.0
    %2771 = vmatpush.msra.mxu0 0.0
    %2772 = vmatpush.msra.mxu0 %v108
    %2773 = vmatpush.msra.mxu0 %v107
    %2774 = vmatpush.msra.mxu0 %v106
    %2775 = vmatpush.msra.mxu0 %v105
    %2776 = vmatmul.f32.gmra.mxu0 %v2568
    %v2777 = vpop.f32.mrf.mxu0
    %v2778 = vadd.f32 %v1471, %v2777
    %2779 = vdwg.mxu0
    %v2780 = vadd.f32 %v2755, %v2778
    %v2781 = vxor.u32 %v2780, 2147483648
    %v2782 = vmul.f32 %v2781, 1.442695
    %v2783 = vpow.pop %v2782
    %v2784 = vadd.f32 %v2783, 1.0
    %v2785 = vrcp.pop %v2784
    %v2786 = vmul.f32 %v2784, %v2785
    %v2787 = vsub.f32 1.0, %v2786
    %v2788 = vmul.f32 %v2785, %v2787
    %v2789 = vadd.f32 %v2785, %v2788
    %vm2790 = vweird.f32 %v2784
    %vm2791 = vweird.f32 %v2785
    %vm2792 = vmor %vm2790, %vm2791
    %v2793 = vsel %vm2792, %v2785, %v2789
    %v2794 = vand.u32 2147483647, %v2784
    %vm2795 = vcmp.eq.f32.partialorder %v2794, 8.507059e+37
    %v2796 = vand.u32 %v2784, 2147483648
    %v2797 = vor.u32 1.1754944e-38, %v2796
    %v2798 = vsel %vm2795, %v2797, %v2793
    %v2799 = vmul.f32 1.0, %v2798
    %2801 = vrot.lane.b32.xlu0 %v2778, 64
    %v2802 = vpop.permute.xlu0 %2801
    %v2804 = vmul.f32 %v2799, %v2802
    %2806 = vrot.lane.b32.xlu0 %v2804, 64
    %v2807 = vpop.permute.xlu0 %2806
    %v2809 = vadd.f32 %v2755, %v2807
    %v2810 = vtanh.pop %v2809
    %v2811 = vsub.f32 1.0, %v2799
    %2813 = vrot.lane.b32.xlu0 %v2810, 96
    %v2814 = vpop.permute.xlu0 %2813
    %v2816 = vmul.f32 %v2811, %v2814
    %v2817 = vmul.f32 %v2799, %v2564
    %v2818 = vadd.f32 %v2816, %v2817
    %2820 = vrot.lane.b32.xlu0 %v2818, 96
    %v2821 = vpop.permute.xlu0 %2820
    %v2822 = vsel %vm184, %v2821, 0
    %2824 = vmatpush.msra.mxu0 0.0
    %2825 = vmatpush.msra.mxu0 0.0
    %2826 = vmatpush.msra.mxu0 0.0
    %2827 = vmatpush.msra.mxu0 0.0
    %2828 = vmatpush.msra.mxu0 0.0
    %2829 = vmatpush.msra.mxu0 0.0
    %2830 = vmatpush.msra.mxu0 0.0
    %2831 = vmatpush.msra.mxu0 0.0
    %2832 = vmatpush.msra.mxu0 0.0
    %2833 = vmatpush.msra.mxu0 0.0
    %2834 = vmatpush.msra.mxu0 0.0
    %2835 = vmatpush.msra.mxu0 0.0
    %2836 = vmatpush.msra.mxu0 %v1398
    %2837 = vmatpush.msra.mxu0 %v1395
    %2838 = vmatpush.msra.mxu0 %v1392
    %2839 = vmatpush.msra.mxu0 %v1389
    %2840 = vmatmul.f32.gmra.mxu0 %v2822
    %v2841 = vpop.f32.mrf.mxu0
    %v2842 = vadd.f32 0.0, %v2841
    %2843 = vdwg.mxu0
    %v2844 = vsel %vm1564, %v2842, -inf
    %2845 = vmax.xlane.f32.xlu0 %v2844
    %v2846 = vpop.xlane.xlu0 %2845
    %v2847 = vsub.f32 %v2842, %v2846
    %v2848 = vmul.f32 %v2847, 1.442695
    %v2849 = vpow.pop %v2848
    %v2850 = vsel %vm1564, %v2849, 0.0
    %2851 = vadd.xlane.f32.xlu0 %v2850
    %v2852 = vpop.xlane.xlu0 %2851
    %v2853 = vrcp.pop %v2852
    %v2854 = vmul.f32 %v2852, %v2853
    %v2855 = vsub.f32 1.0, %v2854
    %v2856 = vmul.f32 %v2853, %v2855
    %v2857 = vadd.f32 %v2853, %v2856
    %vm2858 = vweird.f32 %v2852
    %vm2859 = vweird.f32 %v2853
    %vm2860 = vmor %vm2858, %vm2859
    %v2861 = vsel %vm2860, %v2853, %v2857
    %v2862 = vand.u32 2147483647, %v2852
    %vm2863 = vcmp.eq.f32.partialorder %v2862, 8.507059e+37
    %v2864 = vand.u32 %v2852, 2147483648
    %v2865 = vor.u32 1.1754944e-38, %v2864
    %v2866 = vsel %vm2863, %v2865, %v2861
    %v2867 = vmul.f32 %v2849, %v2866
    %v2869 = vsel %vm1590, %v2867, 0
    %2871 = vmatpush.msra.mxu0 0.0
    %2872 = vmatpush.msra.mxu0 0.0
    %2873 = vmatpush.msra.mxu0 0.0
    %2874 = vmatpush.msra.mxu0 0.0
    %2875 = vmatpush.msra.mxu0 0.0
    %2876 = vmatpush.msra.mxu0 0.0
    %2877 = vmatpush.msra.mxu0 0.0
    %2878 = vmatpush.msra.mxu0 0.0
    %2879 = vmatpush.msra.mxu0 0.0
    %2880 = vmatpush.msra.mxu0 0.0
    %2881 = vmatpush.msra.mxu0 0.0
    %2882 = vmatpush.msra.mxu0 0.0
    %2883 = vmatpush.msra.mxu0 0.0
    %2884 = vmatpush.msra.mxu0 0.0
    %2885 = vmatpush.msra.mxu0 0.0
    %2886 = vmatpush.msra.mxu0 %v1356
    %2887 = vmatmul.f32.gmra.mxu0 %v2869
    %v2888 = vpop.f32.mrf.mxu0
    %v2889 = vadd.f32 0.0, %v2888
    %2890 = vdwg.mxu0
    %2893 = vrot.lane.b32.xlu0 %v2889, 32
    %v2894 = vpop.permute.xlu0 %2893
    %v2896 = vsel %vm184, %v2821, %v2894
    %v2898 = vsel %vm1625, %v2896, 0
    %2900 = vmatpush.msra.mxu0 0.0
    %2901 = vmatpush.msra.mxu0 0.0
    %2902 = vmatpush.msra.mxu0 0.0
    %2903 = vmatpush.msra.mxu0 0.0
    %2904 = vmatpush.msra.mxu0 0.0
    %2905 = vmatpush.msra.mxu0 0.0
    %2906 = vmatpush.msra.mxu0 0.0
    %2907 = vmatpush.msra.mxu0 0.0
    %2908 = vmatpush.msra.mxu0 %v117
    %2909 = vmatpush.msra.mxu0 %v116
    %2910 = vmatpush.msra.mxu0 %v115
    %2911 = vmatpush.msra.mxu0 %v114
    %2912 = vmatpush.msra.mxu0 %v113
    %2913 = vmatpush.msra.mxu0 %v112
    %2914 = vmatpush.msra.mxu0 %v111
    %2915 = vmatpush.msra.mxu0 %v110
    %2916 = vmatmul.f32.gmra.mxu0 %v2898
    %v2917 = vpop.f32.mrf.mxu0
    %v2918 = vadd.f32 %v118, %v2917
    %2919 = vdwg.mxu0
    %v2920 = vtanh.pop %v2918
    %v2922 = vsel %vm184, %v2920, 0
    %2924 = vmatpush.msra.mxu0 0.0
    %2925 = vmatpush.msra.mxu0 0.0
    %2926 = vmatpush.msra.mxu0 0.0
    %2927 = vmatpush.msra.mxu0 0.0
    %2928 = vmatpush.msra.mxu0 0.0
    %2929 = vmatpush.msra.mxu0 0.0
    %2930 = vmatpush.msra.mxu0 0.0
    %2931 = vmatpush.msra.mxu0 0.0
    %2932 = vmatpush.msra.mxu0 0.0
    %2933 = vmatpush.msra.mxu0 0.0
    %2934 = vmatpush.msra.mxu0 0.0
    %2935 = vmatpush.msra.mxu0 0.0
    %2936 = vmatpush.msra.mxu0 %v122
    %2937 = vmatpush.msra.mxu0 %v121
    %2938 = vmatpush.msra.mxu0 %v120
    %2939 = vmatpush.msra.mxu0 %v119
    %2940 = vmatmul.f32.gmra.mxu0 %v2922
    %v2941 = vpop.f32.mrf.mxu0
    %v2942 = vadd.f32 %v123, %v2941
    %2943 = vdwg.mxu0
    %v2944 = vsel %vm1672, %v2942, -inf
    %2945 = vmax.xlane.f32.xlu0 %v2944
    %v2946 = vpop.xlane.xlu0 %2945
    %v2947 = vsub.f32 %v2942, %v2946
    %v2948 = vmul.f32 %v2947, 1.442695
    %v2949 = vpow.pop %v2948
    %v2950 = vsel %vm1672, %v2949, 0.0
    %2951 = vadd.xlane.f32.xlu0 %v2950
    %v2952 = vpop.xlane.xlu0 %2951
    %v2953 = vrcp.pop %v2952
    %v2954 = vmul.f32 %v2952, %v2953
    %v2955 = vsub.f32 1.0, %v2954
    %v2956 = vmul.f32 %v2953, %v2955
    %v2957 = vadd.f32 %v2953, %v2956
    %vm2958 = vweird.f32 %v2952
    %vm2959 = vweird.f32 %v2953
    %vm2960 = vmor %vm2958, %vm2959
    %v2961 = vsel %vm2960, %v2953, %v2957
    %v2962 = vand.u32 2147483647, %v2952
    %vm2963 = vcmp.eq.f32.partialorder %v2962, 8.507059e+37
    %v2964 = vand.u32 %v2952, 2147483648
    %v2965 = vor.u32 1.1754944e-38, %v2964
    %v2966 = vsel %vm2963, %v2965, %v2961
    %v2967 = vmul.f32 1.0, %v2966
    %vm2968 = vcmp.ge.f32.partialorder %v2942, %v2946
    %v2969 = vsel %vm2968, %v1341, 64
    %v2970 = vsel %vm1672, %v2969, 2147483647
    %v2971 = vand.u32 %v2970, 65535
    %v2972 = vshra.s32 %v2970, 16
    %v2973 = vcvt.s32.f32 %v2971
    %v2974 = vcvt.s32.f32 %v2972
    %2975 = vmin.xlane.f32.xlu0 %v2974
    %v2976 = vpop.xlane.xlu0 %2975
    %vm2977 = vcmp.eq.f32.partialorder %v2974, %v2976
    %v2978 = vsel %vm2977, %v2973, inf
    %2979 = vmin.xlane.f32.xlu0 %v2978
    %v2980 = vpop.xlane.xlu0 %2979
    %v2981 = vcvt.f32.s32 %v2980
    %v2982 = vcvt.f32.s32 %v2976
    %v2983 = vshll.u32 %v2982, 16
    %v2984 = vadd.s32 %v2983, %v2981
    %vm2985 = vcmp.eq.s32.totalorder %v1341, %v2984
    %v2986 = vsel %vm2985, 1, 0
    %v2987 = vcvt.s32.f32 %v2986
    %v2989 = vsel %vm1625, %v2987, 0
    %2991 = vmatpush.msra.mxu0 0.0
    %2992 = vmatpush.msra.mxu0 0.0
    %2993 = vmatpush.msra.mxu0 0.0
    %2994 = vmatpush.msra.mxu0 0.0
    %2995 = vmatpush.msra.mxu0 0.0
    %2996 = vmatpush.msra.mxu0 0.0
    %2997 = vmatpush.msra.mxu0 0.0
    %2998 = vmatpush.msra.mxu0 0.0
    %2999 = vmatpush.msra.mxu0 %v1464
    %3000 = vmatpush.msra.mxu0 %v1461
    %3001 = vmatpush.msra.mxu0 %v1458
    %3002 = vmatpush.msra.mxu0 %v1455
    %3003 = vmatpush.msra.mxu0 %v1452
    %3004 = vmatpush.msra.mxu0 %v1449
    %3005 = vmatpush.msra.mxu0 %v1446
    %3006 = vmatpush.msra.mxu0 %v1443
    %3007 = vmatmul.f32.gmra.mxu0 %v2989
    %v3008 = vpop.f32.mrf.mxu0
    %v3009 = vadd.f32 0.0, %v3008
    %3010 = vdwg.mxu0
    %vm3011 = vcmp.eq.s32.totalorder %v1341, 5
    %v3012 = vsel %vm3011, %v2984, %v2758
    %v3013 = vsel %vm3011, %v2967, %v2759
    %3014 = vmatpush.msra.mxu0 0.0
    %3015 = vmatpush.msra.mxu0 0.0
    %3016 = vmatpush.msra.mxu0 0.0
    %3017 = vmatpush.msra.mxu0 0.0
    %3018 = vmatpush.msra.mxu0 0.0
    %3019 = vmatpush.msra.mxu0 0.0
    %3020 = vmatpush.msra.mxu0 0.0
    %3021 = vmatpush.msra.mxu0 0.0
    %3022 = vmatpush.msra.mxu0 0.0
    %3023 = vmatpush.msra.mxu0 0.0
    %3024 = vmatpush.msra.mxu0 0.0
    %3025 = vmatpush.msra.mxu0 0.0
    %3026 = vmatpush.msra.mxu0 %v108
    %3027 = vmatpush.msra.mxu0 %v107
    %3028 = vmatpush.msra.mxu0 %v106
    %3029 = vmatpush.msra.mxu0 %v105
    %3030 = vmatmul.f32.gmra.mxu0 %v2822
    %v3031 = vpop.f32.mrf.mxu0
    %v3032 = vadd.f32 %v1471, %v3031
    %3033 = vdwg.mxu0
    %v3034 = vadd.f32 %v3009, %v3032
    %v3035 = vxor.u32 %v3034, 2147483648
    %v3036 = vmul.f32 %v3035, 1.442695
    %v3037 = vpow.pop %v3036
    %v3038 = vadd.f32 %v3037, 1.0
    %v3039 = vrcp.pop %v3038
    %v3040 = vmul.f32 %v3038, %v3039
    %v3041 = vsub.f32 1.0, %v3040
    %v3042 = vmul.f32 %v3039, %v3041
    %v3043 = vadd.f32 %v3039, %v3042
    %vm3044 = vweird.f32 %v3038
    %vm3045 = vweird.f32 %v3039
    %vm3046 = vmor %vm3044, %vm3045
    %v3047 = vsel %vm3046, %v3039, %v3043
    %v3048 = vand.u32 2147483647, %v3038
    %vm3049 = vcmp.eq.f32.partialorder %v3048, 8.507059e+37
    %v3050 = vand.u32 %v3038, 2147483648
    %v3051 = vor.u32 1.1754944e-38, %v3050
    %v3052 = vsel %vm3049, %v3051, %v3047
    %v3053 = vmul.f32 1.0, %v3052
    %3055 = vrot.lane.b32.xlu0 %v3032, 64
    %v3056 = vpop.permute.xlu0 %3055
    %v3058 = vmul.f32 %v3053, %v3056
    %3060 = vrot.lane.b32.xlu0 %v3058, 64
    %v3061 = vpop.permute.xlu0 %3060
    %v3063 = vadd.f32 %v3009, %v3061
    %v3064 = vtanh.pop %v3063
    %v3065 = vsub.f32 1.0, %v3053
    %3067 = vrot.lane.b32.xlu0 %v3064, 96
    %v3068 = vpop.permute.xlu0 %3067
    %v3070 = vmul.f32 %v3065, %v3068
    %v3071 = vmul.f32 %v3053, %v2818
    %v3072 = vadd.f32 %v3070, %v3071
    %3074 = vrot.lane.b32.xlu0 %v3072, 96
    %v3075 = vpop.permute.xlu0 %3074
    %v3076 = vsel %vm184, %v3075, 0
    %3078 = vmatpush.msra.mxu0 0.0
    %3079 = vmatpush.msra.mxu0 0.0
    %3080 = vmatpush.msra.mxu0 0.0
    %3081 = vmatpush.msra.mxu0 0.0
    %3082 = vmatpush.msra.mxu0 0.0
    %3083 = vmatpush.msra.mxu0 0.0
    %3084 = vmatpush.msra.mxu0 0.0
    %3085 = vmatpush.msra.mxu0 0.0
    %3086 = vmatpush.msra.mxu0 0.0
    %3087 = vmatpush.msra.mxu0 0.0
    %3088 = vmatpush.msra.mxu0 0.0
    %3089 = vmatpush.msra.mxu0 0.0
    %3090 = vmatpush.msra.mxu0 %v1398
    %3091 = vmatpush.msra.mxu0 %v1395
    %3092 = vmatpush.msra.mxu0 %v1392
    %3093 = vmatpush.msra.mxu0 %v1389
    %3094 = vmatmul.f32.gmra.mxu0 %v3076
    %v3095 = vpop.f32.mrf.mxu0
    %v3096 = vadd.f32 0.0, %v3095
    %3097 = vdwg.mxu0
    %v3098 = vsel %vm1564, %v3096, -inf
    %3099 = vmax.xlane.f32.xlu0 %v3098
    %v3100 = vpop.xlane.xlu0 %3099
    %v3101 = vsub.f32 %v3096, %v3100
    %v3102 = vmul.f32 %v3101, 1.442695
    %v3103 = vpow.pop %v3102
    %v3104 = vsel %vm1564, %v3103, 0.0
    %3105 = vadd.xlane.f32.xlu0 %v3104
    %v3106 = vpop.xlane.xlu0 %3105
    %v3107 = vrcp.pop %v3106
    %v3108 = vmul.f32 %v3106, %v3107
    %v3109 = vsub.f32 1.0, %v3108
    %v3110 = vmul.f32 %v3107, %v3109
    %v3111 = vadd.f32 %v3107, %v3110
    %vm3112 = vweird.f32 %v3106
    %vm3113 = vweird.f32 %v3107
    %vm3114 = vmor %vm3112, %vm3113
    %v3115 = vsel %vm3114, %v3107, %v3111
    %v3116 = vand.u32 2147483647, %v3106
    %vm3117 = vcmp.eq.f32.partialorder %v3116, 8.507059e+37
    %v3118 = vand.u32 %v3106, 2147483648
    %v3119 = vor.u32 1.1754944e-38, %v3118
    %v3120 = vsel %vm3117, %v3119, %v3115
    %v3121 = vmul.f32 %v3103, %v3120
    %v3123 = vsel %vm1590, %v3121, 0
    %3125 = vmatpush.msra.mxu0 0.0
    %3126 = vmatpush.msra.mxu0 0.0
    %3127 = vmatpush.msra.mxu0 0.0
    %3128 = vmatpush.msra.mxu0 0.0
    %3129 = vmatpush.msra.mxu0 0.0
    %3130 = vmatpush.msra.mxu0 0.0
    %3131 = vmatpush.msra.mxu0 0.0
    %3132 = vmatpush.msra.mxu0 0.0
    %3133 = vmatpush.msra.mxu0 0.0
    %3134 = vmatpush.msra.mxu0 0.0
    %3135 = vmatpush.msra.mxu0 0.0
    %3136 = vmatpush.msra.mxu0 0.0
    %3137 = vmatpush.msra.mxu0 0.0
    %3138 = vmatpush.msra.mxu0 0.0
    %3139 = vmatpush.msra.mxu0 0.0
    %3140 = vmatpush.msra.mxu0 %v1356
    %3141 = vmatmul.f32.gmra.mxu0 %v3123
    %v3142 = vpop.f32.mrf.mxu0
    %v3143 = vadd.f32 0.0, %v3142
    %3144 = vdwg.mxu0
    %3147 = vrot.lane.b32.xlu0 %v3143, 32
    %v3148 = vpop.permute.xlu0 %3147
    %v3150 = vsel %vm184, %v3075, %v3148
    %v3152 = vsel %vm1625, %v3150, 0
    %3154 = vmatpush.msra.mxu0 0.0
    %3155 = vmatpush.msra.mxu0 0.0
    %3156 = vmatpush.msra.mxu0 0.0
    %3157 = vmatpush.msra.mxu0 0.0
    %3158 = vmatpush.msra.mxu0 0.0
    %3159 = vmatpush.msra.mxu0 0.0
    %3160 = vmatpush.msra.mxu0 0.0
    %3161 = vmatpush.msra.mxu0 0.0
    %3162 = vmatpush.msra.mxu0 %v117
    %3163 = vmatpush.msra.mxu0 %v116
    %3164 = vmatpush.msra.mxu0 %v115
    %3165 = vmatpush.msra.mxu0 %v114
    %3166 = vmatpush.msra.mxu0 %v113
    %3167 = vmatpush.msra.mxu0 %v112
    %3168 = vmatpush.msra.mxu0 %v111
    %3169 = vmatpush.msra.mxu0 %v110
    %3170 = vmatmul.f32.gmra.mxu0 %v3152
    %v3171 = vpop.f32.mrf.mxu0
    %v3172 = vadd.f32 %v118, %v3171
    %3173 = vdwg.mxu0
    %v3174 = vtanh.pop %v3172
    %v3176 = vsel %vm184, %v3174, 0
    %3178 = vmatpush.msra.mxu0 0.0
    %3179 = vmatpush.msra.mxu0 0.0
    %3180 = vmatpush.msra.mxu0 0.0
    %3181 = vmatpush.msra.mxu0 0.0
    %3182 = vmatpush.msra.mxu0 0.0
    %3183 = vmatpush.msra.mxu0 0.0
    %3184 = vmatpush.msra.mxu0 0.0
    %3185 = vmatpush.msra.mxu0 0.0
    %3186 = vmatpush.msra.mxu0 0.0
    %3187 = vmatpush.msra.mxu0 0.0
    %3188 = vmatpush.msra.mxu0 0.0
    %3189 = vmatpush.msra.mxu0 0.0
    %3190 = vmatpush.msra.mxu0 %v122
    %3191 = vmatpush.msra.mxu0 %v121
    %3192 = vmatpush.msra.mxu0 %v120
    %3193 = vmatpush.msra.mxu0 %v119
    %3194 = vmatmul.f32.gmra.mxu0 %v3176
    %v3195 = vpop.f32.mrf.mxu0
    %v3196 = vadd.f32 %v123, %v3195
    %3197 = vdwg.mxu0
    %v3198 = vsel %vm1672, %v3196, -inf
    %3199 = vmax.xlane.f32.xlu0 %v3198
    %v3200 = vpop.xlane.xlu0 %3199
    %v3201 = vsub.f32 %v3196, %v3200
    %v3202 = vmul.f32 %v3201, 1.442695
    %v3203 = vpow.pop %v3202
    %v3204 = vsel %vm1672, %v3203, 0.0
    %3205 = vadd.xlane.f32.xlu0 %v3204
    %v3206 = vpop.xlane.xlu0 %3205
    %v3207 = vrcp.pop %v3206
    %v3208 = vmul.f32 %v3206, %v3207
    %v3209 = vsub.f32 1.0, %v3208
    %v3210 = vmul.f32 %v3207, %v3209
    %v3211 = vadd.f32 %v3207, %v3210
    %vm3212 = vweird.f32 %v3206
    %vm3213 = vweird.f32 %v3207
    %vm3214 = vmor %vm3212, %vm3213
    %v3215 = vsel %vm3214, %v3207, %v3211
    %v3216 = vand.u32 2147483647, %v3206
    %vm3217 = vcmp.eq.f32.partialorder %v3216, 8.507059e+37
    %v3218 = vand.u32 %v3206, 2147483648
    %v3219 = vor.u32 1.1754944e-38, %v3218
    %v3220 = vsel %vm3217, %v3219, %v3215
    %v3221 = vmul.f32 1.0, %v3220
    %vm3222 = vcmp.ge.f32.partialorder %v3196, %v3200
    %v3223 = vsel %vm3222, %v1341, 64
    %v3224 = vsel %vm1672, %v3223, 2147483647
    %v3225 = vand.u32 %v3224, 65535
    %v3226 = vshra.s32 %v3224, 16
    %v3227 = vcvt.s32.f32 %v3225
    %v3228 = vcvt.s32.f32 %v3226
    %3229 = vmin.xlane.f32.xlu0 %v3228
    %v3230 = vpop.xlane.xlu0 %3229
    %vm3231 = vcmp.eq.f32.partialorder %v3228, %v3230
    %v3232 = vsel %vm3231, %v3227, inf
    %3233 = vmin.xlane.f32.xlu0 %v3232
    %v3234 = vpop.xlane.xlu0 %3233
    %v3235 = vcvt.f32.s32 %v3234
    %v3236 = vcvt.f32.s32 %v3230
    %v3237 = vshll.u32 %v3236, 16
    %v3238 = vadd.s32 %v3237, %v3235
    %vm3239 = vcmp.eq.s32.totalorder %v1341, %v3238
    %v3240 = vsel %vm3239, 1, 0
    %v3241 = vcvt.s32.f32 %v3240
    %v3243 = vsel %vm1625, %v3241, 0
    %3245 = vmatpush.msra.mxu0 0.0
    %3246 = vmatpush.msra.mxu0 0.0
    %3247 = vmatpush.msra.mxu0 0.0
    %3248 = vmatpush.msra.mxu0 0.0
    %3249 = vmatpush.msra.mxu0 0.0
    %3250 = vmatpush.msra.mxu0 0.0
    %3251 = vmatpush.msra.mxu0 0.0
    %3252 = vmatpush.msra.mxu0 0.0
    %3253 = vmatpush.msra.mxu0 %v1464
    %3254 = vmatpush.msra.mxu0 %v1461
    %3255 = vmatpush.msra.mxu0 %v1458
    %3256 = vmatpush.msra.mxu0 %v1455
    %3257 = vmatpush.msra.mxu0 %v1452
    %3258 = vmatpush.msra.mxu0 %v1449
    %3259 = vmatpush.msra.mxu0 %v1446
    %3260 = vmatpush.msra.mxu0 %v1443
    %3261 = vmatmul.f32.gmra.mxu0 %v3243
    %v3262 = vpop.f32.mrf.mxu0
    %v3263 = vadd.f32 0.0, %v3262
    %3264 = vdwg.mxu0
    %vm3265 = vcmp.eq.s32.totalorder %v1341, 6
    %v3266 = vsel %vm3265, %v3238, %v3012
    %v3267 = vsel %vm3265, %v3221, %v3013
    %3268 = vmatpush.msra.mxu0 0.0
    %3269 = vmatpush.msra.mxu0 0.0
    %3270 = vmatpush.msra.mxu0 0.0
    %3271 = vmatpush.msra.mxu0 0.0
    %3272 = vmatpush.msra.mxu0 0.0
    %3273 = vmatpush.msra.mxu0 0.0
    %3274 = vmatpush.msra.mxu0 0.0
    %3275 = vmatpush.msra.mxu0 0.0
    %3276 = vmatpush.msra.mxu0 0.0
    %3277 = vmatpush.msra.mxu0 0.0
    %3278 = vmatpush.msra.mxu0 0.0
    %3279 = vmatpush.msra.mxu0 0.0
    %3280 = vmatpush.msra.mxu0 %v108
    %3281 = vmatpush.msra.mxu0 %v107
    %3282 = vmatpush.msra.mxu0 %v106
    %3283 = vmatpush.msra.mxu0 %v105
    %3284 = vmatmul.f32.gmra.mxu0 %v3076
    %v3285 = vpop.f32.mrf.mxu0
    %v3286 = vadd.f32 %v1471, %v3285
    %3287 = vdwg.mxu0
    %v3288 = vadd.f32 %v3263, %v3286
    %v3289 = vxor.u32 %v3288, 2147483648
    %v3290 = vmul.f32 %v3289, 1.442695
    %v3291 = vpow.pop %v3290
    %v3292 = vadd.f32 %v3291, 1.0
    %v3293 = vrcp.pop %v3292
    %v3294 = vmul.f32 %v3292, %v3293
    %v3295 = vsub.f32 1.0, %v3294
    %v3296 = vmul.f32 %v3293, %v3295
    %v3297 = vadd.f32 %v3293, %v3296
    %vm3298 = vweird.f32 %v3292
    %vm3299 = vweird.f32 %v3293
    %vm3300 = vmor %vm3298, %vm3299
    %v3301 = vsel %vm3300, %v3293, %v3297
    %v3302 = vand.u32 2147483647, %v3292
    %vm3303 = vcmp.eq.f32.partialorder %v3302, 8.507059e+37
    %v3304 = vand.u32 %v3292, 2147483648
    %v3305 = vor.u32 1.1754944e-38, %v3304
    %v3306 = vsel %vm3303, %v3305, %v3301
    %v3307 = vmul.f32 1.0, %v3306
    %3309 = vrot.lane.b32.xlu0 %v3286, 64
    %v3310 = vpop.permute.xlu0 %3309
    %v3312 = vmul.f32 %v3307, %v3310
    %3314 = vrot.lane.b32.xlu0 %v3312, 64
    %v3315 = vpop.permute.xlu0 %3314
    %v3317 = vadd.f32 %v3263, %v3315
    %v3318 = vtanh.pop %v3317
    %v3319 = vsub.f32 1.0, %v3307
    %3321 = vrot.lane.b32.xlu0 %v3318, 96
    %v3322 = vpop.permute.xlu0 %3321
    %v3324 = vmul.f32 %v3319, %v3322
    %v3325 = vmul.f32 %v3307, %v3072
    %v3326 = vadd.f32 %v3324, %v3325
    %3328 = vrot.lane.b32.xlu0 %v3326, 96
    %v3329 = vpop.permute.xlu0 %3328
    %v3330 = vsel %vm184, %v3329, 0
    %3332 = vmatpush.msra.mxu0 0.0
    %3333 = vmatpush.msra.mxu0 0.0
    %3334 = vmatpush.msra.mxu0 0.0
    %3335 = vmatpush.msra.mxu0 0.0
    %3336 = vmatpush.msra.mxu0 0.0
    %3337 = vmatpush.msra.mxu0 0.0
    %3338 = vmatpush.msra.mxu0 0.0
    %3339 = vmatpush.msra.mxu0 0.0
    %3340 = vmatpush.msra.mxu0 0.0
    %3341 = vmatpush.msra.mxu0 0.0
    %3342 = vmatpush.msra.mxu0 0.0
    %3343 = vmatpush.msra.mxu0 0.0
    %3344 = vmatpush.msra.mxu0 %v1398
    %3345 = vmatpush.msra.mxu0 %v1395
    %3346 = vmatpush.msra.mxu0 %v1392
    %3347 = vmatpush.msra.mxu0 %v1389
    %3348 = vmatmul.f32.gmra.mxu0 %v3330
    %v3349 = vpop.f32.mrf.mxu0
    %v3350 = vadd.f32 0.0, %v3349
    %3351 = vdwg.mxu0
    %v3352 = vsel %vm1564, %v3350, -inf
    %3353 = vmax.xlane.f32.xlu0 %v3352
    %v3354 = vpop.xlane.xlu0 %3353
    %v3355 = vsub.f32 %v3350, %v3354
    %v3356 = vmul.f32 %v3355, 1.442695
    %v3357 = vpow.pop %v3356
    %v3358 = vsel %vm1564, %v3357, 0.0
    %3359 = vadd.xlane.f32.xlu0 %v3358
    %v3360 = vpop.xlane.xlu0 %3359
    %v3361 = vrcp.pop %v3360
    %v3362 = vmul.f32 %v3360, %v3361
    %v3363 = vsub.f32 1.0, %v3362
    %v3364 = vmul.f32 %v3361, %v3363
    %v3365 = vadd.f32 %v3361, %v3364
    %vm3366 = vweird.f32 %v3360
    %vm3367 = vweird.f32 %v3361
    %vm3368 = vmor %vm3366, %vm3367
    %v3369 = vsel %vm3368, %v3361, %v3365
    %v3370 = vand.u32 2147483647, %v3360
    %vm3371 = vcmp.eq.f32.partialorder %v3370, 8.507059e+37
    %v3372 = vand.u32 %v3360, 2147483648
    %v3373 = vor.u32 1.1754944e-38, %v3372
    %v3374 = vsel %vm3371, %v3373, %v3369
    %v3375 = vmul.f32 %v3357, %v3374
    %v3377 = vsel %vm1590, %v3375, 0
    %3379 = vmatpush.msra.mxu0 0.0
    %3380 = vmatpush.msra.mxu0 0.0
    %3381 = vmatpush.msra.mxu0 0.0
    %3382 = vmatpush.msra.mxu0 0.0
    %3383 = vmatpush.msra.mxu0 0.0
    %3384 = vmatpush.msra.mxu0 0.0
    %3385 = vmatpush.msra.mxu0 0.0
    %3386 = vmatpush.msra.mxu0 0.0
    %3387 = vmatpush.msra.mxu0 0.0
    %3388 = vmatpush.msra.mxu0 0.0
    %3389 = vmatpush.msra.mxu0 0.0
    %3390 = vmatpush.msra.mxu0 0.0
    %3391 = vmatpush.msra.mxu0 0.0
    %3392 = vmatpush.msra.mxu0 0.0
    %3393 = vmatpush.msra.mxu0 0.0
    %3394 = vmatpush.msra.mxu0 %v1356
    %3395 = vmatmul.f32.gmra.mxu0 %v3377
    %v3396 = vpop.f32.mrf.mxu0
    %v3397 = vadd.f32 0.0, %v3396
    %3398 = vdwg.mxu0
    %3401 = vrot.lane.b32.xlu0 %v3397, 32
    %v3402 = vpop.permute.xlu0 %3401
    %v3404 = vsel %vm184, %v3329, %v3402
    %v3406 = vsel %vm1625, %v3404, 0
    %3408 = vmatpush.msra.mxu0 0.0
    %3409 = vmatpush.msra.mxu0 0.0
    %3410 = vmatpush.msra.mxu0 0.0
    %3411 = vmatpush.msra.mxu0 0.0
    %3412 = vmatpush.msra.mxu0 0.0
    %3413 = vmatpush.msra.mxu0 0.0
    %3414 = vmatpush.msra.mxu0 0.0
    %3415 = vmatpush.msra.mxu0 0.0
    %3416 = vmatpush.msra.mxu0 %v117
    %3417 = vmatpush.msra.mxu0 %v116
    %3418 = vmatpush.msra.mxu0 %v115
    %3419 = vmatpush.msra.mxu0 %v114
    %3420 = vmatpush.msra.mxu0 %v113
    %3421 = vmatpush.msra.mxu0 %v112
    %3422 = vmatpush.msra.mxu0 %v111
    %3423 = vmatpush.msra.mxu0 %v110
    %3424 = vmatmul.f32.gmra.mxu0 %v3406
    %v3425 = vpop.f32.mrf.mxu0
    %v3426 = vadd.f32 %v118, %v3425
    %3427 = vdwg.mxu0
    %v3428 = vtanh.pop %v3426
    %v3430 = vsel %vm184, %v3428, 0
    %3432 = vmatpush.msra.mxu0 0.0
    %3433 = vmatpush.msra.mxu0 0.0
    %3434 = vmatpush.msra.mxu0 0.0
    %3435 = vmatpush.msra.mxu0 0.0
    %3436 = vmatpush.msra.mxu0 0.0
    %3437 = vmatpush.msra.mxu0 0.0
    %3438 = vmatpush.msra.mxu0 0.0
    %3439 = vmatpush.msra.mxu0 0.0
    %3440 = vmatpush.msra.mxu0 0.0
    %3441 = vmatpush.msra.mxu0 0.0
    %3442 = vmatpush.msra.mxu0 0.0
    %3443 = vmatpush.msra.mxu0 0.0
    %3444 = vmatpush.msra.mxu0 %v122
    %3445 = vmatpush.msra.mxu0 %v121
    %3446 = vmatpush.msra.mxu0 %v120
    %3447 = vmatpush.msra.mxu0 %v119
    %3448 = vmatmul.f32.gmra.mxu0 %v3430
    %v3449 = vpop.f32.mrf.mxu0
    %v3450 = vadd.f32 %v123, %v3449
    %3451 = vdwg.mxu0
    %v3452 = vsel %vm1672, %v3450, -inf
    %3453 = vmax.xlane.f32.xlu0 %v3452
    %v3454 = vpop.xlane.xlu0 %3453
    %v3455 = vsub.f32 %v3450, %v3454
    %v3456 = vmul.f32 %v3455, 1.442695
    %v3457 = vpow.pop %v3456
    %v3458 = vsel %vm1672, %v3457, 0.0
    %3459 = vadd.xlane.f32.xlu0 %v3458
    %v3460 = vpop.xlane.xlu0 %3459
    %v3461 = vrcp.pop %v3460
    %v3462 = vmul.f32 %v3460, %v3461
    %v3463 = vsub.f32 1.0, %v3462
    %v3464 = vmul.f32 %v3461, %v3463
    %v3465 = vadd.f32 %v3461, %v3464
    %vm3466 = vweird.f32 %v3460
    %vm3467 = vweird.f32 %v3461
    %vm3468 = vmor %vm3466, %vm3467
    %v3469 = vsel %vm3468, %v3461, %v3465
    %v3470 = vand.u32 2147483647, %v3460
    %vm3471 = vcmp.eq.f32.partialorder %v3470, 8.507059e+37
    %v3472 = vand.u32 %v3460, 2147483648
    %v3473 = vor.u32 1.1754944e-38, %v3472
    %v3474 = vsel %vm3471, %v3473, %v3469
    %v3475 = vmul.f32 1.0, %v3474
    %vm3476 = vcmp.ge.f32.partialorder %v3450, %v3454
    %v3477 = vsel %vm3476, %v1341, 64
    %v3478 = vsel %vm1672, %v3477, 2147483647
    %v3479 = vand.u32 %v3478, 65535
    %v3480 = vshra.s32 %v3478, 16
    %v3481 = vcvt.s32.f32 %v3479
    %v3482 = vcvt.s32.f32 %v3480
    %3483 = vmin.xlane.f32.xlu0 %v3482
    %v3484 = vpop.xlane.xlu0 %3483
    %vm3485 = vcmp.eq.f32.partialorder %v3482, %v3484
    %v3486 = vsel %vm3485, %v3481, inf
    %3487 = vmin.xlane.f32.xlu0 %v3486
    %v3488 = vpop.xlane.xlu0 %3487
    %v3489 = vcvt.f32.s32 %v3488
    %v3490 = vcvt.f32.s32 %v3484
    %v3491 = vshll.u32 %v3490, 16
    %v3492 = vadd.s32 %v3491, %v3489
    %vm3493 = vcmp.eq.s32.totalorder %v1341, 7
    %v3494 = vsel %vm3493, %v3492, %v3266
    %v3495 = vsel %vm3493, %v3475, %v3267
    %3496 = vst.msk [vmem:[#allocation9] sm:$0x1] %vm1564, %v3494
    %3497 = vst.msk [vmem:[#allocation10] sm:$0x1] %vm1564, %v3495
    // Predicated region
    $region42: #{greedy_search_decoder.1} parent=1 // pred_check
      _
    $region43: #{greedy_search_decoder.1} parent=1 // pred_check_branch
      %3499 = sbr.rel (0) target = $region45
    $region44: #{greedy_search_decoder.1} parent=1 // pred_region
      %3501 = vsyncadd [#allocation4], 0
      %s3503 = sshll.u32 [#allocation9], 4
      %s3504 = int_to_ptr.vmem [resolvable:$true] %s3503
      %s3505 = sshll.u32 %s7, 4
      %s3506 = int_to_ptr.hbm [resolvable:$true] %s3505
      %3508 = dma.vmem_to_hbm [thread:$0]  %s3504, 16, %s3506, [#allocation4]
    $region45: #{greedy_search_decoder.1} parent=1 // pred_fallthru
      _
    // Predicated region
    $region46: #{greedy_search_decoder.1} parent=1 // pred_check
      _
    $region47: #{greedy_search_decoder.1} parent=1 // pred_check_branch
      %3510 = sbr.rel (0) target = $region49
    $region48: #{greedy_search_decoder.1} parent=1 // pred_region
      %3512 = vsyncadd [#allocation11], 0
      %s3514 = sshll.u32 [#allocation10], 4
      %s3515 = int_to_ptr.vmem [resolvable:$true] %s3514
      %s3516 = sshll.u32 %s8, 4
      %s3517 = int_to_ptr.hbm [resolvable:$true] %s3516
      %3519 = dma.vmem_to_hbm [thread:$0]  %s3515, 16, %s3517, [#allocation11]
    $region49: #{greedy_search_decoder.1} parent=1 // pred_fallthru
      _
    // Predicated region
    $region50: #{greedy_search_decoder.1} parent=1 // pred_check
      _
    $region51: #{greedy_search_decoder.1} parent=1 // pred_check_branch
      %3521 = sbr.rel (0) target = $region53
    $region52: #{greedy_search_decoder.1} parent=1 // pred_region
      %3523 = dma.done [#allocation4], 16
    $region53: #{greedy_search_decoder.1} parent=1 // pred_fallthru
      _
    // Predicated region
    $region54: #{greedy_search_decoder.1} parent=1 // pred_check
      _
    $region55: #{greedy_search_decoder.1} parent=1 // pred_check_branch
      %3525 = sbr.rel (0) target = $region57
    $region56: #{greedy_search_decoder.1} parent=1 // pred_region
      %3527 = dma.done [#allocation11], 16
    $region57: #{greedy_search_decoder.1} parent=1 // pred_fallthru
      _
    %3528 = vsyncpa [#allocation3], 1
    %3529 = vsyncpa [#allocation8], 1
    %3530 = vsyncpa [#allocation4], 1
    %3531 = vsyncpa [#allocation11], 1
    %3532 = vsyncpa [#allocation5], 1

</llo_original>
